<compile_context>
chip_gen: v6e
topology: v6e:2x2x1
jax: 0.10.0
libtpu: 0.0.40
codegen_flags: <defaults>
</compile_context>

<pallas_src>
import jax
import jax.numpy as jnp
from jax.experimental import pallas as pl
from jax.experimental.pallas import tpu as pltpu


_MOSAIC_PARAMS = pltpu.CompilerParams(
    dimension_semantics=("parallel",),        # M-tiles shard across v7x TensorCores
    vmem_limit_bytes=32 * 1024 * 1024,
)

_ROW_ALIGN = 16   # sublane-friendly for both f32 (8) and bf16 (16) tiles


def _round_up(x, m):
    return (x + m - 1) // m * m


def _pad_rows(a, align=_ROW_ALIGN):
    m = a.shape[0]
    mp = _round_up(max(m, align), align)
    if mp != m:
        a = jnp.pad(a, ((0, mp - m), (0, 0)))
    return a


def _choose_tile_m(mp, cap):
    """Largest row tile <= cap that divides mp (mp % 16 == 0); prefer >=2 steps."""
    tm = min(mp, cap)
    while mp % tm:
        tm -= 16
    if tm == mp and mp >= 512:
        tm = mp // 2                 # keep >=2 grid steps -> both v7x TCs busy
    return tm


# ---------------------------------------------------------------------------
# Pallas kernels
# ---------------------------------------------------------------------------
def _mm_stats_kernel(a_ref, b_ref, y_ref, sum_ref, sq_ref):
    """bf16 x bf16 -> f32 MXU matmul; epilogue emits per-tile sum / sum-of-squares."""
    y = jnp.dot(a_ref[...], b_ref[...], preferred_element_type=jnp.float32)
    y_ref[...] = y.astype(y_ref.dtype)
    sum_ref[...] = jnp.broadcast_to(jnp.sum(y, axis=0, keepdims=True), sum_ref.shape)
    sq_ref[...] = jnp.broadcast_to(jnp.sum(y * y, axis=0, keepdims=True), sq_ref.shape)


def _mm_tanh_kernel(a_ref, b_ref, y_ref):
    """Final layer: matmul with Tanh fused into the epilogue."""
    y_ref[...] = jnp.tanh(
        jnp.dot(a_ref[...], b_ref[...], preferred_element_type=jnp.float32))


def _bn_relu_kernel(x_ref, s_ref, b_ref, o_ref):
    """y = relu(x * scale + shift); f32 math, bf16 store."""
    o_ref[...] = jnp.maximum(
        x_ref[...].astype(jnp.float32) * s_ref[...] + b_ref[...], 0.0
    ).astype(o_ref.dtype)


# ---------------------------------------------------------------------------
# Pallas wrappers
# ---------------------------------------------------------------------------
def pallas_matmul_bn_stats(a, b):
    """a:(Mp,K) bf16, b:(K,C) bf16 -> (y bf16 (Mp,C), sum f32 (G,C), sumsq f32 (G,C))."""
    mp, k = a.shape
    _, c = b.shape
    tm = _choose_tile_m(mp, 512)
    g = mp // tm
    y, s, sq = pl.pallas_call(
        _mm_stats_kernel,
        out_shape=(jax.ShapeDtypeStruct((mp, c), jnp.bfloat16),
                   jax.ShapeDtypeStruct((g * 8, c), jnp.float32),
                   jax.ShapeDtypeStruct((g * 8, c), jnp.float32)),
        grid=(g,),
        in_specs=[pl.BlockSpec((tm, k), lambda i: (i, 0)),
                  pl.BlockSpec((k, c), lambda i: (0, 0))],     # resident B operand
        out_specs=(pl.BlockSpec((tm, c), lambda i: (i, 0)),
                   pl.BlockSpec((8, c), lambda i: (i, 0)),
                   pl.BlockSpec((8, c), lambda i: (i, 0))),
        compiler_params=_MOSAIC_PARAMS,
    )(a, b)
    return y, s[0::8], sq[0::8]


def pallas_matmul_tanh(a, b):
    mp, k = a.shape
    _, c = b.shape
    tm = _choose_tile_m(mp, 512)
    return pl.pallas_call(
        _mm_tanh_kernel,
        out_shape=jax.ShapeDtypeStruct((mp, c), jnp.float32),
        grid=(mp // tm,),
        in_specs=[pl.BlockSpec((tm, k), lambda i: (i, 0)),
                  pl.BlockSpec((k, c), lambda i: (0, 0))],
        out_specs=pl.BlockSpec((tm, c), lambda i: (i, 0)),
        compiler_params=_MOSAIC_PARAMS,
    )(a, b)


def pallas_bn_relu_apply(x, scale_cols, shift_cols):
    """x:(Mp,C); out = relu(x*scale + shift) as bf16 (per-column scale/shift)."""
    mp, c = x.shape
    tm = _choose_tile_m(mp, 1024)
    return pl.pallas_call(
        _bn_relu_kernel,
        out_shape=jax.ShapeDtypeStruct((mp, c), jnp.bfloat16),
        grid=(mp // tm,),
        in_specs=[pl.BlockSpec((tm, c), lambda i: (i, 0)),
                  pl.BlockSpec((1, c), lambda i: (0, 0)),
                  pl.BlockSpec((1, c), lambda i: (0, 0))],
        out_specs=pl.BlockSpec((tm, c), lambda i: (i, 0)),
        compiler_params=_MOSAIC_PARAMS,
    )(x, scale_cols.reshape(1, c), shift_cols.reshape(1, c))


# ---------------------------------------------------------------------------
# BatchNorm glue (tiny per-channel math on the fused GEMM statistics)
# ---------------------------------------------------------------------------
def _bn_scale_shift(s_part, sq_part, count, gamma, beta, groups, eps=1e-5):
    c = gamma.shape[0]
    tot = jnp.sum(s_part, axis=0).reshape(groups, c).sum(axis=0)
    tot_sq = jnp.sum(sq_part, axis=0).reshape(groups, c).sum(axis=0)
    mean = tot / count
    var = jnp.maximum(tot_sq / count - mean * mean, 0.0)     # biased var (PyTorch)
    scale = gamma * jax.lax.rsqrt(var + eps)
    shift = beta - mean * scale
    # GEMM columns are (group, channel); expand per-channel vectors accordingly.
    return jnp.tile(scale, groups), jnp.tile(shift, groups)


# ---------------------------------------------------------------------------
# ConvTranspose2d building blocks
# ---------------------------------------------------------------------------
def _subpixel_patches(x_nhwc):
    """3x3 windows of the (1-padded) input, K order (u, v, cin); rows = (n, h, w)."""
    n, h, w, cin = x_nhwc.shape
    xp = jnp.pad(x_nhwc, ((0, 0), (1, 1), (1, 1), (0, 0)))
    cols = [xp[:, u:u + h, v:v + w, :] for u in range(3) for v in range(3)]
    patches = jnp.concatenate(cols, axis=-1).reshape(n * h * w, 9 * cin)
    return _pad_rows(patches.astype(jnp.bfloat16)), n * h * w
    # TODO(synk): window extraction could be streamed inside the Pallas pipeline
    # (overlapping index_map) to avoid materializing the 9*Cin patch slab at all.


def _pixel_shuffle(z, n, h, w, c):
    """(n*h*w, (py,px,c)) -> (n, 2h, 2w, c)."""
    z = z.reshape(n, h, w, 2, 2, c)
    z = jnp.transpose(z, (0, 1, 3, 2, 4, 5))
    return z.reshape(n, 2 * h, 2 * w, c)


def first_conv_bn_relu(x_nchw, wm0, gamma, beta):
    """ConvT(nz->C0, k=4, s=1, p=0) on a 1x1 input == plain GEMM, then BN+ReLU."""
    n = x_nchw.shape[0]
    cout = gamma.shape[0]
    a = _pad_rows(x_nchw.reshape(n, -1).astype(jnp.bfloat16))
    y, s, sq = pallas_matmul_bn_stats(a, wm0)                 # cols = (oy, ox, co)
    scale, shift = _bn_scale_shift(s, sq, n * 16, gamma, beta, groups=16)
    z = pallas_bn_relu_apply(y, scale, shift)[:n]
    return z.reshape(n, 4, 4, cout)


def conv_t_bn_relu(x_nhwc, wm, gamma, beta):
    """ConvT(k=4, s=2, p=1) as one sub-pixel GEMM + fused BN stats, then BN+ReLU."""
    n, h, w, _ = x_nhwc.shape
    cout = gamma.shape[0]
    patches, m_real = _subpixel_patches(x_nhwc)
    y, s, sq = pallas_matmul_bn_stats(patches, wm)            # cols = (py, px, co)
    scale, shift = _bn_scale_shift(s, sq, m_real * 4, gamma, beta, groups=4)
    z = pallas_bn_relu_apply(y, scale, shift)[:m_real]
    return _pixel_shuffle(z, n, h, w, cout)


def last_conv_tanh(x_nhwc, wm):
    """Final ConvT(k=4, s=2, p=1) with Tanh fused into the GEMM epilogue."""
    n, h, w, _ = x_nhwc.shape
    cout = wm.shape[1] // 4
    patches, m_real = _subpixel_patches(x_nhwc)
    y = pallas_matmul_tanh(patches, wm)[:m_real]
    return _pixel_shuffle(y, n, h, w, cout)


# ---------------------------------------------------------------------------
# Parameters (PyTorch layouts) and one-time GEMM-matrix preparation
# ---------------------------------------------------------------------------
def init_generator_params(key, nz, nc, ngf):
    ch = [nz, ngf * 8, ngf * 4, ngf * 2, ngf, nc]
    params = {}
    keys = jax.random.split(key, 13)
    ki = 0
    for i in range(5):
        params[f"w{i}"] = 0.02 * jax.random.normal(
            keys[ki], (ch[i], ch[i + 1], 4, 4), jnp.float32)
        ki += 1
    for i in range(4):
        c = ch[i + 1]
        params[f"gamma{i}"] = 1.0 + 0.1 * jax.random.normal(keys[ki], (c,), jnp.float32)
        ki += 1
        params[f"beta{i}"] = 0.05 * jax.random.normal(keys[ki], (c,), jnp.float32)
        ki += 1
    return params


def _subpixel_weight(w):
    """PyTorch ConvT weight (Cin, Cout, 4, 4) -> (9*Cin, 4*Cout) bf16 GEMM matrix.

    For stride 2 / pad 1 / k=4, output pixel (2q+py, 2r+px) only touches the 2x2
    input taps xpad[q+py+a, r+px+b] (a,b in {0,1}) with weight w[:, :, 3-2a-py,
    3-2b-px].  We embed those taps into the shared 3x3 patch window (u=py+a,
    v=px+b); untouched (u, v, py, px) slots are structural zeros.
    """
    cin, cout = w.shape[0], w.shape[1]
    wc = jnp.zeros((3, 3, cin, 2, 2, cout), jnp.float32)
    for py in range(2):
        for px in range(2):
            for a in range(2):
                for b in range(2):
                    u, v = py + a, px + b
                    kh, kw = 3 - 2 * a - py, 3 - 2 * b - px
                    wc = wc.at[u, v, :, py, px, :].set(w[:, :, kh, kw])
    return wc.reshape(9 * cin, 4 * cout).astype(jnp.bfloat16)


def prepare_generator_params(params):
    """Precompute bf16 GEMM-ready weight matrices once (outside the forward)."""
    w0 = params["w0"]
    prep = {"wm0": jnp.transpose(w0, (0, 2, 3, 1))           # (nz, 4, 4, C0)
                   .reshape(w0.shape[0], -1).astype(jnp.bfloat16)}
    for i in range(1, 5):
        prep[f"wm{i}"] = _subpixel_weight(params[f"w{i}"])
    for i in range(4):
        prep[f"gamma{i}"] = params[f"gamma{i}"]
        prep[f"beta{i}"] = params[f"beta{i}"]
    return prep


# ---------------------------------------------------------------------------
# Generator forward
# ---------------------------------------------------------------------------
@jax.jit
def generator_forward(x_nchw, prep):
    x = first_conv_bn_relu(x_nchw.astype(jnp.float32), prep["wm0"],
                           prep["gamma0"], prep["beta0"])      # (N, 4, 4, 8*ngf)
    for i in range(1, 4):
        x = conv_t_bn_relu(x, prep[f"wm{i}"], prep[f"gamma{i}"], prep[f"beta{i}"])
    x = last_conv_tanh(x, prep["wm4"])                         # (N, 64, 64, nc)
    return jnp.transpose(x, (0, 3, 1, 2)).astype(jnp.float32)  # back to NCHW


# ---------------------------------------------------------------------------
# Pure-JAX f32 reference (PyTorch semantics) for correctness checking
# ---------------------------------------------------------------------------
def _ref_conv_transpose(x_nhwc, w, stride, padding):
    k = w.shape[2]
    rhs = jnp.transpose(w[:, :, ::-1, ::-1], (2, 3, 0, 1))     # HWIO, flipped
    pad = k - 1 - padding
    return jax.lax.conv_general_dilated(
        x_nhwc, rhs, window_strides=(1, 1),
        padding=((pad, pad), (pad, pad)), lhs_dilation=(stride, stride),
        dimension_numbers=("NHWC", "HWIO", "NHWC"),
        precision=jax.lax.Precision.HIGHEST)


def ref_generator_forward(x_nchw, params, eps=1e-5):
    x = jnp.transpose(x_nchw, (0, 2, 3, 1)).astype(jnp.float32)
    cfgs = [(1, 0), (2, 1), (2, 1), (2, 1), (2, 1)]
    for i in range(4):
        x = _ref_conv_transpose(x, params[f"w{i}"], *cfgs[i])
        mean = jnp.mean(x, axis=(0, 1, 2))
        var = jnp.mean((x - mean) ** 2, axis=(0, 1, 2))
        x = (x - mean) * jax.lax.rsqrt(var + eps) * params[f"gamma{i}"] + params[f"beta{i}"]
        x = jnp.maximum(x, 0.0)
    x = jnp.tanh(_ref_conv_transpose(x, params["w4"], *cfgs[4]))
    return jnp.transpose(x, (0, 3, 1, 2))


if __name__ == "__main__":
    nz, nc, ngf, batch = 8, 3, 8, 2
    key = jax.random.PRNGKey(0)
    k_param, k_x = jax.random.split(key)
    params = init_generator_params(k_param, nz, nc, ngf)
    prep = prepare_generator_params(params)
    x = jax.random.normal(k_x, (batch, nz, 1, 1), jnp.float32)

    out = jax.block_until_ready(generator_forward(x, prep))

    assert out.shape == (batch, nc, 64, 64), out.shape
    assert bool(jnp.all(jnp.isfinite(out)))
    assert bool(jnp.all(jnp.abs(out) <= 1.0 + 1e-6))          # tanh range

    # Cross-check vs pure-JAX f32 reference (loose tolerance: bf16 MXU operands).
    ref = jax.block_until_ready(ref_generator_forward(x, params))
    max_diff = float(jnp.max(jnp.abs(out - ref)))
    mean_diff = float(jnp.mean(jnp.abs(out - ref)))
    assert max_diff < 1e-1, f"max |pallas - ref| = {max_diff}"
    assert mean_diff < 2e-2, f"mean |pallas - ref| = {mean_diff}"

    print("KERNEL_OK")
</pallas_src>

<mosaic_0001>
module attributes {stable_mosaic.version = 11 : i64} {
  func.func @_mm_stats_kernel(%arg0: i32, %arg1: memref<16x8xbf16, #tpu.memory_space<vmem>>, %arg2: memref<8x1024xbf16, #tpu.memory_space<vmem>>, %arg3: memref<16x1024xbf16, #tpu.memory_space<vmem>>, %arg4: memref<8x1024xf32, #tpu.memory_space<vmem>>, %arg5: memref<8x1024xf32, #tpu.memory_space<vmem>>) attributes {dimension_semantics = [#tpu.dimension_semantics<parallel>], iteration_bounds = array<i64: 1>, scalar_prefetch = 0 : i64, scratch_operands = 0 : i64, tpu.core_type = #tpu.core_type<tc>, window_params = [{transform_indices = @transform_0, window_bounds = array<i64: 16, 8>}, {pipeline_mode = #tpu.pipeline_mode<synchronous>, transform_indices = @transform_1, window_bounds = array<i64: 8, 1024>}, {transform_indices = @transform_2, window_bounds = array<i64: 16, 1024>}, {transform_indices = @transform_3, window_bounds = array<i64: 8, 1024>}, {transform_indices = @transform_4, window_bounds = array<i64: 8, 1024>}]} {
    %c0 = arith.constant 0 : index
    %c0_0 = arith.constant 0 : index
    %0 = vector.load %arg1[%c0, %c0_0] : memref<16x8xbf16, #tpu.memory_space<vmem>>, vector<16x8xbf16>
    %c0_1 = arith.constant 0 : index
    %c0_2 = arith.constant 0 : index
    %1 = vector.load %arg2[%c0_1, %c0_2] : memref<8x1024xbf16, #tpu.memory_space<vmem>>, vector<8x1024xbf16>
    %cst = arith.constant dense<0.000000e+00> : vector<16x1024xf32>
    %2 = tpu.matmul %0, %1, %cst {dimension_numbers = #tpu.dot_dimension_numbers<[1], [0], [0], [1], [0, 0, 1, 1], [], []>} : vector<16x8xbf16>, vector<8x1024xbf16>, vector<16x1024xf32> -> vector<16x1024xf32>
    %3 = arith.truncf %2 : vector<16x1024xf32> to vector<16x1024xbf16>
    %c0_3 = arith.constant 0 : index
    %c0_4 = arith.constant 0 : index
    %4 = vector.load %arg3[%c0_3, %c0_4] : memref<16x1024xbf16, #tpu.memory_space<vmem>>, vector<16x1024xbf16>
    tpu.vector_store %arg3[%c0_3, %c0_4], %3 {strides = array<i32>} : memref<16x1024xbf16, #tpu.memory_space<vmem>>, vector<16x1024xbf16>,
    %cst_5 = arith.constant dense<0.000000e+00> : vector<1024xf32>
    %5 = vector.multi_reduction <add>, %2, %cst_5 [0] : vector<16x1024xf32> to vector<1024xf32>
    %6 = vector.shape_cast %5 : vector<1024xf32> to vector<1x1024xf32>
    %7 = vector.shape_cast %6 : vector<1x1024xf32> to vector<1x1024xf32>
    %8 = vector.broadcast %7 : vector<1x1024xf32> to vector<8x1024xf32>
    %c0_6 = arith.constant 0 : index
    %c0_7 = arith.constant 0 : index
    %9 = vector.load %arg4[%c0_6, %c0_7] : memref<8x1024xf32, #tpu.memory_space<vmem>>, vector<8x1024xf32>
    tpu.vector_store %arg4[%c0_6, %c0_7], %8 {strides = array<i32>} : memref<8x1024xf32, #tpu.memory_space<vmem>>, vector<8x1024xf32>,
    %10 = arith.mulf %2, %2 : vector<16x1024xf32>
    %cst_8 = arith.constant dense<0.000000e+00> : vector<1024xf32>
    %11 = vector.multi_reduction <add>, %10, %cst_8 [0] : vector<16x1024xf32> to vector<1024xf32>
    %12 = vector.shape_cast %11 : vector<1024xf32> to vector<1x1024xf32>
    %13 = vector.shape_cast %12 : vector<1x1024xf32> to vector<1x1024xf32>
    %14 = vector.broadcast %13 : vector<1x1024xf32> to vector<8x1024xf32>
    %c0_9 = arith.constant 0 : index
    %c0_10 = arith.constant 0 : index
    %15 = vector.load %arg5[%c0_9, %c0_10] : memref<8x1024xf32, #tpu.memory_space<vmem>>, vector<8x1024xf32>
    tpu.vector_store %arg5[%c0_9, %c0_10], %14 {strides = array<i32>} : memref<8x1024xf32, #tpu.memory_space<vmem>>, vector<8x1024xf32>,
    return
  }
  func.func @transform_0(%arg0: i32) -> (i32, i32) {
    %c0_i32 = arith.constant 0 : i32
    %c0_i32_0 = arith.constant 0 : i32
    return %arg0, %c0_i32 : i32, i32
  }
  func.func @transform_1(%arg0: i32) -> (i32, i32) {
    %c0_i32 = arith.constant 0 : i32
    %c0_i32_0 = arith.constant 0 : i32
    %c0_i32_1 = arith.constant 0 : i32
    return %c0_i32, %c0_i32_0 : i32, i32
  }
  func.func @transform_2(%arg0: i32) -> (i32, i32) {
    %c0_i32 = arith.constant 0 : i32
    %c0_i32_0 = arith.constant 0 : i32
    return %arg0, %c0_i32 : i32, i32
  }
  func.func @transform_3(%arg0: i32) -> (i32, i32) {
    %c0_i32 = arith.constant 0 : i32
    %c0_i32_0 = arith.constant 0 : i32
    return %arg0, %c0_i32 : i32, i32
  }
  func.func @transform_4(%arg0: i32) -> (i32, i32) {
    %c0_i32 = arith.constant 0 : i32
    %c0_i32_0 = arith.constant 0 : i32
    return %arg0, %c0_i32 : i32, i32
  }
}

module attributes {stable_mosaic.version = 11 : i64} {
  func.func @_bn_relu_kernel(%arg0: i32, %arg1: memref<16x1024xbf16, #tpu.memory_space<vmem>>, %arg2: memref<1x1024xf32, #tpu.memory_space<vmem>>, %arg3: memref<1x1024xf32, #tpu.memory_space<vmem>>, %arg4: memref<16x1024xbf16, #tpu.memory_space<vmem>>) attributes {dimension_semantics = [#tpu.dimension_semantics<parallel>], iteration_bounds = array<i64: 1>, scalar_prefetch = 0 : i64, scratch_operands = 0 : i64, tpu.core_type = #tpu.core_type<tc>, window_params = [{transform_indices = @transform_0, window_bounds = array<i64: 16, 1024>}, {pipeline_mode = #tpu.pipeline_mode<synchronous>, transform_indices = @transform_1, window_bounds = array<i64: 1, 1024>}, {pipeline_mode = #tpu.pipeline_mode<synchronous>, transform_indices = @transform_2, window_bounds = array<i64: 1, 1024>}, {transform_indices = @transform_3, window_bounds = array<i64: 16, 1024>}]} {
    %c0 = arith.constant 0 : index
    %c0_0 = arith.constant 0 : index
    %0 = vector.load %arg1[%c0, %c0_0] : memref<16x1024xbf16, #tpu.memory_space<vmem>>, vector<16x1024xbf16>
    %1 = arith.extf %0 : vector<16x1024xbf16> to vector<16x1024xf32>
    %c0_1 = arith.constant 0 : index
    %c0_2 = arith.constant 0 : index
    %2 = vector.load %arg2[%c0_1, %c0_2] : memref<1x1024xf32, #tpu.memory_space<vmem>>, vector<1x1024xf32>
    %3 = vector.broadcast %2 : vector<1x1024xf32> to vector<16x1024xf32>
    %4 = arith.mulf %1, %3 : vector<16x1024xf32>
    %c0_3 = arith.constant 0 : index
    %c0_4 = arith.constant 0 : index
    %5 = vector.load %arg3[%c0_3, %c0_4] : memref<1x1024xf32, #tpu.memory_space<vmem>>, vector<1x1024xf32>
    %6 = vector.broadcast %5 : vector<1x1024xf32> to vector<16x1024xf32>
    %7 = arith.addf %4, %6 : vector<16x1024xf32>
    %cst = arith.constant 0.000000e+00 : f32
    %8 = vector.broadcast %cst : f32 to vector<16x1024xf32>
    %9 = arith.maximumf %7, %8 : vector<16x1024xf32>
    %10 = arith.truncf %9 : vector<16x1024xf32> to vector<16x1024xbf16>
    %c0_5 = arith.constant 0 : index
    %c0_6 = arith.constant 0 : index
    %11 = vector.load %arg4[%c0_5, %c0_6] : memref<16x1024xbf16, #tpu.memory_space<vmem>>, vector<16x1024xbf16>
    tpu.vector_store %arg4[%c0_5, %c0_6], %10 {strides = array<i32>} : memref<16x1024xbf16, #tpu.memory_space<vmem>>, vector<16x1024xbf16>,
    return
  }
  func.func @transform_0(%arg0: i32) -> (i32, i32) {
    %c0_i32 = arith.constant 0 : i32
    %c0_i32_0 = arith.constant 0 : i32
    return %arg0, %c0_i32 : i32, i32
  }
  func.func @transform_1(%arg0: i32) -> (i32, i32) {
    %c0_i32 = arith.constant 0 : i32
    %c0_i32_0 = arith.constant 0 : i32
    %c0_i32_1 = arith.constant 0 : i32
    return %c0_i32, %c0_i32_0 : i32, i32
  }
  func.func @transform_2(%arg0: i32) -> (i32, i32) {
    %c0_i32 = arith.constant 0 : i32
    %c0_i32_0 = arith.constant 0 : i32
    %c0_i32_1 = arith.constant 0 : i32
    return %c0_i32, %c0_i32_0 : i32, i32
  }
  func.func @transform_3(%arg0: i32) -> (i32, i32) {
    %c0_i32 = arith.constant 0 : i32
    %c0_i32_0 = arith.constant 0 : i32
    return %arg0, %c0_i32 : i32, i32
  }
}

module attributes {stable_mosaic.version = 11 : i64} {
  func.func @_mm_stats_kernel(%arg0: i32, %arg1: memref<32x576xbf16, #tpu.memory_space<vmem>>, %arg2: memref<576x128xbf16, #tpu.memory_space<vmem>>, %arg3: memref<32x128xbf16, #tpu.memory_space<vmem>>, %arg4: memref<8x128xf32, #tpu.memory_space<vmem>>, %arg5: memref<8x128xf32, #tpu.memory_space<vmem>>) attributes {dimension_semantics = [#tpu.dimension_semantics<parallel>], iteration_bounds = array<i64: 1>, scalar_prefetch = 0 : i64, scratch_operands = 0 : i64, tpu.core_type = #tpu.core_type<tc>, window_params = [{transform_indices = @transform_0, window_bounds = array<i64: 32, 576>}, {pipeline_mode = #tpu.pipeline_mode<synchronous>, transform_indices = @transform_1, window_bounds = array<i64: 576, 128>}, {transform_indices = @transform_2, window_bounds = array<i64: 32, 128>}, {transform_indices = @transform_3, window_bounds = array<i64: 8, 128>}, {transform_indices = @transform_4, window_bounds = array<i64: 8, 128>}]} {
    %c0 = arith.constant 0 : index
    %c0_0 = arith.constant 0 : index
    %0 = vector.load %arg1[%c0, %c0_0] : memref<32x576xbf16, #tpu.memory_space<vmem>>, vector<32x576xbf16>
    %c0_1 = arith.constant 0 : index
    %c0_2 = arith.constant 0 : index
    %1 = vector.load %arg2[%c0_1, %c0_2] : memref<576x128xbf16, #tpu.memory_space<vmem>>, vector<576x128xbf16>
    %cst = arith.constant dense<0.000000e+00> : vector<32x128xf32>
    %2 = tpu.matmul %0, %1, %cst {dimension_numbers = #tpu.dot_dimension_numbers<[1], [0], [0], [1], [0, 0, 1, 1], [], []>} : vector<32x576xbf16>, vector<576x128xbf16>, vector<32x128xf32> -> vector<32x128xf32>
    %3 = arith.truncf %2 : vector<32x128xf32> to vector<32x128xbf16>
    %c0_3 = arith.constant 0 : index
    %c0_4 = arith.constant 0 : index
    %4 = vector.load %arg3[%c0_3, %c0_4] : memref<32x128xbf16, #tpu.memory_space<vmem>>, vector<32x128xbf16>
    tpu.vector_store %arg3[%c0_3, %c0_4], %3 {strides = array<i32>} : memref<32x128xbf16, #tpu.memory_space<vmem>>, vector<32x128xbf16>,
    %cst_5 = arith.constant dense<0.000000e+00> : vector<128xf32>
    %5 = vector.multi_reduction <add>, %2, %cst_5 [0] : vector<32x128xf32> to vector<128xf32>
    %6 = vector.shape_cast %5 : vector<128xf32> to vector<1x128xf32>
    %7 = vector.shape_cast %6 : vector<1x128xf32> to vector<1x128xf32>
    %8 = vector.broadcast %7 : vector<1x128xf32> to vector<8x128xf32>
    %c0_6 = arith.constant 0 : index
    %c0_7 = arith.constant 0 : index
    %9 = vector.load %arg4[%c0_6, %c0_7] : memref<8x128xf32, #tpu.memory_space<vmem>>, vector<8x128xf32>
    tpu.vector_store %arg4[%c0_6, %c0_7], %8 {strides = array<i32>} : memref<8x128xf32, #tpu.memory_space<vmem>>, vector<8x128xf32>,
    %10 = arith.mulf %2, %2 : vector<32x128xf32>
    %cst_8 = arith.constant dense<0.000000e+00> : vector<128xf32>
    %11 = vector.multi_reduction <add>, %10, %cst_8 [0] : vector<32x128xf32> to vector<128xf32>
    %12 = vector.shape_cast %11 : vector<128xf32> to vector<1x128xf32>
    %13 = vector.shape_cast %12 : vector<1x128xf32> to vector<1x128xf32>
    %14 = vector.broadcast %13 : vector<1x128xf32> to vector<8x128xf32>
    %c0_9 = arith.constant 0 : index
    %c0_10 = arith.constant 0 : index
    %15 = vector.load %arg5[%c0_9, %c0_10] : memref<8x128xf32, #tpu.memory_space<vmem>>, vector<8x128xf32>
    tpu.vector_store %arg5[%c0_9, %c0_10], %14 {strides = array<i32>} : memref<8x128xf32, #tpu.memory_space<vmem>>, vector<8x128xf32>,
    return
  }
  func.func @transform_0(%arg0: i32) -> (i32, i32) {
    %c0_i32 = arith.constant 0 : i32
    %c0_i32_0 = arith.constant 0 : i32
    return %arg0, %c0_i32 : i32, i32
  }
  func.func @transform_1(%arg0: i32) -> (i32, i32) {
    %c0_i32 = arith.constant 0 : i32
    %c0_i32_0 = arith.constant 0 : i32
    %c0_i32_1 = arith.constant 0 : i32
    return %c0_i32, %c0_i32_0 : i32, i32
  }
  func.func @transform_2(%arg0: i32) -> (i32, i32) {
    %c0_i32 = arith.constant 0 : i32
    %c0_i32_0 = arith.constant 0 : i32
    return %arg0, %c0_i32 : i32, i32
  }
  func.func @transform_3(%arg0: i32) -> (i32, i32) {
    %c0_i32 = arith.constant 0 : i32
    %c0_i32_0 = arith.constant 0 : i32
    return %arg0, %c0_i32 : i32, i32
  }
  func.func @transform_4(%arg0: i32) -> (i32, i32) {
    %c0_i32 = arith.constant 0 : i32
    %c0_i32_0 = arith.constant 0 : i32
    return %arg0, %c0_i32 : i32, i32
  }
}

module attributes {stable_mosaic.version = 11 : i64} {
  func.func @_bn_relu_kernel(%arg0: i32, %arg1: memref<32x128xbf16, #tpu.memory_space<vmem>>, %arg2: memref<1x128xf32, #tpu.memory_space<vmem>>, %arg3: memref<1x128xf32, #tpu.memory_space<vmem>>, %arg4: memref<32x128xbf16, #tpu.memory_space<vmem>>) attributes {dimension_semantics = [#tpu.dimension_semantics<parallel>], iteration_bounds = array<i64: 1>, scalar_prefetch = 0 : i64, scratch_operands = 0 : i64, tpu.core_type = #tpu.core_type<tc>, window_params = [{transform_indices = @transform_0, window_bounds = array<i64: 32, 128>}, {pipeline_mode = #tpu.pipeline_mode<synchronous>, transform_indices = @transform_1, window_bounds = array<i64: 1, 128>}, {pipeline_mode = #tpu.pipeline_mode<synchronous>, transform_indices = @transform_2, window_bounds = array<i64: 1, 128>}, {transform_indices = @transform_3, window_bounds = array<i64: 32, 128>}]} {
    %c0 = arith.constant 0 : index
    %c0_0 = arith.constant 0 : index
    %0 = vector.load %arg1[%c0, %c0_0] : memref<32x128xbf16, #tpu.memory_space<vmem>>, vector<32x128xbf16>
    %1 = arith.extf %0 : vector<32x128xbf16> to vector<32x128xf32>
    %c0_1 = arith.constant 0 : index
    %c0_2 = arith.constant 0 : index
    %2 = vector.load %arg2[%c0_1, %c0_2] : memref<1x128xf32, #tpu.memory_space<vmem>>, vector<1x128xf32>
    %3 = vector.broadcast %2 : vector<1x128xf32> to vector<32x128xf32>
    %4 = arith.mulf %1, %3 : vector<32x128xf32>
    %c0_3 = arith.constant 0 : index
    %c0_4 = arith.constant 0 : index
    %5 = vector.load %arg3[%c0_3, %c0_4] : memref<1x128xf32, #tpu.memory_space<vmem>>, vector<1x128xf32>
    %6 = vector.broadcast %5 : vector<1x128xf32> to vector<32x128xf32>
    %7 = arith.addf %4, %6 : vector<32x128xf32>
    %cst = arith.constant 0.000000e+00 : f32
    %8 = vector.broadcast %cst : f32 to vector<32x128xf32>
    %9 = arith.maximumf %7, %8 : vector<32x128xf32>
    %10 = arith.truncf %9 : vector<32x128xf32> to vector<32x128xbf16>
    %c0_5 = arith.constant 0 : index
    %c0_6 = arith.constant 0 : index
    %11 = vector.load %arg4[%c0_5, %c0_6] : memref<32x128xbf16, #tpu.memory_space<vmem>>, vector<32x128xbf16>
    tpu.vector_store %arg4[%c0_5, %c0_6], %10 {strides = array<i32>} : memref<32x128xbf16, #tpu.memory_space<vmem>>, vector<32x128xbf16>,
    return
  }
  func.func @transform_0(%arg0: i32) -> (i32, i32) {
    %c0_i32 = arith.constant 0 : i32
    %c0_i32_0 = arith.constant 0 : i32
    return %arg0, %c0_i32 : i32, i32
  }
  func.func @transform_1(%arg0: i32) -> (i32, i32) {
    %c0_i32 = arith.constant 0 : i32
    %c0_i32_0 = arith.constant 0 : i32
    %c0_i32_1 = arith.constant 0 : i32
    return %c0_i32, %c0_i32_0 : i32, i32
  }
  func.func @transform_2(%arg0: i32) -> (i32, i32) {
    %c0_i32 = arith.constant 0 : i32
    %c0_i32_0 = arith.constant 0 : i32
    %c0_i32_1 = arith.constant 0 : i32
    return %c0_i32, %c0_i32_0 : i32, i32
  }
  func.func @transform_3(%arg0: i32) -> (i32, i32) {
    %c0_i32 = arith.constant 0 : i32
    %c0_i32_0 = arith.constant 0 : i32
    return %arg0, %c0_i32 : i32, i32
  }
}

module attributes {stable_mosaic.version = 11 : i64} {
  func.func @_mm_stats_kernel(%arg0: i32, %arg1: memref<128x288xbf16, #tpu.memory_space<vmem>>, %arg2: memref<288x64xbf16, #tpu.memory_space<vmem>>, %arg3: memref<128x64xbf16, #tpu.memory_space<vmem>>, %arg4: memref<8x64xf32, #tpu.memory_space<vmem>>, %arg5: memref<8x64xf32, #tpu.memory_space<vmem>>) attributes {dimension_semantics = [#tpu.dimension_semantics<parallel>], iteration_bounds = array<i64: 1>, scalar_prefetch = 0 : i64, scratch_operands = 0 : i64, tpu.core_type = #tpu.core_type<tc>, window_params = [{transform_indices = @transform_0, window_bounds = array<i64: 128, 288>}, {pipeline_mode = #tpu.pipeline_mode<synchronous>, transform_indices = @transform_1, window_bounds = array<i64: 288, 64>}, {transform_indices = @transform_2, window_bounds = array<i64: 128, 64>}, {transform_indices = @transform_3, window_bounds = array<i64: 8, 64>}, {transform_indices = @transform_4, window_bounds = array<i64: 8, 64>}]} {
    %c0 = arith.constant 0 : index
    %c0_0 = arith.constant 0 : index
    %0 = vector.load %arg1[%c0, %c0_0] : memref<128x288xbf16, #tpu.memory_space<vmem>>, vector<128x288xbf16>
    %c0_1 = arith.constant 0 : index
    %c0_2 = arith.constant 0 : index
    %1 = vector.load %arg2[%c0_1, %c0_2] : memref<288x64xbf16, #tpu.memory_space<vmem>>, vector<288x64xbf16>
    %cst = arith.constant dense<0.000000e+00> : vector<128x64xf32>
    %2 = tpu.matmul %0, %1, %cst {dimension_numbers = #tpu.dot_dimension_numbers<[1], [0], [0], [1], [0, 0, 1, 1], [], []>} : vector<128x288xbf16>, vector<288x64xbf16>, vector<128x64xf32> -> vector<128x64xf32>
    %3 = arith.truncf %2 : vector<128x64xf32> to vector<128x64xbf16>
    %c0_3 = arith.constant 0 : index
    %c0_4 = arith.constant 0 : index
    %4 = vector.load %arg3[%c0_3, %c0_4] : memref<128x64xbf16, #tpu.memory_space<vmem>>, vector<128x64xbf16>
    tpu.vector_store %arg3[%c0_3, %c0_4], %3 {strides = array<i32>} : memref<128x64xbf16, #tpu.memory_space<vmem>>, vector<128x64xbf16>,
    %cst_5 = arith.constant dense<0.000000e+00> : vector<64xf32>
    %5 = vector.multi_reduction <add>, %2, %cst_5 [0] : vector<128x64xf32> to vector<64xf32>
    %6 = vector.shape_cast %5 : vector<64xf32> to vector<1x64xf32>
    %7 = vector.shape_cast %6 : vector<1x64xf32> to vector<1x64xf32>
    %8 = vector.broadcast %7 : vector<1x64xf32> to vector<8x64xf32>
    %c0_6 = arith.constant 0 : index
    %c0_7 = arith.constant 0 : index
    %9 = vector.load %arg4[%c0_6, %c0_7] : memref<8x64xf32, #tpu.memory_space<vmem>>, vector<8x64xf32>
    tpu.vector_store %arg4[%c0_6, %c0_7], %8 {strides = array<i32>} : memref<8x64xf32, #tpu.memory_space<vmem>>, vector<8x64xf32>,
    %10 = arith.mulf %2, %2 : vector<128x64xf32>
    %cst_8 = arith.constant dense<0.000000e+00> : vector<64xf32>
    %11 = vector.multi_reduction <add>, %10, %cst_8 [0] : vector<128x64xf32> to vector<64xf32>
    %12 = vector.shape_cast %11 : vector<64xf32> to vector<1x64xf32>
    %13 = vector.shape_cast %12 : vector<1x64xf32> to vector<1x64xf32>
    %14 = vector.broadcast %13 : vector<1x64xf32> to vector<8x64xf32>
    %c0_9 = arith.constant 0 : index
    %c0_10 = arith.constant 0 : index
    %15 = vector.load %arg5[%c0_9, %c0_10] : memref<8x64xf32, #tpu.memory_space<vmem>>, vector<8x64xf32>
    tpu.vector_store %arg5[%c0_9, %c0_10], %14 {strides = array<i32>} : memref<8x64xf32, #tpu.memory_space<vmem>>, vector<8x64xf32>,
    return
  }
  func.func @transform_0(%arg0: i32) -> (i32, i32) {
    %c0_i32 = arith.constant 0 : i32
    %c0_i32_0 = arith.constant 0 : i32
    return %arg0, %c0_i32 : i32, i32
  }
  func.func @transform_1(%arg0: i32) -> (i32, i32) {
    %c0_i32 = arith.constant 0 : i32
    %c0_i32_0 = arith.constant 0 : i32
    %c0_i32_1 = arith.constant 0 : i32
    return %c0_i32, %c0_i32_0 : i32, i32
  }
  func.func @transform_2(%arg0: i32) -> (i32, i32) {
    %c0_i32 = arith.constant 0 : i32
    %c0_i32_0 = arith.constant 0 : i32
    return %arg0, %c0_i32 : i32, i32
  }
  func.func @transform_3(%arg0: i32) -> (i32, i32) {
    %c0_i32 = arith.constant 0 : i32
    %c0_i32_0 = arith.constant 0 : i32
    return %arg0, %c0_i32 : i32, i32
  }
  func.func @transform_4(%arg0: i32) -> (i32, i32) {
    %c0_i32 = arith.constant 0 : i32
    %c0_i32_0 = arith.constant 0 : i32
    return %arg0, %c0_i32 : i32, i32
  }
}

module attributes {stable_mosaic.version = 11 : i64} {
  func.func @_bn_relu_kernel(%arg0: i32, %arg1: memref<128x64xbf16, #tpu.memory_space<vmem>>, %arg2: memref<1x64xf32, #tpu.memory_space<vmem>>, %arg3: memref<1x64xf32, #tpu.memory_space<vmem>>, %arg4: memref<128x64xbf16, #tpu.memory_space<vmem>>) attributes {dimension_semantics = [#tpu.dimension_semantics<parallel>], iteration_bounds = array<i64: 1>, scalar_prefetch = 0 : i64, scratch_operands = 0 : i64, tpu.core_type = #tpu.core_type<tc>, window_params = [{transform_indices = @transform_0, window_bounds = array<i64: 128, 64>}, {pipeline_mode = #tpu.pipeline_mode<synchronous>, transform_indices = @transform_1, window_bounds = array<i64: 1, 64>}, {pipeline_mode = #tpu.pipeline_mode<synchronous>, transform_indices = @transform_2, window_bounds = array<i64: 1, 64>}, {transform_indices = @transform_3, window_bounds = array<i64: 128, 64>}]} {
    %c0 = arith.constant 0 : index
    %c0_0 = arith.constant 0 : index
    %0 = vector.load %arg1[%c0, %c0_0] : memref<128x64xbf16, #tpu.memory_space<vmem>>, vector<128x64xbf16>
    %1 = arith.extf %0 : vector<128x64xbf16> to vector<128x64xf32>
    %c0_1 = arith.constant 0 : index
    %c0_2 = arith.constant 0 : index
    %2 = vector.load %arg2[%c0_1, %c0_2] : memref<1x64xf32, #tpu.memory_space<vmem>>, vector<1x64xf32>
    %3 = vector.broadcast %2 : vector<1x64xf32> to vector<128x64xf32>
    %4 = arith.mulf %1, %3 : vector<128x64xf32>
    %c0_3 = arith.constant 0 : index
    %c0_4 = arith.constant 0 : index
    %5 = vector.load %arg3[%c0_3, %c0_4] : memref<1x64xf32, #tpu.memory_space<vmem>>, vector<1x64xf32>
    %6 = vector.broadcast %5 : vector<1x64xf32> to vector<128x64xf32>
    %7 = arith.addf %4, %6 : vector<128x64xf32>
    %cst = arith.constant 0.000000e+00 : f32
    %8 = vector.broadcast %cst : f32 to vector<128x64xf32>
    %9 = arith.maximumf %7, %8 : vector<128x64xf32>
    %10 = arith.truncf %9 : vector<128x64xf32> to vector<128x64xbf16>
    %c0_5 = arith.constant 0 : index
    %c0_6 = arith.constant 0 : index
    %11 = vector.load %arg4[%c0_5, %c0_6] : memref<128x64xbf16, #tpu.memory_space<vmem>>, vector<128x64xbf16>
    tpu.vector_store %arg4[%c0_5, %c0_6], %10 {strides = array<i32>} : memref<128x64xbf16, #tpu.memory_space<vmem>>, vector<128x64xbf16>,
    return
  }
  func.func @transform_0(%arg0: i32) -> (i32, i32) {
    %c0_i32 = arith.constant 0 : i32
    %c0_i32_0 = arith.constant 0 : i32
    return %arg0, %c0_i32 : i32, i32
  }
  func.func @transform_1(%arg0: i32) -> (i32, i32) {
    %c0_i32 = arith.constant 0 : i32
    %c0_i32_0 = arith.constant 0 : i32
    %c0_i32_1 = arith.constant 0 : i32
    return %c0_i32, %c0_i32_0 : i32, i32
  }
  func.func @transform_2(%arg0: i32) -> (i32, i32) {
    %c0_i32 = arith.constant 0 : i32
    %c0_i32_0 = arith.constant 0 : i32
    %c0_i32_1 = arith.constant 0 : i32
    return %c0_i32, %c0_i32_0 : i32, i32
  }
  func.func @transform_3(%arg0: i32) -> (i32, i32) {
    %c0_i32 = arith.constant 0 : i32
    %c0_i32_0 = arith.constant 0 : i32
    return %arg0, %c0_i32 : i32, i32
  }
}

module attributes {stable_mosaic.version = 11 : i64} {
  func.func @_mm_stats_kernel(%arg0: i32, %arg1: memref<256x144xbf16, #tpu.memory_space<vmem>>, %arg2: memref<144x32xbf16, #tpu.memory_space<vmem>>, %arg3: memref<256x32xbf16, #tpu.memory_space<vmem>>, %arg4: memref<8x32xf32, #tpu.memory_space<vmem>>, %arg5: memref<8x32xf32, #tpu.memory_space<vmem>>) attributes {dimension_semantics = [#tpu.dimension_semantics<parallel>], iteration_bounds = array<i64: 2>, scalar_prefetch = 0 : i64, scratch_operands = 0 : i64, tpu.core_type = #tpu.core_type<tc>, window_params = [{transform_indices = @transform_0, window_bounds = array<i64: 256, 144>}, {pipeline_mode = #tpu.pipeline_mode<synchronous>, transform_indices = @transform_1, window_bounds = array<i64: 144, 32>}, {transform_indices = @transform_2, window_bounds = array<i64: 256, 32>}, {transform_indices = @transform_3, window_bounds = array<i64: 8, 32>}, {transform_indices = @transform_4, window_bounds = array<i64: 8, 32>}]} {
    %c0 = arith.constant 0 : index
    %c0_0 = arith.constant 0 : index
    %0 = vector.load %arg1[%c0, %c0_0] : memref<256x144xbf16, #tpu.memory_space<vmem>>, vector<256x144xbf16>
    %c0_1 = arith.constant 0 : index
    %c0_2 = arith.constant 0 : index
    %1 = vector.load %arg2[%c0_1, %c0_2] : memref<144x32xbf16, #tpu.memory_space<vmem>>, vector<144x32xbf16>
    %cst = arith.constant dense<0.000000e+00> : vector<256x32xf32>
    %2 = tpu.matmul %0, %1, %cst {dimension_numbers = #tpu.dot_dimension_numbers<[1], [0], [0], [1], [0, 0, 1, 1], [], []>} : vector<256x144xbf16>, vector<144x32xbf16>, vector<256x32xf32> -> vector<256x32xf32>
    %3 = arith.truncf %2 : vector<256x32xf32> to vector<256x32xbf16>
    %c0_3 = arith.constant 0 : index
    %c0_4 = arith.constant 0 : index
    %4 = vector.load %arg3[%c0_3, %c0_4] : memref<256x32xbf16, #tpu.memory_space<vmem>>, vector<256x32xbf16>
    tpu.vector_store %arg3[%c0_3, %c0_4], %3 {strides = array<i32>} : memref<256x32xbf16, #tpu.memory_space<vmem>>, vector<256x32xbf16>,
    %cst_5 = arith.constant dense<0.000000e+00> : vector<32xf32>
    %5 = vector.multi_reduction <add>, %2, %cst_5 [0] : vector<256x32xf32> to vector<32xf32>
    %6 = vector.shape_cast %5 : vector<32xf32> to vector<1x32xf32>
    %7 = vector.shape_cast %6 : vector<1x32xf32> to vector<1x32xf32>
    %8 = vector.broadcast %7 : vector<1x32xf32> to vector<8x32xf32>
    %c0_6 = arith.constant 0 : index
    %c0_7 = arith.constant 0 : index
    %9 = vector.load %arg4[%c0_6, %c0_7] : memref<8x32xf32, #tpu.memory_space<vmem>>, vector<8x32xf32>
    tpu.vector_store %arg4[%c0_6, %c0_7], %8 {strides = array<i32>} : memref<8x32xf32, #tpu.memory_space<vmem>>, vector<8x32xf32>,
    %10 = arith.mulf %2, %2 : vector<256x32xf32>
    %cst_8 = arith.constant dense<0.000000e+00> : vector<32xf32>
    %11 = vector.multi_reduction <add>, %10, %cst_8 [0] : vector<256x32xf32> to vector<32xf32>
    %12 = vector.shape_cast %11 : vector<32xf32> to vector<1x32xf32>
    %13 = vector.shape_cast %12 : vector<1x32xf32> to vector<1x32xf32>
    %14 = vector.broadcast %13 : vector<1x32xf32> to vector<8x32xf32>
    %c0_9 = arith.constant 0 : index
    %c0_10 = arith.constant 0 : index
    %15 = vector.load %arg5[%c0_9, %c0_10] : memref<8x32xf32, #tpu.memory_space<vmem>>, vector<8x32xf32>
    tpu.vector_store %arg5[%c0_9, %c0_10], %14 {strides = array<i32>} : memref<8x32xf32, #tpu.memory_space<vmem>>, vector<8x32xf32>,
    return
  }
  func.func @transform_0(%arg0: i32) -> (i32, i32) {
    %c0_i32 = arith.constant 0 : i32
    %c0_i32_0 = arith.constant 0 : i32
    return %arg0, %c0_i32 : i32, i32
  }
  func.func @transform_1(%arg0: i32) -> (i32, i32) {
    %c0_i32 = arith.constant 0 : i32
    %c0_i32_0 = arith.constant 0 : i32
    %c0_i32_1 = arith.constant 0 : i32
    return %c0_i32, %c0_i32_0 : i32, i32
  }
  func.func @transform_2(%arg0: i32) -> (i32, i32) {
    %c0_i32 = arith.constant 0 : i32
    %c0_i32_0 = arith.constant 0 : i32
    return %arg0, %c0_i32 : i32, i32
  }
  func.func @transform_3(%arg0: i32) -> (i32, i32) {
    %c0_i32 = arith.constant 0 : i32
    %c0_i32_0 = arith.constant 0 : i32
    return %arg0, %c0_i32 : i32, i32
  }
  func.func @transform_4(%arg0: i32) -> (i32, i32) {
    %c0_i32 = arith.constant 0 : i32
    %c0_i32_0 = arith.constant 0 : i32
    return %arg0, %c0_i32 : i32, i32
  }
}

module attributes {stable_mosaic.version = 11 : i64} {
  func.func @_bn_relu_kernel(%arg0: i32, %arg1: memref<256x32xbf16, #tpu.memory_space<vmem>>, %arg2: memref<1x32xf32, #tpu.memory_space<vmem>>, %arg3: memref<1x32xf32, #tpu.memory_space<vmem>>, %arg4: memref<256x32xbf16, #tpu.memory_space<vmem>>) attributes {dimension_semantics = [#tpu.dimension_semantics<parallel>], iteration_bounds = array<i64: 2>, scalar_prefetch = 0 : i64, scratch_operands = 0 : i64, tpu.core_type = #tpu.core_type<tc>, window_params = [{transform_indices = @transform_0, window_bounds = array<i64: 256, 32>}, {pipeline_mode = #tpu.pipeline_mode<synchronous>, transform_indices = @transform_1, window_bounds = array<i64: 1, 32>}, {pipeline_mode = #tpu.pipeline_mode<synchronous>, transform_indices = @transform_2, window_bounds = array<i64: 1, 32>}, {transform_indices = @transform_3, window_bounds = array<i64: 256, 32>}]} {
    %c0 = arith.constant 0 : index
    %c0_0 = arith.constant 0 : index
    %0 = vector.load %arg1[%c0, %c0_0] : memref<256x32xbf16, #tpu.memory_space<vmem>>, vector<256x32xbf16>
    %1 = arith.extf %0 : vector<256x32xbf16> to vector<256x32xf32>
    %c0_1 = arith.constant 0 : index
    %c0_2 = arith.constant 0 : index
    %2 = vector.load %arg2[%c0_1, %c0_2] : memref<1x32xf32, #tpu.memory_space<vmem>>, vector<1x32xf32>
    %3 = vector.broadcast %2 : vector<1x32xf32> to vector<256x32xf32>
    %4 = arith.mulf %1, %3 : vector<256x32xf32>
    %c0_3 = arith.constant 0 : index
    %c0_4 = arith.constant 0 : index
    %5 = vector.load %arg3[%c0_3, %c0_4] : memref<1x32xf32, #tpu.memory_space<vmem>>, vector<1x32xf32>
    %6 = vector.broadcast %5 : vector<1x32xf32> to vector<256x32xf32>
    %7 = arith.addf %4, %6 : vector<256x32xf32>
    %cst = arith.constant 0.000000e+00 : f32
    %8 = vector.broadcast %cst : f32 to vector<256x32xf32>
    %9 = arith.maximumf %7, %8 : vector<256x32xf32>
    %10 = arith.truncf %9 : vector<256x32xf32> to vector<256x32xbf16>
    %c0_5 = arith.constant 0 : index
    %c0_6 = arith.constant 0 : index
    %11 = vector.load %arg4[%c0_5, %c0_6] : memref<256x32xbf16, #tpu.memory_space<vmem>>, vector<256x32xbf16>
    tpu.vector_store %arg4[%c0_5, %c0_6], %10 {strides = array<i32>} : memref<256x32xbf16, #tpu.memory_space<vmem>>, vector<256x32xbf16>,
    return
  }
  func.func @transform_0(%arg0: i32) -> (i32, i32) {
    %c0_i32 = arith.constant 0 : i32
    %c0_i32_0 = arith.constant 0 : i32
    return %arg0, %c0_i32 : i32, i32
  }
  func.func @transform_1(%arg0: i32) -> (i32, i32) {
    %c0_i32 = arith.constant 0 : i32
    %c0_i32_0 = arith.constant 0 : i32
    %c0_i32_1 = arith.constant 0 : i32
    return %c0_i32, %c0_i32_0 : i32, i32
  }
  func.func @transform_2(%arg0: i32) -> (i32, i32) {
    %c0_i32 = arith.constant 0 : i32
    %c0_i32_0 = arith.constant 0 : i32
    %c0_i32_1 = arith.constant 0 : i32
    return %c0_i32, %c0_i32_0 : i32, i32
  }
  func.func @transform_3(%arg0: i32) -> (i32, i32) {
    %c0_i32 = arith.constant 0 : i32
    %c0_i32_0 = arith.constant 0 : i32
    return %arg0, %c0_i32 : i32, i32
  }
}

module attributes {stable_mosaic.version = 11 : i64} {
  func.func @_mm_tanh_kernel(%arg0: i32, %arg1: memref<512x72xbf16, #tpu.memory_space<vmem>>, %arg2: memref<72x12xbf16, #tpu.memory_space<vmem>>, %arg3: memref<512x12xf32, #tpu.memory_space<vmem>>) attributes {dimension_semantics = [#tpu.dimension_semantics<parallel>], iteration_bounds = array<i64: 4>, scalar_prefetch = 0 : i64, scratch_operands = 0 : i64, tpu.core_type = #tpu.core_type<tc>, window_params = [{transform_indices = @transform_0, window_bounds = array<i64: 512, 72>}, {pipeline_mode = #tpu.pipeline_mode<synchronous>, transform_indices = @transform_1, window_bounds = array<i64: 72, 12>}, {transform_indices = @transform_2, window_bounds = array<i64: 512, 12>}]} {
    %c0 = arith.constant 0 : index
    %c0_0 = arith.constant 0 : index
    %0 = vector.load %arg1[%c0, %c0_0] : memref<512x72xbf16, #tpu.memory_space<vmem>>, vector<512x72xbf16>
    %c0_1 = arith.constant 0 : index
    %c0_2 = arith.constant 0 : index
    %1 = vector.load %arg2[%c0_1, %c0_2] : memref<72x12xbf16, #tpu.memory_space<vmem>>, vector<72x12xbf16>
    %cst = arith.constant dense<0.000000e+00> : vector<512x12xf32>
    %2 = tpu.matmul %0, %1, %cst {dimension_numbers = #tpu.dot_dimension_numbers<[1], [0], [0], [1], [0, 0, 1, 1], [], []>} : vector<512x72xbf16>, vector<72x12xbf16>, vector<512x12xf32> -> vector<512x12xf32>
    %3 = math.tanh %2 : vector<512x12xf32>
    %c0_3 = arith.constant 0 : index
    %c0_4 = arith.constant 0 : index
    %4 = vector.load %arg3[%c0_3, %c0_4] : memref<512x12xf32, #tpu.memory_space<vmem>>, vector<512x12xf32>
    tpu.vector_store %arg3[%c0_3, %c0_4], %3 {strides = array<i32>} : memref<512x12xf32, #tpu.memory_space<vmem>>, vector<512x12xf32>,
    return
  }
  func.func @transform_0(%arg0: i32) -> (i32, i32) {
    %c0_i32 = arith.constant 0 : i32
    %c0_i32_0 = arith.constant 0 : i32
    return %arg0, %c0_i32 : i32, i32
  }
  func.func @transform_1(%arg0: i32) -> (i32, i32) {
    %c0_i32 = arith.constant 0 : i32
    %c0_i32_0 = arith.constant 0 : i32
    %c0_i32_1 = arith.constant 0 : i32
    return %c0_i32, %c0_i32_0 : i32, i32
  }
  func.func @transform_2(%arg0: i32) -> (i32, i32) {
    %c0_i32 = arith.constant 0 : i32
    %c0_i32_0 = arith.constant 0 : i32
    return %arg0, %c0_i32 : i32, i32
  }
}

</mosaic_0001>

<llo_original>
// kernel: tile.47
$region0: #{tile.47}
  #allocation0 [shape = 's32[1]{0}', space=sflag, size = 0x4, scoped, tag = 'scoped memory for tile.47']
  %s0 = inlined_call_operand.vmem [shape: f32[64], index: 0, kind: input, shape index: {}]
  %s1 = inlined_call_operand.vmem [shape: f32[16,64], index: 1, kind: output, shape index: {}]
  // Predicated region
  $region2: #{tile.47} parent=0 // pred_check
    _
  $region3: #{tile.47} parent=0 // pred_check_branch
    %3 = sbr.rel (0) target = $region5
  $region4: #{tile.47} parent=0 // pred_region
    _
  $region5: #{tile.47} parent=0 // pred_fallthru
    _
  %v4 = vld [vmem:[%s0] ss:$0 sm:$0xff]
  %5 = vst [vmem:[%s1] sm:$0xff] %v4
  %s6 = scalar_lea.vmem %s1, 8
  %7 = vst [vmem:[%s6] sm:$0xff] %v4

// kernel: tile.49
$region0: #{tile.49}
  %s0 = inlined_call_operand.vmem [shape: f32[16,64], index: 0, kind: input, shape index: {}]
  %s1 = inlined_call_operand.vmem [shape: f32[1,1024], index: 1, kind: output, shape index: {}]
  $region1: #{tile.49} parent=0
    #allocation0 [shape = 'u8[32768]{0}', space=vmem, size = 0x8000, scoped, tag = 'scoped mem for output reshape']
    %v2 = vld [vmem:[%s0] ss:$2 sm:$0xff]
    %vm3 = vcmask 523264
    %4 = vst.msk [vmem:[#allocation0] ss:$8 sm:$0xf] %vm3, %v2
    %5 = vst.msk [vmem:[#allocation0] ss:$8 sm:$0xf0] %vm3, %v2
    %s6 = scalar_lea.vmem %s0, 1
    %v7 = vld [vmem:[%s6] ss:$2 sm:$0xff]
    %8 = vrot.lane.b32.xlu0 %v7, 64
    %v9 = vpop.permute.xlu0 %8
    %vm10 = vcmask 1048064
    %11 = vst.msk [vmem:[#allocation0] ss:$8 sm:$0xf] %vm10, %v9
    %12 = vst.msk [vmem:[#allocation0] ss:$8 sm:$0xf0] %vm10, %v9
    %s14 = sshll.u32 1, 1
    %s15 = ssub.s32 %s14, 1
    %v17 = vld [vmem:[#allocation0] sm:%s15]
    %s18 = sshll.u32 1, 1
    %s19 = ssub.s32 %s18, 1
    %20 = vst [vmem:[%s1] sm:%s19] %v17
    %s21 = scalar_lea.vmem [#allocation0], 8
    %v22 = vld [vmem:[%s21] sm:%s15]
    %s23 = sshll.u32 1, 1
    %s24 = ssub.s32 %s23, 1
    %s25 = scalar_lea.vmem %s1, 1
    %26 = vst [vmem:[%s25] sm:%s24] %v22
    %s27 = scalar_lea.vmem [#allocation0], 16
    %v28 = vld [vmem:[%s27] sm:%s15]
    %s29 = sshll.u32 1, 1
    %s30 = ssub.s32 %s29, 1
    %s31 = smul.addr 1, 2
    %s32 = scalar_lea.vmem %s1, %s31
    %33 = vst [vmem:[%s32] sm:%s30] %v28
    %s34 = scalar_lea.vmem [#allocation0], 24
    %v35 = vld [vmem:[%s34] sm:%s15]
    %s36 = sshll.u32 1, 1
    %s37 = ssub.s32 %s36, 1
    %s38 = smul.addr 1, 3
    %s39 = scalar_lea.vmem %s1, %s38
    %40 = vst [vmem:[%s39] sm:%s37] %v35
    %s41 = scalar_lea.vmem [#allocation0], 32
    %v42 = vld [vmem:[%s41] sm:%s15]
    %s43 = sshll.u32 1, 1
    %s44 = ssub.s32 %s43, 1
    %s45 = smul.addr 1, 4
    %s46 = scalar_lea.vmem %s1, %s45
    %47 = vst [vmem:[%s46] sm:%s44] %v42
    %s48 = scalar_lea.vmem [#allocation0], 40
    %v49 = vld [vmem:[%s48] sm:%s15]
    %s50 = sshll.u32 1, 1
    %s51 = ssub.s32 %s50, 1
    %s52 = smul.addr 1, 5
    %s53 = scalar_lea.vmem %s1, %s52
    %54 = vst [vmem:[%s53] sm:%s51] %v49
    %s55 = scalar_lea.vmem [#allocation0], 48
    %v56 = vld [vmem:[%s55] sm:%s15]
    %s57 = sshll.u32 1, 1
    %s58 = ssub.s32 %s57, 1
    %s59 = smul.addr 1, 6
    %s60 = scalar_lea.vmem %s1, %s59
    %61 = vst [vmem:[%s60] sm:%s58] %v56
    %s62 = scalar_lea.vmem [#allocation0], 56
    %v63 = vld [vmem:[%s62] sm:%s15]
    %s64 = sshll.u32 1, 1
    %s65 = ssub.s32 %s64, 1
    %s66 = smul.addr 1, 7
    %s67 = scalar_lea.vmem %s1, %s66
    %68 = vst [vmem:[%s67] sm:%s65] %v63

// kernel: generator_forward.10
$region0: #{generator_forward.10}
  #allocation0 [shape = 'u32[]', space=smem, size = 0x4, offset = 0x4, fixed_abs, tag = 'smem constant byte address 0x4 - core index']
  #allocation1 [shape = 'u32[144,128]{1,0:T(1,128)}', space=vmem, size = 0x12000, scoped, tag = 'internal scratch']
  %s0 = inlined_call_operand.vmem [shape: bf16[16,1024], index: 0, kind: input, shape index: {}]
  %s1 = inlined_call_operand.vmem [shape: f32[1,1024], index: 1, kind: input, shape index: {}]
  %s2 = inlined_call_operand.vmem [shape: f32[1,1024], index: 2, kind: input, shape index: {}]
  %s3 = inlined_call_operand.vmem [shape: bf16[16,1024], index: 3, kind: output, shape index: {}]
  %s4 = sld [smem:[#allocation0]]
  $region22: #{generator_forward.10} parent=0
    _
  %s6 = ssub.s32 1, %s4
  %s7 = scalar_select 0, %s6, %s4
  // Predicated region
  $region2: #{generator_forward.10} parent=0 // pred_check
    _
  $region3: #{generator_forward.10} parent=0 // pred_check_branch
    %9 = sbr.rel (0) target = $region5
  $region4: #{generator_forward.10} parent=0 // pred_region
    _
  $region5: #{generator_forward.10} parent=0 // pred_fallthru
    _
  // Predicated region
  $region6: #{generator_forward.10} parent=0 // pred_check
    _
  $region7: #{generator_forward.10} parent=0 // pred_check_branch
    %11 = sbr.rel (0) target = $region9
  $region8: #{generator_forward.10} parent=0 // pred_region
    _
  $region9: #{generator_forward.10} parent=0 // pred_fallthru
    _
  // Predicated region
  $region10: #{generator_forward.10} parent=0 // pred_check
    _
  $region11: #{generator_forward.10} parent=0 // pred_check_branch
    %13 = sbr.rel (0) target = $region13
  $region12: #{generator_forward.10} parent=0 // pred_region
    _
  $region13: #{generator_forward.10} parent=0 // pred_fallthru
    _
  %v14 = vld [vmem:[%s0] sm:$0xff]
  %v15 = vld [vmem:[%s0 + $0x8] sm:$0xff]
  %v16 = vld [vmem:[%s0 + $0x10] sm:$0xff]
  %v17 = vld [vmem:[%s0 + $0x18] sm:$0xff]
  %v18 = vld [vmem:[%s0 + $0x20] sm:$0xff]
  %v19 = vld [vmem:[%s0 + $0x28] sm:$0xff]
  %v20 = vld [vmem:[%s0 + $0x30] sm:$0xff]
  %v21 = vld [vmem:[%s0 + $0x38] sm:$0xff]
  %v22 = vunpack.c.l.bf16 %v14
  %v23 = vunpack.c.h.bf16 %v14
  %v24 = vunpack.c.l.bf16 %v15
  %v25 = vunpack.c.h.bf16 %v15
  %v26 = vunpack.c.l.bf16 %v16
  %v27 = vunpack.c.h.bf16 %v16
  %v28 = vunpack.c.l.bf16 %v17
  %v29 = vunpack.c.h.bf16 %v17
  %v30 = vunpack.c.l.bf16 %v18
  %v31 = vunpack.c.h.bf16 %v18
  %v32 = vunpack.c.l.bf16 %v19
  %v33 = vunpack.c.h.bf16 %v19
  %v34 = vunpack.c.l.bf16 %v20
  %v35 = vunpack.c.h.bf16 %v20
  %v36 = vunpack.c.l.bf16 %v21
  %v37 = vunpack.c.h.bf16 %v21
  %v38 = vld [vmem:[%s1] sm:$0xff]
  %v40 = vlaneseq
  %v41 = vshrl.u32 %v40, 7
  %v42 = vsub.s32 0, %v41
  %v43 = vrot.slane %v38, %v42
  %v44 = vlaneseq
  %v45 = vshrl.u32 %v44, 7
  %v46 = vsub.s32 1, %v45
  %v47 = vrot.slane %v38, %v46
  %v48 = vlaneseq
  %v49 = vshrl.u32 %v48, 7
  %v50 = vsub.s32 2, %v49
  %v51 = vrot.slane %v38, %v50
  %v52 = vlaneseq
  %v53 = vshrl.u32 %v52, 7
  %v54 = vsub.s32 3, %v53
  %v55 = vrot.slane %v38, %v54
  %v56 = vlaneseq
  %v57 = vshrl.u32 %v56, 7
  %v58 = vsub.s32 4, %v57
  %v59 = vrot.slane %v38, %v58
  %v60 = vlaneseq
  %v61 = vshrl.u32 %v60, 7
  %v62 = vsub.s32 5, %v61
  %v63 = vrot.slane %v38, %v62
  %v64 = vlaneseq
  %v65 = vshrl.u32 %v64, 7
  %v66 = vsub.s32 6, %v65
  %v67 = vrot.slane %v38, %v66
  %v68 = vlaneseq
  %v69 = vshrl.u32 %v68, 7
  %v70 = vsub.s32 7, %v69
  %v71 = vrot.slane %v38, %v70
  %v80 = vmul.f32 %v22, %v43
  %v81 = vmul.f32 %v23, %v47
  %v82 = vmul.f32 %v24, %v51
  %v83 = vmul.f32 %v25, %v55
  %v84 = vmul.f32 %v26, %v59
  %v85 = vmul.f32 %v27, %v63
  %v86 = vmul.f32 %v28, %v67
  %v87 = vmul.f32 %v29, %v71
  %v88 = vmul.f32 %v30, %v43
  %v89 = vmul.f32 %v31, %v47
  %v90 = vmul.f32 %v32, %v51
  %v91 = vmul.f32 %v33, %v55
  %v92 = vmul.f32 %v34, %v59
  %v93 = vmul.f32 %v35, %v63
  %v94 = vmul.f32 %v36, %v67
  %v95 = vmul.f32 %v37, %v71
  %v96 = vld [vmem:[%s2] sm:$0xff]
  %v98 = vlaneseq
  %v99 = vshrl.u32 %v98, 7
  %v100 = vsub.s32 0, %v99
  %v101 = vrot.slane %v96, %v100
  %v102 = vlaneseq
  %v103 = vshrl.u32 %v102, 7
  %v104 = vsub.s32 1, %v103
  %v105 = vrot.slane %v96, %v104
  %v106 = vlaneseq
  %v107 = vshrl.u32 %v106, 7
  %v108 = vsub.s32 2, %v107
  %v109 = vrot.slane %v96, %v108
  %v110 = vlaneseq
  %v111 = vshrl.u32 %v110, 7
  %v112 = vsub.s32 3, %v111
  %v113 = vrot.slane %v96, %v112
  %v114 = vlaneseq
  %v115 = vshrl.u32 %v114, 7
  %v116 = vsub.s32 4, %v115
  %v117 = vrot.slane %v96, %v116
  %v118 = vlaneseq
  %v119 = vshrl.u32 %v118, 7
  %v120 = vsub.s32 5, %v119
  %v121 = vrot.slane %v96, %v120
  %v122 = vlaneseq
  %v123 = vshrl.u32 %v122, 7
  %v124 = vsub.s32 6, %v123
  %v125 = vrot.slane %v96, %v124
  %v126 = vlaneseq
  %v127 = vshrl.u32 %v126, 7
  %v128 = vsub.s32 7, %v127
  %v129 = vrot.slane %v96, %v128
  %v138 = vadd.f32 %v80, %v101
  %v139 = vadd.f32 %v81, %v105
  %v140 = vadd.f32 %v82, %v109
  %v141 = vadd.f32 %v83, %v113
  %v142 = vadd.f32 %v84, %v117
  %v143 = vadd.f32 %v85, %v121
  %v144 = vadd.f32 %v86, %v125
  %v145 = vadd.f32 %v87, %v129
  %v146 = vadd.f32 %v88, %v101
  %v147 = vadd.f32 %v89, %v105
  %v148 = vadd.f32 %v90, %v109
  %v149 = vadd.f32 %v91, %v113
  %v150 = vadd.f32 %v92, %v117
  %v151 = vadd.f32 %v93, %v121
  %v152 = vadd.f32 %v94, %v125
  %v153 = vadd.f32 %v95, %v129
  %v154 = vmax.f32 %v138, 0.0
  %v155 = vmax.f32 %v139, 0.0
  %v156 = vmax.f32 %v140, 0.0
  %v157 = vmax.f32 %v141, 0.0
  %v158 = vmax.f32 %v142, 0.0
  %v159 = vmax.f32 %v143, 0.0
  %v160 = vmax.f32 %v144, 0.0
  %v161 = vmax.f32 %v145, 0.0
  %v162 = vmax.f32 %v146, 0.0
  %v163 = vmax.f32 %v147, 0.0
  %v164 = vmax.f32 %v148, 0.0
  %v165 = vmax.f32 %v149, 0.0
  %v166 = vmax.f32 %v150, 0.0
  %v167 = vmax.f32 %v151, 0.0
  %v168 = vmax.f32 %v152, 0.0
  %v169 = vmax.f32 %v153, 0.0
  %v170 = vpack.c.bf16 %v162, %v154
  %v171 = vpack.c.bf16 %v163, %v155
  %v172 = vpack.c.bf16 %v164, %v156
  %v173 = vpack.c.bf16 %v165, %v157
  %v174 = vpack.c.bf16 %v166, %v158
  %v175 = vpack.c.bf16 %v167, %v159
  %v176 = vpack.c.bf16 %v168, %v160
  %v177 = vpack.c.bf16 %v169, %v161
  %v186 = vunpack.c.l.b16 %v170
  %v187 = vunpack.c.l.b16 %v171
  %v188 = vunpack.c.l.b16 %v172
  %v189 = vunpack.c.l.b16 %v173
  %v190 = vunpack.c.l.b16 %v174
  %v191 = vunpack.c.l.b16 %v175
  %v192 = vunpack.c.l.b16 %v176
  %v193 = vunpack.c.l.b16 %v177
  %v194 = vunpack.c.h.b16 %v170
  %v195 = vunpack.c.h.b16 %v171
  %v196 = vunpack.c.h.b16 %v172
  %v197 = vunpack.c.h.b16 %v173
  %v198 = vunpack.c.h.b16 %v174
  %v199 = vunpack.c.h.b16 %v175
  %v200 = vunpack.c.h.b16 %v176
  %v201 = vunpack.c.h.b16 %v177
  %v202 = vpack.c.b16 %v187, %v186
  %v203 = vpack.c.b16 %v189, %v188
  %v204 = vpack.c.b16 %v191, %v190
  %v205 = vpack.c.b16 %v193, %v192
  %v206 = vpack.c.b16 %v195, %v194
  %v207 = vpack.c.b16 %v197, %v196
  %v208 = vpack.c.b16 %v199, %v198
  %v209 = vpack.c.b16 %v201, %v200
  %218 = vst [vmem:[%s3] sm:$0xff] %v202
  %219 = vst [vmem:[%s3 + $0x8] sm:$0xff] %v203
  %220 = vst [vmem:[%s3 + $0x10] sm:$0xff] %v204
  %221 = vst [vmem:[%s3 + $0x18] sm:$0xff] %v205
  %222 = vst [vmem:[%s3 + $0x20] sm:$0xff] %v206
  %223 = vst [vmem:[%s3 + $0x28] sm:$0xff] %v207
  %224 = vst [vmem:[%s3 + $0x30] sm:$0xff] %v208
  %225 = vst [vmem:[%s3 + $0x38] sm:$0xff] %v209
  // Predicated region
  $region14: #{generator_forward.10} parent=0 // pred_check
    _
  $region15: #{generator_forward.10} parent=0 // pred_check_branch
    %227 = sbr.rel (0) target = $region17
  $region16: #{generator_forward.10} parent=0 // pred_region
    _
  $region17: #{generator_forward.10} parent=0 // pred_fallthru
    _
  // Predicated region
  $region18: #{generator_forward.10} parent=0 // pred_check
    _
  $region19: #{generator_forward.10} parent=0 // pred_check_branch
    %229 = sbr.rel (0) target = $region21
  $region20: #{generator_forward.10} parent=0 // pred_region
    _
  $region21: #{generator_forward.10} parent=0 // pred_fallthru
    _

// kernel: generator_forward.9
$region0: #{generator_forward.9}
  #allocation0 [shape = 'u32[]', space=smem, size = 0x4, offset = 0x4, fixed_abs, tag = 'smem constant byte address 0x4 - core index']
  #allocation1 [shape = 'u32[144,128]{1,0:T(1,128)}', space=vmem, size = 0x12000, scoped, tag = 'internal scratch']
  %s0 = inlined_call_operand.vmem [shape: bf16[16,8], index: 0, kind: input, shape index: {}]
  %s1 = inlined_call_operand.hbm [shape: bf16[8,1024], index: 1, kind: input, shape index: {}]
  %s2 = inlined_call_operand.vmem [shape: bf16[16,1024], index: 2, kind: output, shape index: {0}]
  %s3 = inlined_call_operand.vmem [shape: f32[8,1024], index: 3, kind: output, shape index: {1}]
  %s4 = inlined_call_operand.vmem [shape: f32[8,1024], index: 4, kind: output, shape index: {2}]
  %5 = xla_tuple %s2, %s3, %s4
  %s6 = sld [smem:[#allocation0]]
  $region38: #{generator_forward.9} parent=0
    _
  %s8 = ssub.s32 1, %s6
  %s9 = scalar_select 0, %s8, %s6
  $region1: #{generator_forward.9} parent=0
    #allocation2 [shape = 'u8[16384]{0}', space=vmem, size = 0x4000, scoped, tag = 'input window, operand 1, single buffered']
    #allocation3 [shape = 's32[1]{0}', space=sflag, size = 0x4, scoped, tag = 'scoped memory for generator_forward.9']
    %10 = vsyncpa [#allocation3], 0
    // Predicated region
    $region2: #{generator_forward.9} parent=1 // pred_check
      _
    $region3: #{generator_forward.9} parent=1 // pred_check_branch
      %12 = sbr.rel (0) target = $region5
    $region4: #{generator_forward.9} parent=1 // pred_region
      _
    $region5: #{generator_forward.9} parent=1 // pred_fallthru
      _
    // Predicated region
    $region6: #{generator_forward.9} parent=1 // pred_check
      _
    $region7: #{generator_forward.9} parent=1 // pred_check_branch
      %14 = sbr.rel (0) target = $region9
    $region8: #{generator_forward.9} parent=1 // pred_region
      %s16 = ssub.s32 512, 512
      %17 = vsyncadd [#allocation3], %s16
      %s19 = sshll.u32 [#allocation2], 4
      %s20 = int_to_ptr.vmem [resolvable:$true] %s19
      %22 = dma.hbm_to_vmem [thread:$0]  %s1, 512, %s20, [#allocation3]
    $region9: #{generator_forward.9} parent=1 // pred_fallthru
      _
    // Predicated region
    $region10: #{generator_forward.9} parent=1 // pred_check
      _
    $region11: #{generator_forward.9} parent=1 // pred_check_branch
      %24 = sbr.rel (0) target = $region13
    $region12: #{generator_forward.9} parent=1 // pred_region
      %25 = dma.done [#allocation3], 512
    $region13: #{generator_forward.9} parent=1 // pred_fallthru
      _
    %v27 = vld [vmem:[%s0] sm:$0xf]
    %v28 = vld [vmem:[%s0 + $0x4] sm:$0xf]
    %v29 = vld [vmem:[#allocation2] sm:$0xff]
    %v30 = vld [vmem:[#allocation2 + $0x8] sm:$0xff]
    %v31 = vld [vmem:[#allocation2 + $0x10] sm:$0xff]
    %v32 = vld [vmem:[#allocation2 + $0x18] sm:$0xff]
    %v35 = vunpack.c.l.b16 %v27
    %v36 = vunpack.c.l.b16 %v28
    %v37 = vpack.c.b16 %v36, %v35
    %v42 = vunpack.c.l.b16 %v29
    %v43 = vunpack.c.h.b16 %v29
    %v44 = vunpack.c.l.b16 %v30
    %v45 = vunpack.c.h.b16 %v30
    %v46 = vunpack.c.l.b16 %v31
    %v47 = vunpack.c.h.b16 %v31
    %v48 = vunpack.c.l.b16 %v32
    %v49 = vunpack.c.h.b16 %v32
    %v50 = vpack.c.b16 %v42, %v42
    %v51 = vpack.c.b16 %v43, %v43
    %v52 = vpack.c.b16 %v44, %v44
    %v53 = vpack.c.b16 %v45, %v45
    %v54 = vpack.c.b16 %v46, %v46
    %v55 = vpack.c.b16 %v47, %v47
    %v56 = vpack.c.b16 %v48, %v48
    %v57 = vpack.c.b16 %v49, %v49
    %vm58 = vcmask 64512
    %v60 = vsel %vm58, %v37, 0
    %vm62 = vcmask 1043456
    %v64 = vsel %vm62, %v50, 0
    %v67 = vsel %vm62, %v51, 0
    %v70 = vsel %vm62, %v52, 0
    %v73 = vsel %vm62, %v53, 0
    %v76 = vsel %vm62, %v54, 0
    %v79 = vsel %vm62, %v55, 0
    %v82 = vsel %vm62, %v56, 0
    %v85 = vsel %vm62, %v57, 0
    %87 = vmatprep.subr.bf16.mxu0 0
    %88 = vmatpush1.bf16.msra.mxu0 0
    %89 = vmatprep.subr.bf16.mxu0 0
    %90 = vmatpush1.bf16.msra.mxu0 0
    %91 = vmatprep.subr.bf16.mxu0 0
    %92 = vmatpush1.bf16.msra.mxu0 0
    %93 = vmatprep.subr.bf16.mxu0 0
    %94 = vmatpush1.bf16.msra.mxu0 0
    %95 = vmatprep.subr.bf16.mxu0 0
    %96 = vmatpush1.bf16.msra.mxu0 0
    %97 = vmatprep.subr.bf16.mxu0 0
    %98 = vmatpush1.bf16.msra.mxu0 0
    %99 = vmatprep.subr.bf16.mxu0 0
    %100 = vmatpush1.bf16.msra.mxu0 0
    %101 = vmatprep.subr.bf16.mxu0 %v67
    %102 = vmatpush1.bf16.msra.mxu0 %v64
    %103 = vmatprep.subr.bf16.mxu0 0
    %104 = vmatpush2.bf16.msra.mxu0 0
    %105 = vmatprep.subr.bf16.mxu0 0
    %106 = vmatpush2.bf16.msra.mxu0 0
    %107 = vmatprep.subr.bf16.mxu0 0
    %108 = vmatpush2.bf16.msra.mxu0 0
    %109 = vmatprep.subr.bf16.mxu0 0
    %110 = vmatpush2.bf16.msra.mxu0 0
    %111 = vmatprep.subr.bf16.mxu0 0
    %112 = vmatpush2.bf16.msra.mxu0 0
    %113 = vmatprep.subr.bf16.mxu0 0
    %114 = vmatpush2.bf16.msra.mxu0 0
    %115 = vmatprep.subr.bf16.mxu0 0
    %116 = vmatpush2.bf16.msra.mxu0 0
    %117 = vmatprep.subr.bf16.mxu0 0
    %118 = vmatpush2.bf16.msra.mxu0 0
    %119 = vmatprep.mubr.bf16.mxu0 0
    %120 = vmatmul.mubr.bf16.gmra.mxu0 %v60
    %v121 = vpop.f32.mrf.mxu0
    %v122 = vadd.f32 0.0, %v121
    %v123 = vpop.f32.mrf.mxu0
    %v124 = vadd.f32 0.0, %v123
    %v125 = vpop.f32.mrf.mxu0
    %v126 = vadd.f32 0.0, %v125
    %v127 = vpop.f32.mrf.mxu0
    %v128 = vadd.f32 0.0, %v127
    %129 = vdwg.mxu0
    %130 = vmatprep.subr.bf16.mxu0 0
    %131 = vmatpush1.bf16.msra.mxu0 0
    %132 = vmatprep.subr.bf16.mxu0 0
    %133 = vmatpush1.bf16.msra.mxu0 0
    %134 = vmatprep.subr.bf16.mxu0 0
    %135 = vmatpush1.bf16.msra.mxu0 0
    %136 = vmatprep.subr.bf16.mxu0 0
    %137 = vmatpush1.bf16.msra.mxu0 0
    %138 = vmatprep.subr.bf16.mxu0 0
    %139 = vmatpush1.bf16.msra.mxu0 0
    %140 = vmatprep.subr.bf16.mxu0 0
    %141 = vmatpush1.bf16.msra.mxu0 0
    %142 = vmatprep.subr.bf16.mxu0 0
    %143 = vmatpush1.bf16.msra.mxu0 0
    %144 = vmatprep.subr.bf16.mxu0 %v73
    %145 = vmatpush1.bf16.msra.mxu0 %v70
    %146 = vmatprep.subr.bf16.mxu0 0
    %147 = vmatpush2.bf16.msra.mxu0 0
    %148 = vmatprep.subr.bf16.mxu0 0
    %149 = vmatpush2.bf16.msra.mxu0 0
    %150 = vmatprep.subr.bf16.mxu0 0
    %151 = vmatpush2.bf16.msra.mxu0 0
    %152 = vmatprep.subr.bf16.mxu0 0
    %153 = vmatpush2.bf16.msra.mxu0 0
    %154 = vmatprep.subr.bf16.mxu0 0
    %155 = vmatpush2.bf16.msra.mxu0 0
    %156 = vmatprep.subr.bf16.mxu0 0
    %157 = vmatpush2.bf16.msra.mxu0 0
    %158 = vmatprep.subr.bf16.mxu0 0
    %159 = vmatpush2.bf16.msra.mxu0 0
    %160 = vmatprep.subr.bf16.mxu0 0
    %161 = vmatpush2.bf16.msra.mxu0 0
    %162 = vmatprep.mubr.bf16.mxu0 0
    %163 = vmatmul.mubr.bf16.gmra.mxu0 %v60
    %v164 = vpop.f32.mrf.mxu0
    %v165 = vadd.f32 0.0, %v164
    %v166 = vpop.f32.mrf.mxu0
    %v167 = vadd.f32 0.0, %v166
    %v168 = vpop.f32.mrf.mxu0
    %v169 = vadd.f32 0.0, %v168
    %v170 = vpop.f32.mrf.mxu0
    %v171 = vadd.f32 0.0, %v170
    %172 = vdwg.mxu0
    %173 = vmatprep.subr.bf16.mxu0 0
    %174 = vmatpush1.bf16.msra.mxu0 0
    %175 = vmatprep.subr.bf16.mxu0 0
    %176 = vmatpush1.bf16.msra.mxu0 0
    %177 = vmatprep.subr.bf16.mxu0 0
    %178 = vmatpush1.bf16.msra.mxu0 0
    %179 = vmatprep.subr.bf16.mxu0 0
    %180 = vmatpush1.bf16.msra.mxu0 0
    %181 = vmatprep.subr.bf16.mxu0 0
    %182 = vmatpush1.bf16.msra.mxu0 0
    %183 = vmatprep.subr.bf16.mxu0 0
    %184 = vmatpush1.bf16.msra.mxu0 0
    %185 = vmatprep.subr.bf16.mxu0 0
    %186 = vmatpush1.bf16.msra.mxu0 0
    %187 = vmatprep.subr.bf16.mxu0 %v79
    %188 = vmatpush1.bf16.msra.mxu0 %v76
    %189 = vmatprep.subr.bf16.mxu0 0
    %190 = vmatpush2.bf16.msra.mxu0 0
    %191 = vmatprep.subr.bf16.mxu0 0
    %192 = vmatpush2.bf16.msra.mxu0 0
    %193 = vmatprep.subr.bf16.mxu0 0
    %194 = vmatpush2.bf16.msra.mxu0 0
    %195 = vmatprep.subr.bf16.mxu0 0
    %196 = vmatpush2.bf16.msra.mxu0 0
    %197 = vmatprep.subr.bf16.mxu0 0
    %198 = vmatpush2.bf16.msra.mxu0 0
    %199 = vmatprep.subr.bf16.mxu0 0
    %200 = vmatpush2.bf16.msra.mxu0 0
    %201 = vmatprep.subr.bf16.mxu0 0
    %202 = vmatpush2.bf16.msra.mxu0 0
    %203 = vmatprep.subr.bf16.mxu0 0
    %204 = vmatpush2.bf16.msra.mxu0 0
    %205 = vmatprep.mubr.bf16.mxu0 0
    %206 = vmatmul.mubr.bf16.gmra.mxu0 %v60
    %v207 = vpop.f32.mrf.mxu0
    %v208 = vadd.f32 0.0, %v207
    %v209 = vpop.f32.mrf.mxu0
    %v210 = vadd.f32 0.0, %v209
    %v211 = vpop.f32.mrf.mxu0
    %v212 = vadd.f32 0.0, %v211
    %v213 = vpop.f32.mrf.mxu0
    %v214 = vadd.f32 0.0, %v213
    %215 = vdwg.mxu0
    %216 = vmatprep.subr.bf16.mxu0 0
    %217 = vmatpush1.bf16.msra.mxu0 0
    %218 = vmatprep.subr.bf16.mxu0 0
    %219 = vmatpush1.bf16.msra.mxu0 0
    %220 = vmatprep.subr.bf16.mxu0 0
    %221 = vmatpush1.bf16.msra.mxu0 0
    %222 = vmatprep.subr.bf16.mxu0 0
    %223 = vmatpush1.bf16.msra.mxu0 0
    %224 = vmatprep.subr.bf16.mxu0 0
    %225 = vmatpush1.bf16.msra.mxu0 0
    %226 = vmatprep.subr.bf16.mxu0 0
    %227 = vmatpush1.bf16.msra.mxu0 0
    %228 = vmatprep.subr.bf16.mxu0 0
    %229 = vmatpush1.bf16.msra.mxu0 0
    %230 = vmatprep.subr.bf16.mxu0 %v85
    %231 = vmatpush1.bf16.msra.mxu0 %v82
    %232 = vmatprep.subr.bf16.mxu0 0
    %233 = vmatpush2.bf16.msra.mxu0 0
    %234 = vmatprep.subr.bf16.mxu0 0
    %235 = vmatpush2.bf16.msra.mxu0 0
    %236 = vmatprep.subr.bf16.mxu0 0
    %237 = vmatpush2.bf16.msra.mxu0 0
    %238 = vmatprep.subr.bf16.mxu0 0
    %239 = vmatpush2.bf16.msra.mxu0 0
    %240 = vmatprep.subr.bf16.mxu0 0
    %241 = vmatpush2.bf16.msra.mxu0 0
    %242 = vmatprep.subr.bf16.mxu0 0
    %243 = vmatpush2.bf16.msra.mxu0 0
    %244 = vmatprep.subr.bf16.mxu0 0
    %245 = vmatpush2.bf16.msra.mxu0 0
    %246 = vmatprep.subr.bf16.mxu0 0
    %247 = vmatpush2.bf16.msra.mxu0 0
    %248 = vmatprep.mubr.bf16.mxu0 0
    %249 = vmatmul.mubr.bf16.gmra.mxu0 %v60
    %v250 = vpop.f32.mrf.mxu0
    %v251 = vadd.f32 0.0, %v250
    %v252 = vpop.f32.mrf.mxu0
    %v253 = vadd.f32 0.0, %v252
    %v254 = vpop.f32.mrf.mxu0
    %v255 = vadd.f32 0.0, %v254
    %v256 = vpop.f32.mrf.mxu0
    %v257 = vadd.f32 0.0, %v256
    %258 = vdwg.mxu0
    %v259 = vpack.c.bf16 %v126, %v122
    %v260 = vpack.c.bf16 %v128, %v124
    %v261 = vpack.c.bf16 %v169, %v165
    %v262 = vpack.c.bf16 %v171, %v167
    %v263 = vpack.c.bf16 %v212, %v208
    %v264 = vpack.c.bf16 %v214, %v210
    %v265 = vpack.c.bf16 %v255, %v251
    %v266 = vpack.c.bf16 %v257, %v253
    %v275 = vunpack.c.l.b16 %v259
    %v276 = vunpack.c.l.b16 %v260
    %v277 = vunpack.c.l.b16 %v261
    %v278 = vunpack.c.l.b16 %v262
    %v279 = vunpack.c.l.b16 %v263
    %v280 = vunpack.c.l.b16 %v264
    %v281 = vunpack.c.l.b16 %v265
    %v282 = vunpack.c.l.b16 %v266
    %v283 = vunpack.c.h.b16 %v259
    %v284 = vunpack.c.h.b16 %v260
    %v285 = vunpack.c.h.b16 %v261
    %v286 = vunpack.c.h.b16 %v262
    %v287 = vunpack.c.h.b16 %v263
    %v288 = vunpack.c.h.b16 %v264
    %v289 = vunpack.c.h.b16 %v265
    %v290 = vunpack.c.h.b16 %v266
    %v291 = vpack.c.b16 %v276, %v275
    %v292 = vpack.c.b16 %v278, %v277
    %v293 = vpack.c.b16 %v280, %v279
    %v294 = vpack.c.b16 %v282, %v281
    %v295 = vpack.c.b16 %v284, %v283
    %v296 = vpack.c.b16 %v286, %v285
    %v297 = vpack.c.b16 %v288, %v287
    %v298 = vpack.c.b16 %v290, %v289
    %307 = vst [vmem:[%s2] sm:$0xff] %v291
    %308 = vst [vmem:[%s2 + $0x8] sm:$0xff] %v292
    %309 = vst [vmem:[%s2 + $0x10] sm:$0xff] %v293
    %310 = vst [vmem:[%s2 + $0x18] sm:$0xff] %v294
    %311 = vst [vmem:[%s2 + $0x20] sm:$0xff] %v295
    %312 = vst [vmem:[%s2 + $0x28] sm:$0xff] %v296
    %313 = vst [vmem:[%s2 + $0x30] sm:$0xff] %v297
    %314 = vst [vmem:[%s2 + $0x38] sm:$0xff] %v298
    %v315 = vadd.f32 %v122, %v126
    %v316 = vrot.slane %v315, 4
    %v317 = vadd.f32 %v315, %v316
    %v318 = vrot.slane %v317, 2
    %v319 = vadd.f32 %v317, %v318
    %v320 = vrot.slane %v319, 1
    %v321 = vadd.f32 %v319, %v320
    %v322 = vadd.f32 %v124, %v128
    %v323 = vrot.slane %v322, 4
    %v324 = vadd.f32 %v322, %v323
    %v325 = vrot.slane %v324, 2
    %v326 = vadd.f32 %v324, %v325
    %v327 = vrot.slane %v326, 1
    %v328 = vadd.f32 %v326, %v327
    %v329 = vadd.f32 %v165, %v169
    %v330 = vrot.slane %v329, 4
    %v331 = vadd.f32 %v329, %v330
    %v332 = vrot.slane %v331, 2
    %v333 = vadd.f32 %v331, %v332
    %v334 = vrot.slane %v333, 1
    %v335 = vadd.f32 %v333, %v334
    %v336 = vadd.f32 %v167, %v171
    %v337 = vrot.slane %v336, 4
    %v338 = vadd.f32 %v336, %v337
    %v339 = vrot.slane %v338, 2
    %v340 = vadd.f32 %v338, %v339
    %v341 = vrot.slane %v340, 1
    %v342 = vadd.f32 %v340, %v341
    %v343 = vadd.f32 %v208, %v212
    %v344 = vrot.slane %v343, 4
    %v345 = vadd.f32 %v343, %v344
    %v346 = vrot.slane %v345, 2
    %v347 = vadd.f32 %v345, %v346
    %v348 = vrot.slane %v347, 1
    %v349 = vadd.f32 %v347, %v348
    %v350 = vadd.f32 %v210, %v214
    %v351 = vrot.slane %v350, 4
    %v352 = vadd.f32 %v350, %v351
    %v353 = vrot.slane %v352, 2
    %v354 = vadd.f32 %v352, %v353
    %v355 = vrot.slane %v354, 1
    %v356 = vadd.f32 %v354, %v355
    %v357 = vadd.f32 %v251, %v255
    %v358 = vrot.slane %v357, 4
    %v359 = vadd.f32 %v357, %v358
    %v360 = vrot.slane %v359, 2
    %v361 = vadd.f32 %v359, %v360
    %v362 = vrot.slane %v361, 1
    %v363 = vadd.f32 %v361, %v362
    %v364 = vadd.f32 %v253, %v257
    %v365 = vrot.slane %v364, 4
    %v366 = vadd.f32 %v364, %v365
    %v367 = vrot.slane %v366, 2
    %v368 = vadd.f32 %v366, %v367
    %v369 = vrot.slane %v368, 1
    %v370 = vadd.f32 %v368, %v369
    %371 = vst [vmem:[%s3] sm:$0xff] %v321
    %372 = vst [vmem:[%s3 + $0x8] sm:$0xff] %v328
    %373 = vst [vmem:[%s3 + $0x10] sm:$0xff] %v335
    %374 = vst [vmem:[%s3 + $0x18] sm:$0xff] %v342
    %375 = vst [vmem:[%s3 + $0x20] sm:$0xff] %v349
    %376 = vst [vmem:[%s3 + $0x28] sm:$0xff] %v356
    %377 = vst [vmem:[%s3 + $0x30] sm:$0xff] %v363
    %378 = vst [vmem:[%s3 + $0x38] sm:$0xff] %v370
    %v379 = vmul.f32 %v122, %v122
    %v380 = vmul.f32 %v124, %v124
    %v381 = vmul.f32 %v165, %v165
    %v382 = vmul.f32 %v167, %v167
    %v383 = vmul.f32 %v208, %v208
    %v384 = vmul.f32 %v210, %v210
    %v385 = vmul.f32 %v251, %v251
    %v386 = vmul.f32 %v253, %v253
    %v387 = vmul.f32 %v126, %v126
    %v388 = vmul.f32 %v128, %v128
    %v389 = vmul.f32 %v169, %v169
    %v390 = vmul.f32 %v171, %v171
    %v391 = vmul.f32 %v212, %v212
    %v392 = vmul.f32 %v214, %v214
    %v393 = vmul.f32 %v255, %v255
    %v394 = vmul.f32 %v257, %v257
    %v395 = vadd.f32 %v379, %v387
    %v396 = vrot.slane %v395, 4
    %v397 = vadd.f32 %v395, %v396
    %v398 = vrot.slane %v397, 2
    %v399 = vadd.f32 %v397, %v398
    %v400 = vrot.slane %v399, 1
    %v401 = vadd.f32 %v399, %v400
    %v402 = vadd.f32 %v380, %v388
    %v403 = vrot.slane %v402, 4
    %v404 = vadd.f32 %v402, %v403
    %v405 = vrot.slane %v404, 2
    %v406 = vadd.f32 %v404, %v405
    %v407 = vrot.slane %v406, 1
    %v408 = vadd.f32 %v406, %v407
    %v409 = vadd.f32 %v381, %v389
    %v410 = vrot.slane %v409, 4
    %v411 = vadd.f32 %v409, %v410
    %v412 = vrot.slane %v411, 2
    %v413 = vadd.f32 %v411, %v412
    %v414 = vrot.slane %v413, 1
    %v415 = vadd.f32 %v413, %v414
    %v416 = vadd.f32 %v382, %v390
    %v417 = vrot.slane %v416, 4
    %v418 = vadd.f32 %v416, %v417
    %v419 = vrot.slane %v418, 2
    %v420 = vadd.f32 %v418, %v419
    %v421 = vrot.slane %v420, 1
    %v422 = vadd.f32 %v420, %v421
    %v423 = vadd.f32 %v383, %v391
    %v424 = vrot.slane %v423, 4
    %v425 = vadd.f32 %v423, %v424
    %v426 = vrot.slane %v425, 2
    %v427 = vadd.f32 %v425, %v426
    %v428 = vrot.slane %v427, 1
    %v429 = vadd.f32 %v427, %v428
    %v430 = vadd.f32 %v384, %v392
    %v431 = vrot.slane %v430, 4
    %v432 = vadd.f32 %v430, %v431
    %v433 = vrot.slane %v432, 2
    %v434 = vadd.f32 %v432, %v433
    %v435 = vrot.slane %v434, 1
    %v436 = vadd.f32 %v434, %v435
    %v437 = vadd.f32 %v385, %v393
    %v438 = vrot.slane %v437, 4
    %v439 = vadd.f32 %v437, %v438
    %v440 = vrot.slane %v439, 2
    %v441 = vadd.f32 %v439, %v440
    %v442 = vrot.slane %v441, 1
    %v443 = vadd.f32 %v441, %v442
    %v444 = vadd.f32 %v386, %v394
    %v445 = vrot.slane %v444, 4
    %v446 = vadd.f32 %v444, %v445
    %v447 = vrot.slane %v446, 2
    %v448 = vadd.f32 %v446, %v447
    %v449 = vrot.slane %v448, 1
    %v450 = vadd.f32 %v448, %v449
    %451 = vst [vmem:[%s4] sm:$0xff] %v401
    %452 = vst [vmem:[%s4 + $0x8] sm:$0xff] %v408
    %453 = vst [vmem:[%s4 + $0x10] sm:$0xff] %v415
    %454 = vst [vmem:[%s4 + $0x18] sm:$0xff] %v422
    %455 = vst [vmem:[%s4 + $0x20] sm:$0xff] %v429
    %456 = vst [vmem:[%s4 + $0x28] sm:$0xff] %v436
    %457 = vst [vmem:[%s4 + $0x30] sm:$0xff] %v443
    %458 = vst [vmem:[%s4 + $0x38] sm:$0xff] %v450
    // Predicated region
    $region14: #{generator_forward.9} parent=1 // pred_check
      _
    $region15: #{generator_forward.9} parent=1 // pred_check_branch
      %460 = sbr.rel (0) target = $region17
    $region16: #{generator_forward.9} parent=1 // pred_region
      _
    $region17: #{generator_forward.9} parent=1 // pred_fallthru
      _
    // Predicated region
    $region18: #{generator_forward.9} parent=1 // pred_check
      _
    $region19: #{generator_forward.9} parent=1 // pred_check_branch
      %462 = sbr.rel (0) target = $region21
    $region20: #{generator_forward.9} parent=1 // pred_region
      _
    $region21: #{generator_forward.9} parent=1 // pred_fallthru
      _
    // Predicated region
    $region22: #{generator_forward.9} parent=1 // pred_check
      _
    $region23: #{generator_forward.9} parent=1 // pred_check_branch
      %464 = sbr.rel (0) target = $region25
    $region24: #{generator_forward.9} parent=1 // pred_region
      _
    $region25: #{generator_forward.9} parent=1 // pred_fallthru
      _
    // Predicated region
    $region26: #{generator_forward.9} parent=1 // pred_check
      _
    $region27: #{generator_forward.9} parent=1 // pred_check_branch
      %466 = sbr.rel (0) target = $region29
    $region28: #{generator_forward.9} parent=1 // pred_region
      _
    $region29: #{generator_forward.9} parent=1 // pred_fallthru
      _
    // Predicated region
    $region30: #{generator_forward.9} parent=1 // pred_check
      _
    $region31: #{generator_forward.9} parent=1 // pred_check_branch
      %468 = sbr.rel (0) target = $region33
    $region32: #{generator_forward.9} parent=1 // pred_region
      _
    $region33: #{generator_forward.9} parent=1 // pred_fallthru
      _
    // Predicated region
    $region34: #{generator_forward.9} parent=1 // pred_check
      _
    $region35: #{generator_forward.9} parent=1 // pred_check_branch
      %470 = sbr.rel (0) target = $region37
    $region36: #{generator_forward.9} parent=1 // pred_region
      _
    $region37: #{generator_forward.9} parent=1 // pred_fallthru
      _
    %471 = vsyncpa [#allocation3], 1

// kernel: tile.57
$region0: #{tile.57}
  #allocation0 [shape = 's32[1]{0}', space=sflag, size = 0x4, scoped, tag = 'scoped memory for tile.57']
  %s0 = inlined_call_operand.vmem [shape: f32[32], index: 0, kind: input, shape index: {}]
  %s1 = inlined_call_operand.vmem [shape: f32[4,32], index: 1, kind: output, shape index: {}]
  // Predicated region
  $region2: #{tile.57} parent=0 // pred_check
    _
  $region3: #{tile.57} parent=0 // pred_check_branch
    %3 = sbr.rel (0) target = $region5
  $region4: #{tile.57} parent=0 // pred_region
    _
  $region5: #{tile.57} parent=0 // pred_fallthru
    _
  %v4 = vld [vmem:[%s0] ss:$0 sm:$0xff]
  %5 = vst [vmem:[%s1] sm:$0xf] %v4

// kernel: tile.59
$region0: #{tile.59}
  %s0 = inlined_call_operand.vmem [shape: f32[4,32], index: 0, kind: input, shape index: {}]
  %s1 = inlined_call_operand.vmem [shape: f32[1,128], index: 1, kind: output, shape index: {}]
  $region1: #{tile.59} parent=0
    #allocation0 [shape = 'u8[4096]{0}', space=vmem, size = 0x1000, scoped, tag = 'scoped mem for output reshape']
    #allocation1 [shape = 'u8[4096]{0}', space=vmem, size = 0x1000, scoped, tag = 'scoped mem for input reshape']
    %s3 = sshll.u32 1, 4
    %s4 = ssub.s32 %s3, 1
    %v5 = vld [vmem:[%s0] sm:%s4]
    %6 = vst [vmem:[#allocation1] sm:%s4] %v5
    %v7 = vld [vmem:[#allocation1] sm:$0x1]
    %vm8 = vcmask 261120
    %9 = vst.msk [vmem:[#allocation0] sm:$0x1] %vm8, %v7
    %s10 = scalar_lea.vmem [#allocation1], 3
    %v11 = vld [vmem:[%s10] sm:$0x1]
    %12 = vrot.lane.b32.xlu0 %v11, 96
    %v13 = vpop.permute.xlu0 %12
    %vm14 = vcmask 1048320
    %15 = vst.msk [vmem:[#allocation0] sm:$0x1] %vm14, %v13
    %s16 = scalar_lea.vmem [#allocation1], 2
    %v17 = vld [vmem:[%s16] sm:$0x1]
    %18 = vrot.lane.b32.xlu0 %v17, 64
    %v19 = vpop.permute.xlu0 %18
    %vm20 = vcmask 785920
    %21 = vst.msk [vmem:[#allocation0] sm:$0x1] %vm20, %v19
    %s22 = scalar_lea.vmem [#allocation1], 1
    %v23 = vld [vmem:[%s22] sm:$0x1]
    %24 = vrot.lane.b32.xlu0 %v23, 32
    %v25 = vpop.permute.xlu0 %24
    %vm26 = vcmask 523520
    %27 = vst.msk [vmem:[#allocation0] sm:$0x1] %vm26, %v25
    %s29 = sshll.u32 1, 1
    %s30 = ssub.s32 %s29, 1
    %v32 = vld [vmem:[#allocation0] sm:%s30]
    %s33 = sshll.u32 1, 1
    %s34 = ssub.s32 %s33, 1
    %35 = vst [vmem:[%s1] sm:%s34] %v32

// kernel: generator_forward.12
$region0: #{generator_forward.12}
  #allocation0 [shape = 'u32[]', space=smem, size = 0x4, offset = 0x4, fixed_abs, tag = 'smem constant byte address 0x4 - core index']
  #allocation1 [shape = 'u32[144,128]{1,0:T(1,128)}', space=vmem, size = 0x12000, scoped, tag = 'internal scratch']
  %s0 = inlined_call_operand.vmem [shape: bf16[32,128], index: 0, kind: input, shape index: {}]
  %s1 = inlined_call_operand.vmem [shape: f32[1,128], index: 1, kind: input, shape index: {}]
  %s2 = inlined_call_operand.vmem [shape: f32[1,128], index: 2, kind: input, shape index: {}]
  %s3 = inlined_call_operand.vmem [shape: bf16[32,128], index: 3, kind: output, shape index: {}]
  %s4 = sld [smem:[#allocation0]]
  $region22: #{generator_forward.12} parent=0
    _
  %s6 = ssub.s32 1, %s4
  %s7 = scalar_select 0, %s6, %s4
  // Predicated region
  $region2: #{generator_forward.12} parent=0 // pred_check
    _
  $region3: #{generator_forward.12} parent=0 // pred_check_branch
    %9 = sbr.rel (0) target = $region5
  $region4: #{generator_forward.12} parent=0 // pred_region
    _
  $region5: #{generator_forward.12} parent=0 // pred_fallthru
    _
  // Predicated region
  $region6: #{generator_forward.12} parent=0 // pred_check
    _
  $region7: #{generator_forward.12} parent=0 // pred_check_branch
    %11 = sbr.rel (0) target = $region9
  $region8: #{generator_forward.12} parent=0 // pred_region
    _
  $region9: #{generator_forward.12} parent=0 // pred_fallthru
    _
  // Predicated region
  $region10: #{generator_forward.12} parent=0 // pred_check
    _
  $region11: #{generator_forward.12} parent=0 // pred_check_branch
    %13 = sbr.rel (0) target = $region13
  $region12: #{generator_forward.12} parent=0 // pred_region
    _
  $region13: #{generator_forward.12} parent=0 // pred_fallthru
    _
  %v14 = vld [vmem:[%s0] sm:$0xf]
  %v15 = vld [vmem:[%s0 + $0x4] sm:$0xf]
  %v16 = vld [vmem:[%s0 + $0x8] sm:$0xf]
  %v17 = vld [vmem:[%s0 + $0xc] sm:$0xf]
  %v18 = vunpack.c.l.bf16 %v14
  %v19 = vunpack.c.l.bf16 %v15
  %v20 = vunpack.c.l.bf16 %v16
  %v21 = vunpack.c.l.bf16 %v17
  %v22 = vld [vmem:[%s1] sm:$0x1]
  %v24 = vlaneseq
  %v25 = vshrl.u32 %v24, 7
  %v26 = vsub.s32 0, %v25
  %v27 = vrot.slane %v22, %v26
  %v29 = vmul.f32 %v18, %v27
  %v30 = vmul.f32 %v19, %v27
  %v31 = vmul.f32 %v20, %v27
  %v32 = vmul.f32 %v21, %v27
  %v33 = vld [vmem:[%s2] sm:$0x1]
  %v35 = vlaneseq
  %v36 = vshrl.u32 %v35, 7
  %v37 = vsub.s32 0, %v36
  %v38 = vrot.slane %v33, %v37
  %v40 = vadd.f32 %v29, %v38
  %v41 = vadd.f32 %v30, %v38
  %v42 = vadd.f32 %v31, %v38
  %v43 = vadd.f32 %v32, %v38
  %v44 = vmax.f32 %v40, 0.0
  %v45 = vmax.f32 %v41, 0.0
  %v46 = vmax.f32 %v42, 0.0
  %v47 = vmax.f32 %v43, 0.0
  %v48 = vpack.c.bf16 %v45, %v44
  %v49 = vpack.c.bf16 %v47, %v46
  %v52 = vunpack.c.l.b16 %v48
  %v53 = vunpack.c.h.b16 %v48
  %v54 = vunpack.c.l.b16 %v49
  %v55 = vunpack.c.h.b16 %v49
  %v56 = vpack.c.b16 %v52, %v52
  %v57 = vpack.c.b16 %v53, %v53
  %v58 = vpack.c.b16 %v54, %v54
  %v59 = vpack.c.b16 %v55, %v55
  %64 = vst [vmem:[%s3] sm:$0xf] %v56
  %65 = vst [vmem:[%s3 + $0x4] sm:$0xf] %v57
  %66 = vst [vmem:[%s3 + $0x8] sm:$0xf] %v58
  %67 = vst [vmem:[%s3 + $0xc] sm:$0xf] %v59
  // Predicated region
  $region14: #{generator_forward.12} parent=0 // pred_check
    _
  $region15: #{generator_forward.12} parent=0 // pred_check_branch
    %69 = sbr.rel (0) target = $region17
  $region16: #{generator_forward.12} parent=0 // pred_region
    _
  $region17: #{generator_forward.12} parent=0 // pred_fallthru
    _
  // Predicated region
  $region18: #{generator_forward.12} parent=0 // pred_check
    _
  $region19: #{generator_forward.12} parent=0 // pred_check_branch
    %71 = sbr.rel (0) target = $region21
  $region20: #{generator_forward.12} parent=0 // pred_region
    _
  $region21: #{generator_forward.12} parent=0 // pred_fallthru
    _

// kernel: generator_forward.11
$region0: #{generator_forward.11}
  #allocation0 [shape = 'u32[]', space=smem, size = 0x4, offset = 0x4, fixed_abs, tag = 'smem constant byte address 0x4 - core index']
  #allocation1 [shape = 'u32[144,128]{1,0:T(1,128)}', space=vmem, size = 0x12000, scoped, tag = 'internal scratch']
  %s0 = inlined_call_operand.vmem [shape: bf16[32,576], index: 0, kind: input, shape index: {}]
  %s1 = inlined_call_operand.hbm [shape: bf16[576,128], index: 1, kind: input, shape index: {}]
  %s2 = inlined_call_operand.vmem [shape: bf16[32,128], index: 2, kind: output, shape index: {0}]
  %s3 = inlined_call_operand.vmem [shape: f32[8,128], index: 3, kind: output, shape index: {1}]
  %s4 = inlined_call_operand.vmem [shape: f32[8,128], index: 4, kind: output, shape index: {2}]
  %5 = xla_tuple %s2, %s3, %s4
  %s6 = sld [smem:[#allocation0]]
  $region38: #{generator_forward.11} parent=0
    _
  %s8 = ssub.s32 1, %s6
  %s9 = scalar_select 0, %s8, %s6
  $region1: #{generator_forward.11} parent=0
    #allocation2 [shape = 'u8[147456]{0}', space=vmem, size = 0x24000, scoped, tag = 'input window, operand 1, single buffered']
    #allocation3 [shape = 's32[1]{0}', space=sflag, size = 0x4, scoped, tag = 'scoped memory for generator_forward.11']
    %10 = vsyncpa [#allocation3], 0
    // Predicated region
    $region2: #{generator_forward.11} parent=1 // pred_check
      _
    $region3: #{generator_forward.11} parent=1 // pred_check_branch
      %12 = sbr.rel (0) target = $region5
    $region4: #{generator_forward.11} parent=1 // pred_region
      _
    $region5: #{generator_forward.11} parent=1 // pred_fallthru
      _
    // Predicated region
    $region6: #{generator_forward.11} parent=1 // pred_check
      _
    $region7: #{generator_forward.11} parent=1 // pred_check_branch
      %14 = sbr.rel (0) target = $region9
    $region8: #{generator_forward.11} parent=1 // pred_region
      %s16 = ssub.s32 4608, 4608
      %17 = vsyncadd [#allocation3], %s16
      %s18 = sshll.u32 [#allocation2], 4
      %s19 = int_to_ptr.vmem [resolvable:$true] %s18
      %24 = dma.hbm_to_vmem [thread:$0]  %s1, 4608, %s19, [#allocation3], 64, 64, 4
    $region9: #{generator_forward.11} parent=1 // pred_fallthru
      _
    // Predicated region
    $region10: #{generator_forward.11} parent=1 // pred_check
      _
    $region11: #{generator_forward.11} parent=1 // pred_check_branch
      %26 = sbr.rel (0) target = $region13
    $region12: #{generator_forward.11} parent=1 // pred_region
      %27 = dma.done [#allocation3], 4608
    $region13: #{generator_forward.11} parent=1 // pred_fallthru
      _
    %v29 = vld [vmem:[%s0] sm:$0xff]
    %v30 = vld [vmem:[%s0 + $0x8] sm:$0xff]
    %v31 = vld [vmem:[%s0 + $0x10] sm:$0xf]
    %v32 = vld [vmem:[%s0 + $0x14] sm:$0xff]
    %v33 = vld [vmem:[%s0 + $0x1c] sm:$0xff]
    %v34 = vld [vmem:[%s0 + $0x24] sm:$0xf]
    %v35 = vld [vmem:[%s0 + $0x28] sm:$0xff]
    %v36 = vld [vmem:[%s0 + $0x30] sm:$0xff]
    %v37 = vld [vmem:[%s0 + $0x38] sm:$0xf]
    %v38 = vld [vmem:[%s0 + $0x3c] sm:$0xff]
    %v39 = vld [vmem:[%s0 + $0x44] sm:$0xff]
    %v40 = vld [vmem:[%s0 + $0x4c] sm:$0xf]
    %v41 = vld [vmem:[#allocation2] sm:$0xf]
    %v42 = vld [vmem:[#allocation2 + $0x4] sm:$0xf]
    %v43 = vld [vmem:[#allocation2 + $0x8] sm:$0xf]
    %v44 = vld [vmem:[#allocation2 + $0xc] sm:$0xf]
    %v45 = vld [vmem:[#allocation2 + $0x10] sm:$0xf]
    %v46 = vld [vmem:[#allocation2 + $0x14] sm:$0xf]
    %v47 = vld [vmem:[#allocation2 + $0x18] sm:$0xf]
    %v48 = vld [vmem:[#allocation2 + $0x1c] sm:$0xf]
    %v49 = vld [vmem:[#allocation2 + $0x20] sm:$0xf]
    %v50 = vld [vmem:[#allocation2 + $0x24] sm:$0xf]
    %v51 = vld [vmem:[#allocation2 + $0x28] sm:$0xf]
    %v52 = vld [vmem:[#allocation2 + $0x2c] sm:$0xf]
    %v53 = vld [vmem:[#allocation2 + $0x30] sm:$0xf]
    %v54 = vld [vmem:[#allocation2 + $0x34] sm:$0xf]
    %v55 = vld [vmem:[#allocation2 + $0x38] sm:$0xf]
    %v56 = vld [vmem:[#allocation2 + $0x3c] sm:$0xf]
    %v57 = vld [vmem:[#allocation2 + $0x40] sm:$0xf]
    %v58 = vld [vmem:[#allocation2 + $0x44] sm:$0xf]
    %v59 = vld [vmem:[#allocation2 + $0x48] sm:$0xf]
    %v60 = vld [vmem:[#allocation2 + $0x4c] sm:$0xf]
    %v61 = vld [vmem:[#allocation2 + $0x50] sm:$0xf]
    %v62 = vld [vmem:[#allocation2 + $0x54] sm:$0xf]
    %v63 = vld [vmem:[#allocation2 + $0x58] sm:$0xf]
    %v64 = vld [vmem:[#allocation2 + $0x5c] sm:$0xf]
    %v65 = vld [vmem:[#allocation2 + $0x60] sm:$0xf]
    %v66 = vld [vmem:[#allocation2 + $0x64] sm:$0xf]
    %v67 = vld [vmem:[#allocation2 + $0x68] sm:$0xf]
    %v68 = vld [vmem:[#allocation2 + $0x6c] sm:$0xf]
    %v69 = vld [vmem:[#allocation2 + $0x70] sm:$0xf]
    %v70 = vld [vmem:[#allocation2 + $0x74] sm:$0xf]
    %v71 = vld [vmem:[#allocation2 + $0x78] sm:$0xf]
    %v72 = vld [vmem:[#allocation2 + $0x7c] sm:$0xf]
    %v73 = vld [vmem:[#allocation2 + $0x80] sm:$0xf]
    %v74 = vld [vmem:[#allocation2 + $0x84] sm:$0xf]
    %v75 = vld [vmem:[#allocation2 + $0x88] sm:$0xf]
    %v76 = vld [vmem:[#allocation2 + $0x8c] sm:$0xf]
    %v77 = vld [vmem:[#allocation2 + $0x90] sm:$0xf]
    %v78 = vld [vmem:[#allocation2 + $0x94] sm:$0xf]
    %v79 = vld [vmem:[#allocation2 + $0x98] sm:$0xf]
    %v80 = vld [vmem:[#allocation2 + $0x9c] sm:$0xf]
    %v81 = vld [vmem:[#allocation2 + $0xa0] sm:$0xf]
    %v82 = vld [vmem:[#allocation2 + $0xa4] sm:$0xf]
    %v83 = vld [vmem:[#allocation2 + $0xa8] sm:$0xf]
    %v84 = vld [vmem:[#allocation2 + $0xac] sm:$0xf]
    %v85 = vld [vmem:[#allocation2 + $0xb0] sm:$0xf]
    %v86 = vld [vmem:[#allocation2 + $0xb4] sm:$0xf]
    %v87 = vld [vmem:[#allocation2 + $0xb8] sm:$0xf]
    %v88 = vld [vmem:[#allocation2 + $0xbc] sm:$0xf]
    %v89 = vld [vmem:[#allocation2 + $0xc0] sm:$0xf]
    %v90 = vld [vmem:[#allocation2 + $0xc4] sm:$0xf]
    %v91 = vld [vmem:[#allocation2 + $0xc8] sm:$0xf]
    %v92 = vld [vmem:[#allocation2 + $0xcc] sm:$0xf]
    %v93 = vld [vmem:[#allocation2 + $0xd0] sm:$0xf]
    %v94 = vld [vmem:[#allocation2 + $0xd4] sm:$0xf]
    %v95 = vld [vmem:[#allocation2 + $0xd8] sm:$0xf]
    %v96 = vld [vmem:[#allocation2 + $0xdc] sm:$0xf]
    %v97 = vld [vmem:[#allocation2 + $0xe0] sm:$0xf]
    %v98 = vld [vmem:[#allocation2 + $0xe4] sm:$0xf]
    %v99 = vld [vmem:[#allocation2 + $0xe8] sm:$0xf]
    %v100 = vld [vmem:[#allocation2 + $0xec] sm:$0xf]
    %v101 = vld [vmem:[#allocation2 + $0xf0] sm:$0xf]
    %v102 = vld [vmem:[#allocation2 + $0xf4] sm:$0xf]
    %v103 = vld [vmem:[#allocation2 + $0xf8] sm:$0xf]
    %v104 = vld [vmem:[#allocation2 + $0xfc] sm:$0xf]
    %v105 = vld [vmem:[#allocation2 + $0x100] sm:$0xf]
    %v106 = vld [vmem:[#allocation2 + $0x104] sm:$0xf]
    %v107 = vld [vmem:[#allocation2 + $0x108] sm:$0xf]
    %v108 = vld [vmem:[#allocation2 + $0x10c] sm:$0xf]
    %v109 = vld [vmem:[#allocation2 + $0x110] sm:$0xf]
    %v110 = vld [vmem:[#allocation2 + $0x114] sm:$0xf]
    %v111 = vld [vmem:[#allocation2 + $0x118] sm:$0xf]
    %v112 = vld [vmem:[#allocation2 + $0x11c] sm:$0xf]
    %v125 = vunpack.c.l.b16 %v29
    %v126 = vunpack.c.h.b16 %v29
    %v127 = vunpack.c.l.b16 %v30
    %v128 = vunpack.c.h.b16 %v30
    %v129 = vunpack.c.l.b16 %v31
    %v130 = vunpack.c.l.b16 %v32
    %v131 = vunpack.c.h.b16 %v32
    %v132 = vunpack.c.l.b16 %v33
    %v133 = vunpack.c.h.b16 %v33
    %v134 = vunpack.c.l.b16 %v34
    %v135 = vunpack.c.l.b16 %v35
    %v136 = vunpack.c.h.b16 %v35
    %v137 = vunpack.c.l.b16 %v36
    %v138 = vunpack.c.h.b16 %v36
    %v139 = vunpack.c.l.b16 %v37
    %v140 = vunpack.c.l.b16 %v38
    %v141 = vunpack.c.h.b16 %v38
    %v142 = vunpack.c.l.b16 %v39
    %v143 = vunpack.c.h.b16 %v39
    %v144 = vunpack.c.l.b16 %v40
    %v145 = vpack.c.b16 %v130, %v125
    %v146 = vpack.c.b16 %v131, %v126
    %v147 = vpack.c.b16 %v132, %v127
    %v148 = vpack.c.b16 %v133, %v128
    %v149 = vpack.c.b16 %v134, %v129
    %v150 = vpack.c.b16 %v140, %v135
    %v151 = vpack.c.b16 %v141, %v136
    %v152 = vpack.c.b16 %v142, %v137
    %v153 = vpack.c.b16 %v143, %v138
    %v154 = vpack.c.b16 %v144, %v139
    %v235 = vunpack.c.l.b16 %v41
    %v236 = vunpack.c.l.b16 %v42
    %v237 = vunpack.c.l.b16 %v43
    %v238 = vunpack.c.l.b16 %v44
    %v239 = vunpack.c.l.b16 %v45
    %v240 = vunpack.c.l.b16 %v46
    %v241 = vunpack.c.l.b16 %v47
    %v242 = vunpack.c.l.b16 %v48
    %v243 = vunpack.c.l.b16 %v49
    %v244 = vunpack.c.l.b16 %v50
    %v245 = vunpack.c.l.b16 %v51
    %v246 = vunpack.c.l.b16 %v52
    %v247 = vunpack.c.l.b16 %v53
    %v248 = vunpack.c.l.b16 %v54
    %v249 = vunpack.c.l.b16 %v55
    %v250 = vunpack.c.l.b16 %v56
    %v251 = vunpack.c.l.b16 %v57
    %v252 = vunpack.c.l.b16 %v58
    %v253 = vunpack.c.l.b16 %v59
    %v254 = vunpack.c.l.b16 %v60
    %v255 = vunpack.c.l.b16 %v61
    %v256 = vunpack.c.l.b16 %v62
    %v257 = vunpack.c.l.b16 %v63
    %v258 = vunpack.c.l.b16 %v64
    %v259 = vunpack.c.l.b16 %v65
    %v260 = vunpack.c.l.b16 %v66
    %v261 = vunpack.c.l.b16 %v67
    %v262 = vunpack.c.l.b16 %v68
    %v263 = vunpack.c.l.b16 %v69
    %v264 = vunpack.c.l.b16 %v70
    %v265 = vunpack.c.l.b16 %v71
    %v266 = vunpack.c.l.b16 %v72
    %v267 = vunpack.c.l.b16 %v73
    %v268 = vunpack.c.l.b16 %v74
    %v269 = vunpack.c.l.b16 %v75
    %v270 = vunpack.c.l.b16 %v76
    %v271 = vunpack.c.l.b16 %v77
    %v272 = vunpack.c.l.b16 %v78
    %v273 = vunpack.c.l.b16 %v79
    %v274 = vunpack.c.l.b16 %v80
    %v275 = vunpack.c.l.b16 %v81
    %v276 = vunpack.c.l.b16 %v82
    %v277 = vunpack.c.l.b16 %v83
    %v278 = vunpack.c.l.b16 %v84
    %v279 = vunpack.c.l.b16 %v85
    %v280 = vunpack.c.l.b16 %v86
    %v281 = vunpack.c.l.b16 %v87
    %v282 = vunpack.c.l.b16 %v88
    %v283 = vunpack.c.l.b16 %v89
    %v284 = vunpack.c.l.b16 %v90
    %v285 = vunpack.c.l.b16 %v91
    %v286 = vunpack.c.l.b16 %v92
    %v287 = vunpack.c.l.b16 %v93
    %v288 = vunpack.c.l.b16 %v94
    %v289 = vunpack.c.l.b16 %v95
    %v290 = vunpack.c.l.b16 %v96
    %v291 = vunpack.c.l.b16 %v97
    %v292 = vunpack.c.l.b16 %v98
    %v293 = vunpack.c.l.b16 %v99
    %v294 = vunpack.c.l.b16 %v100
    %v295 = vunpack.c.l.b16 %v101
    %v296 = vunpack.c.l.b16 %v102
    %v297 = vunpack.c.l.b16 %v103
    %v298 = vunpack.c.l.b16 %v104
    %v299 = vunpack.c.l.b16 %v105
    %v300 = vunpack.c.l.b16 %v106
    %v301 = vunpack.c.l.b16 %v107
    %v302 = vunpack.c.l.b16 %v108
    %v303 = vunpack.c.l.b16 %v109
    %v304 = vunpack.c.l.b16 %v110
    %v305 = vunpack.c.l.b16 %v111
    %v306 = vunpack.c.l.b16 %v112
    %v307 = vpack.c.b16 %v236, %v235
    %v308 = vpack.c.b16 %v238, %v237
    %v309 = vpack.c.b16 %v240, %v239
    %v310 = vpack.c.b16 %v242, %v241
    %v311 = vpack.c.b16 %v244, %v243
    %v312 = vpack.c.b16 %v246, %v245
    %v313 = vpack.c.b16 %v248, %v247
    %v314 = vpack.c.b16 %v250, %v249
    %v315 = vpack.c.b16 %v252, %v251
    %v316 = vpack.c.b16 %v254, %v253
    %v317 = vpack.c.b16 %v256, %v255
    %v318 = vpack.c.b16 %v258, %v257
    %v319 = vpack.c.b16 %v260, %v259
    %v320 = vpack.c.b16 %v262, %v261
    %v321 = vpack.c.b16 %v264, %v263
    %v322 = vpack.c.b16 %v266, %v265
    %v323 = vpack.c.b16 %v268, %v267
    %v324 = vpack.c.b16 %v270, %v269
    %v325 = vpack.c.b16 %v272, %v271
    %v326 = vpack.c.b16 %v274, %v273
    %v327 = vpack.c.b16 %v276, %v275
    %v328 = vpack.c.b16 %v278, %v277
    %v329 = vpack.c.b16 %v280, %v279
    %v330 = vpack.c.b16 %v282, %v281
    %v331 = vpack.c.b16 %v284, %v283
    %v332 = vpack.c.b16 %v286, %v285
    %v333 = vpack.c.b16 %v288, %v287
    %v334 = vpack.c.b16 %v290, %v289
    %v335 = vpack.c.b16 %v292, %v291
    %v336 = vpack.c.b16 %v294, %v293
    %v337 = vpack.c.b16 %v296, %v295
    %v338 = vpack.c.b16 %v298, %v297
    %v339 = vpack.c.b16 %v300, %v299
    %v340 = vpack.c.b16 %v302, %v301
    %v341 = vpack.c.b16 %v304, %v303
    %v342 = vpack.c.b16 %v306, %v305
    %vm379 = vcmask 523264
    %v381 = vsel %vm379, %v149, 0
    %v384 = vsel %vm379, %v154, 0
    %386 = vmatprep.subr.bf16.mxu0 0
    %387 = vmatpush1.bf16.msra.mxu0 %v314
    %388 = vmatprep.subr.bf16.mxu0 0
    %389 = vmatpush1.bf16.msra.mxu0 %v313
    %390 = vmatprep.subr.bf16.mxu0 0
    %391 = vmatpush1.bf16.msra.mxu0 %v312
    %392 = vmatprep.subr.bf16.mxu0 0
    %393 = vmatpush1.bf16.msra.mxu0 %v311
    %394 = vmatprep.subr.bf16.mxu0 0
    %395 = vmatpush1.bf16.msra.mxu0 %v310
    %396 = vmatprep.subr.bf16.mxu0 0
    %397 = vmatpush1.bf16.msra.mxu0 %v309
    %398 = vmatprep.subr.bf16.mxu0 0
    %399 = vmatpush1.bf16.msra.mxu0 %v308
    %400 = vmatprep.subr.bf16.mxu0 0
    %401 = vmatpush1.bf16.msra.mxu0 %v307
    %402 = vmatprep.subr.bf16.mxu0 0
    %403 = vmatpush2.bf16.msra.mxu0 %v322
    %404 = vmatprep.subr.bf16.mxu0 0
    %405 = vmatpush2.bf16.msra.mxu0 %v321
    %406 = vmatprep.subr.bf16.mxu0 0
    %407 = vmatpush2.bf16.msra.mxu0 %v320
    %408 = vmatprep.subr.bf16.mxu0 0
    %409 = vmatpush2.bf16.msra.mxu0 %v319
    %410 = vmatprep.subr.bf16.mxu0 0
    %411 = vmatpush2.bf16.msra.mxu0 %v318
    %412 = vmatprep.subr.bf16.mxu0 0
    %413 = vmatpush2.bf16.msra.mxu0 %v317
    %414 = vmatprep.subr.bf16.mxu0 0
    %415 = vmatpush2.bf16.msra.mxu0 %v316
    %416 = vmatprep.subr.bf16.mxu0 0
    %417 = vmatpush2.bf16.msra.mxu0 %v315
    %418 = vmatprep.mubr.bf16.mxu0 %v146
    %419 = vmatmul.mubr.bf16.gmra.mxu0 %v145
    %v420 = vpop.f32.mrf.mxu0
    %v421 = vadd.f32 0.0, %v420
    %v422 = vpop.f32.mrf.mxu0
    %v423 = vpop.f32.mrf.mxu0
    %v424 = vadd.f32 0.0, %v423
    %v425 = vpop.f32.mrf.mxu0
    %426 = vmatprep.mubr.bf16.mxu0 %v151
    %427 = vmatmul.mubr.bf16.gmra.mxu0 %v150
    %v428 = vpop.f32.mrf.mxu0
    %v429 = vadd.f32 0.0, %v428
    %v430 = vpop.f32.mrf.mxu0
    %v431 = vpop.f32.mrf.mxu0
    %v432 = vadd.f32 0.0, %v431
    %v433 = vpop.f32.mrf.mxu0
    %434 = vdwg.mxu0
    %435 = vmatprep.subr.bf16.mxu0 0
    %436 = vmatpush1.bf16.msra.mxu0 %v330
    %437 = vmatprep.subr.bf16.mxu0 0
    %438 = vmatpush1.bf16.msra.mxu0 %v329
    %439 = vmatprep.subr.bf16.mxu0 0
    %440 = vmatpush1.bf16.msra.mxu0 %v328
    %441 = vmatprep.subr.bf16.mxu0 0
    %442 = vmatpush1.bf16.msra.mxu0 %v327
    %443 = vmatprep.subr.bf16.mxu0 0
    %444 = vmatpush1.bf16.msra.mxu0 %v326
    %445 = vmatprep.subr.bf16.mxu0 0
    %446 = vmatpush1.bf16.msra.mxu0 %v325
    %447 = vmatprep.subr.bf16.mxu0 0
    %448 = vmatpush1.bf16.msra.mxu0 %v324
    %449 = vmatprep.subr.bf16.mxu0 0
    %450 = vmatpush1.bf16.msra.mxu0 %v323
    %451 = vmatprep.subr.bf16.mxu0 0
    %452 = vmatpush2.bf16.msra.mxu0 %v338
    %453 = vmatprep.subr.bf16.mxu0 0
    %454 = vmatpush2.bf16.msra.mxu0 %v337
    %455 = vmatprep.subr.bf16.mxu0 0
    %456 = vmatpush2.bf16.msra.mxu0 %v336
    %457 = vmatprep.subr.bf16.mxu0 0
    %458 = vmatpush2.bf16.msra.mxu0 %v335
    %459 = vmatprep.subr.bf16.mxu0 0
    %460 = vmatpush2.bf16.msra.mxu0 %v334
    %461 = vmatprep.subr.bf16.mxu0 0
    %462 = vmatpush2.bf16.msra.mxu0 %v333
    %463 = vmatprep.subr.bf16.mxu0 0
    %464 = vmatpush2.bf16.msra.mxu0 %v332
    %465 = vmatprep.subr.bf16.mxu0 0
    %466 = vmatpush2.bf16.msra.mxu0 %v331
    %467 = vmatprep.mubr.bf16.mxu0 %v148
    %468 = vmatmul.mubr.bf16.gmra.mxu0 %v147
    %v469 = vpop.f32.mrf.mxu0
    %v470 = vadd.f32 %v421, %v469
    %v471 = vpop.f32.mrf.mxu0
    %v472 = vpop.f32.mrf.mxu0
    %v473 = vadd.f32 %v424, %v472
    %v474 = vpop.f32.mrf.mxu0
    %475 = vmatprep.mubr.bf16.mxu0 %v153
    %476 = vmatmul.mubr.bf16.gmra.mxu0 %v152
    %v477 = vpop.f32.mrf.mxu0
    %v478 = vadd.f32 %v429, %v477
    %v479 = vpop.f32.mrf.mxu0
    %v480 = vpop.f32.mrf.mxu0
    %v481 = vadd.f32 %v432, %v480
    %v482 = vpop.f32.mrf.mxu0
    %483 = vdwg.mxu0
    %484 = vmatprep.subr.bf16.mxu0 0
    %485 = vmatpush1.bf16.msra.mxu0 0
    %486 = vmatprep.subr.bf16.mxu0 0
    %487 = vmatpush1.bf16.msra.mxu0 0
    %488 = vmatprep.subr.bf16.mxu0 0
    %489 = vmatpush1.bf16.msra.mxu0 0
    %490 = vmatprep.subr.bf16.mxu0 0
    %491 = vmatpush1.bf16.msra.mxu0 0
    %492 = vmatprep.subr.bf16.mxu0 0
    %493 = vmatpush1.bf16.msra.mxu0 %v342
    %494 = vmatprep.subr.bf16.mxu0 0
    %495 = vmatpush1.bf16.msra.mxu0 %v341
    %496 = vmatprep.subr.bf16.mxu0 0
    %497 = vmatpush1.bf16.msra.mxu0 %v340
    %498 = vmatprep.subr.bf16.mxu0 0
    %499 = vmatpush1.bf16.msra.mxu0 %v339
    %500 = vmatprep.subr.bf16.mxu0 0
    %501 = vmatpush2.bf16.msra.mxu0 0
    %502 = vmatprep.subr.bf16.mxu0 0
    %503 = vmatpush2.bf16.msra.mxu0 0
    %504 = vmatprep.subr.bf16.mxu0 0
    %505 = vmatpush2.bf16.msra.mxu0 0
    %506 = vmatprep.subr.bf16.mxu0 0
    %507 = vmatpush2.bf16.msra.mxu0 0
    %508 = vmatprep.subr.bf16.mxu0 0
    %509 = vmatpush2.bf16.msra.mxu0 0
    %510 = vmatprep.subr.bf16.mxu0 0
    %511 = vmatpush2.bf16.msra.mxu0 0
    %512 = vmatprep.subr.bf16.mxu0 0
    %513 = vmatpush2.bf16.msra.mxu0 0
    %514 = vmatprep.subr.bf16.mxu0 0
    %515 = vmatpush2.bf16.msra.mxu0 0
    %516 = vmatprep.mubr.bf16.mxu0 0
    %517 = vmatmul.mubr.bf16.gmra.mxu0 %v381
    %v518 = vpop.f32.mrf.mxu0
    %v519 = vadd.f32 %v470, %v518
    %v520 = vpop.f32.mrf.mxu0
    %v521 = vpop.f32.mrf.mxu0
    %v522 = vadd.f32 %v473, %v521
    %v523 = vpop.f32.mrf.mxu0
    %524 = vmatprep.mubr.bf16.mxu0 0
    %525 = vmatmul.mubr.bf16.gmra.mxu0 %v384
    %v526 = vpop.f32.mrf.mxu0
    %v527 = vadd.f32 %v478, %v526
    %v528 = vpop.f32.mrf.mxu0
    %v529 = vpop.f32.mrf.mxu0
    %v530 = vadd.f32 %v481, %v529
    %v531 = vpop.f32.mrf.mxu0
    %532 = vdwg.mxu0
    %v533 = vpack.c.bf16 %v522, %v519
    %v534 = vpack.c.bf16 %v530, %v527
    %v537 = vunpack.c.l.b16 %v533
    %v538 = vunpack.c.h.b16 %v533
    %v539 = vunpack.c.l.b16 %v534
    %v540 = vunpack.c.h.b16 %v534
    %v541 = vpack.c.b16 %v537, %v537
    %v542 = vpack.c.b16 %v538, %v538
    %v543 = vpack.c.b16 %v539, %v539
    %v544 = vpack.c.b16 %v540, %v540
    %549 = vst [vmem:[%s2] sm:$0xf] %v541
    %550 = vst [vmem:[%s2 + $0x4] sm:$0xf] %v542
    %551 = vst [vmem:[%s2 + $0x8] sm:$0xf] %v543
    %552 = vst [vmem:[%s2 + $0xc] sm:$0xf] %v544
    %v553 = vadd.f32 %v519, %v522
    %v554 = vadd.f32 %v553, %v527
    %v555 = vadd.f32 %v554, %v530
    %v556 = vrot.slane %v555, 4
    %v557 = vadd.f32 %v555, %v556
    %v558 = vrot.slane %v557, 2
    %v559 = vadd.f32 %v557, %v558
    %v560 = vrot.slane %v559, 1
    %v561 = vadd.f32 %v559, %v560
    %562 = vst [vmem:[%s3] sm:$0xff] %v561
    %v563 = vmul.f32 %v519, %v519
    %v564 = vmul.f32 %v522, %v522
    %v565 = vmul.f32 %v527, %v527
    %v566 = vmul.f32 %v530, %v530
    %v567 = vadd.f32 %v563, %v564
    %v568 = vadd.f32 %v567, %v565
    %v569 = vadd.f32 %v568, %v566
    %v570 = vrot.slane %v569, 4
    %v571 = vadd.f32 %v569, %v570
    %v572 = vrot.slane %v571, 2
    %v573 = vadd.f32 %v571, %v572
    %v574 = vrot.slane %v573, 1
    %v575 = vadd.f32 %v573, %v574
    %576 = vst [vmem:[%s4] sm:$0xff] %v575
    // Predicated region
    $region14: #{generator_forward.11} parent=1 // pred_check
      _
    $region15: #{generator_forward.11} parent=1 // pred_check_branch
      %578 = sbr.rel (0) target = $region17
    $region16: #{generator_forward.11} parent=1 // pred_region
      _
    $region17: #{generator_forward.11} parent=1 // pred_fallthru
      _
    // Predicated region
    $region18: #{generator_forward.11} parent=1 // pred_check
      _
    $region19: #{generator_forward.11} parent=1 // pred_check_branch
      %580 = sbr.rel (0) target = $region21
    $region20: #{generator_forward.11} parent=1 // pred_region
      _
    $region21: #{generator_forward.11} parent=1 // pred_fallthru
      _
    // Predicated region
    $region22: #{generator_forward.11} parent=1 // pred_check
      _
    $region23: #{generator_forward.11} parent=1 // pred_check_branch
      %582 = sbr.rel (0) target = $region25
    $region24: #{generator_forward.11} parent=1 // pred_region
      _
    $region25: #{generator_forward.11} parent=1 // pred_fallthru
      _
    // Predicated region
    $region26: #{generator_forward.11} parent=1 // pred_check
      _
    $region27: #{generator_forward.11} parent=1 // pred_check_branch
      %584 = sbr.rel (0) target = $region29
    $region28: #{generator_forward.11} parent=1 // pred_region
      _
    $region29: #{generator_forward.11} parent=1 // pred_fallthru
      _
    // Predicated region
    $region30: #{generator_forward.11} parent=1 // pred_check
      _
    $region31: #{generator_forward.11} parent=1 // pred_check_branch
      %586 = sbr.rel (0) target = $region33
    $region32: #{generator_forward.11} parent=1 // pred_region
      _
    $region33: #{generator_forward.11} parent=1 // pred_fallthru
      _
    // Predicated region
    $region34: #{generator_forward.11} parent=1 // pred_check
      _
    $region35: #{generator_forward.11} parent=1 // pred_check_branch
      %588 = sbr.rel (0) target = $region37
    $region36: #{generator_forward.11} parent=1 // pred_region
      _
    $region37: #{generator_forward.11} parent=1 // pred_fallthru
      _
    %589 = vsyncpa [#allocation3], 1

// kernel: tile.67
$region0: #{tile.67}
  #allocation0 [shape = 's32[1]{0}', space=sflag, size = 0x4, scoped, tag = 'scoped memory for tile.67']
  %s0 = inlined_call_operand.vmem [shape: f32[16], index: 0, kind: input, shape index: {}]
  %s1 = inlined_call_operand.vmem [shape: f32[4,16], index: 1, kind: output, shape index: {}]
  // Predicated region
  $region2: #{tile.67} parent=0 // pred_check
    _
  $region3: #{tile.67} parent=0 // pred_check_branch
    %3 = sbr.rel (0) target = $region5
  $region4: #{tile.67} parent=0 // pred_region
    _
  $region5: #{tile.67} parent=0 // pred_fallthru
    _
  %v4 = vld [vmem:[%s0] ss:$0 sm:$0xff]
  %5 = vst [vmem:[%s1] sm:$0xf] %v4

// kernel: tile.69
$region0: #{tile.69}
  %s0 = inlined_call_operand.vmem [shape: f32[4,16], index: 0, kind: input, shape index: {}]
  %s1 = inlined_call_operand.vmem [shape: f32[1,64], index: 1, kind: output, shape index: {}]
  $region1: #{tile.69} parent=0
    #allocation0 [shape = 'u8[4096]{0}', space=vmem, size = 0x1000, scoped, tag = 'scoped mem for output reshape']
    #allocation1 [shape = 'u8[4096]{0}', space=vmem, size = 0x1000, scoped, tag = 'scoped mem for input reshape']
    %s3 = sshll.u32 1, 4
    %s4 = ssub.s32 %s3, 1
    %v5 = vld [vmem:[%s0] sm:%s4]
    %6 = vst [vmem:[#allocation1] sm:%s4] %v5
    %v7 = vld [vmem:[#allocation1] sm:$0x1]
    %vm8 = vcmask 130048
    %9 = vst.msk [vmem:[#allocation0] sm:$0x1] %vm8, %v7
    %s10 = scalar_lea.vmem [#allocation1], 3
    %v11 = vld [vmem:[%s10] sm:$0x1]
    %12 = vrot.lane.b32.xlu0 %v11, 48
    %v13 = vpop.permute.xlu0 %12
    %vm14 = vcmask 523648
    %15 = vst.msk [vmem:[#allocation0] sm:$0x1] %vm14, %v13
    %s16 = scalar_lea.vmem [#allocation1], 2
    %v17 = vld [vmem:[%s16] sm:$0x1]
    %18 = vrot.lane.b32.xlu0 %v17, 32
    %v19 = vpop.permute.xlu0 %18
    %vm20 = vcmask 392448
    %21 = vst.msk [vmem:[#allocation0] sm:$0x1] %vm20, %v19
    %s22 = scalar_lea.vmem [#allocation1], 1
    %v23 = vld [vmem:[%s22] sm:$0x1]
    %24 = vrot.lane.b32.xlu0 %v23, 16
    %v25 = vpop.permute.xlu0 %24
    %vm26 = vcmask 261248
    %27 = vst.msk [vmem:[#allocation0] sm:$0x1] %vm26, %v25
    %s29 = sshll.u32 1, 1
    %s30 = ssub.s32 %s29, 1
    %v32 = vld [vmem:[#allocation0] sm:%s30]
    %s33 = sshll.u32 1, 1
    %s34 = ssub.s32 %s33, 1
    %35 = vst [vmem:[%s1] sm:%s34] %v32

// kernel: generator_forward.13
$region0: #{generator_forward.13}
  #allocation0 [shape = 'u32[]', space=smem, size = 0x4, offset = 0x4, fixed_abs, tag = 'smem constant byte address 0x4 - core index']
  #allocation1 [shape = 'u32[144,128]{1,0:T(1,128)}', space=vmem, size = 0x12000, scoped, tag = 'internal scratch']
  %s0 = inlined_call_operand.vmem [shape: bf16[128,288], index: 0, kind: input, shape index: {}]
  %s1 = inlined_call_operand.vmem [shape: bf16[288,64], index: 1, kind: input, shape index: {}]
  %s2 = inlined_call_operand.vmem [shape: bf16[128,64], index: 2, kind: output, shape index: {0}]
  %s3 = inlined_call_operand.vmem [shape: f32[8,64], index: 3, kind: output, shape index: {1}]
  %s4 = inlined_call_operand.vmem [shape: f32[8,64], index: 4, kind: output, shape index: {2}]
  %5 = xla_tuple %s2, %s3, %s4
  %s6 = sld [smem:[#allocation0]]
  $region34: #{generator_forward.13} parent=0
    _
  %s8 = ssub.s32 1, %s6
  %s9 = scalar_select 0, %s8, %s6
  // Predicated region
  $region2: #{generator_forward.13} parent=0 // pred_check
    _
  $region3: #{generator_forward.13} parent=0 // pred_check_branch
    %11 = sbr.rel (0) target = $region5
  $region4: #{generator_forward.13} parent=0 // pred_region
    _
  $region5: #{generator_forward.13} parent=0 // pred_fallthru
    _
  // Predicated region
  $region6: #{generator_forward.13} parent=0 // pred_check
    _
  $region7: #{generator_forward.13} parent=0 // pred_check_branch
    %13 = sbr.rel (0) target = $region9
  $region8: #{generator_forward.13} parent=0 // pred_region
    _
  $region9: #{generator_forward.13} parent=0 // pred_fallthru
    _
  %v15 = vld [vmem:[%s0] sm:$0xff]
  %v16 = vld [vmem:[%s0 + $0x8] sm:$0xf]
  %v17 = vld [vmem:[%s0 + $0xc] sm:$0xff]
  %v18 = vld [vmem:[%s0 + $0x14] sm:$0xf]
  %v19 = vld [vmem:[%s0 + $0x18] sm:$0xff]
  %v20 = vld [vmem:[%s0 + $0x20] sm:$0xf]
  %v21 = vld [vmem:[%s0 + $0x24] sm:$0xff]
  %v22 = vld [vmem:[%s0 + $0x2c] sm:$0xf]
  %v23 = vld [vmem:[%s0 + $0x30] sm:$0xff]
  %v24 = vld [vmem:[%s0 + $0x38] sm:$0xf]
  %v25 = vld [vmem:[%s0 + $0x3c] sm:$0xff]
  %v26 = vld [vmem:[%s0 + $0x44] sm:$0xf]
  %v27 = vld [vmem:[%s0 + $0x48] sm:$0xff]
  %v28 = vld [vmem:[%s0 + $0x50] sm:$0xf]
  %v29 = vld [vmem:[%s0 + $0x54] sm:$0xff]
  %v30 = vld [vmem:[%s0 + $0x5c] sm:$0xf]
  %v31 = vld [vmem:[%s0 + $0x60] sm:$0xff]
  %v32 = vld [vmem:[%s0 + $0x68] sm:$0xf]
  %v33 = vld [vmem:[%s0 + $0x6c] sm:$0xff]
  %v34 = vld [vmem:[%s0 + $0x74] sm:$0xf]
  %v35 = vld [vmem:[%s0 + $0x78] sm:$0xff]
  %v36 = vld [vmem:[%s0 + $0x80] sm:$0xf]
  %v37 = vld [vmem:[%s0 + $0x84] sm:$0xff]
  %v38 = vld [vmem:[%s0 + $0x8c] sm:$0xf]
  %v39 = vld [vmem:[%s0 + $0x90] sm:$0xff]
  %v40 = vld [vmem:[%s0 + $0x98] sm:$0xf]
  %v41 = vld [vmem:[%s0 + $0x9c] sm:$0xff]
  %v42 = vld [vmem:[%s0 + $0xa4] sm:$0xf]
  %v43 = vld [vmem:[%s0 + $0xa8] sm:$0xff]
  %v44 = vld [vmem:[%s0 + $0xb0] sm:$0xf]
  %v45 = vld [vmem:[%s0 + $0xb4] sm:$0xff]
  %v46 = vld [vmem:[%s0 + $0xbc] sm:$0xf]
  %v47 = vld [vmem:[%s1] sm:$0xf]
  %v48 = vld [vmem:[%s1 + $0x4] sm:$0xf]
  %v49 = vld [vmem:[%s1 + $0x8] sm:$0xf]
  %v50 = vld [vmem:[%s1 + $0xc] sm:$0xf]
  %v51 = vld [vmem:[%s1 + $0x10] sm:$0xf]
  %v52 = vld [vmem:[%s1 + $0x14] sm:$0xf]
  %v53 = vld [vmem:[%s1 + $0x18] sm:$0xf]
  %v54 = vld [vmem:[%s1 + $0x1c] sm:$0xf]
  %v55 = vld [vmem:[%s1 + $0x20] sm:$0xf]
  %v56 = vld [vmem:[%s1 + $0x24] sm:$0xf]
  %v57 = vld [vmem:[%s1 + $0x28] sm:$0xf]
  %v58 = vld [vmem:[%s1 + $0x2c] sm:$0xf]
  %v59 = vld [vmem:[%s1 + $0x30] sm:$0xf]
  %v60 = vld [vmem:[%s1 + $0x34] sm:$0xf]
  %v61 = vld [vmem:[%s1 + $0x38] sm:$0xf]
  %v62 = vld [vmem:[%s1 + $0x3c] sm:$0xf]
  %v63 = vld [vmem:[%s1 + $0x40] sm:$0xf]
  %v64 = vld [vmem:[%s1 + $0x44] sm:$0xf]
  %v65 = vld [vmem:[%s1 + $0x48] sm:$0xf]
  %v66 = vld [vmem:[%s1 + $0x4c] sm:$0xf]
  %v67 = vld [vmem:[%s1 + $0x50] sm:$0xf]
  %v68 = vld [vmem:[%s1 + $0x54] sm:$0xf]
  %v69 = vld [vmem:[%s1 + $0x58] sm:$0xf]
  %v70 = vld [vmem:[%s1 + $0x5c] sm:$0xf]
  %v71 = vld [vmem:[%s1 + $0x60] sm:$0xf]
  %v72 = vld [vmem:[%s1 + $0x64] sm:$0xf]
  %v73 = vld [vmem:[%s1 + $0x68] sm:$0xf]
  %v74 = vld [vmem:[%s1 + $0x6c] sm:$0xf]
  %v75 = vld [vmem:[%s1 + $0x70] sm:$0xf]
  %v76 = vld [vmem:[%s1 + $0x74] sm:$0xf]
  %v77 = vld [vmem:[%s1 + $0x78] sm:$0xf]
  %v78 = vld [vmem:[%s1 + $0x7c] sm:$0xf]
  %v79 = vld [vmem:[%s1 + $0x80] sm:$0xf]
  %v80 = vld [vmem:[%s1 + $0x84] sm:$0xf]
  %v81 = vld [vmem:[%s1 + $0x88] sm:$0xf]
  %v82 = vld [vmem:[%s1 + $0x8c] sm:$0xf]
  %v115 = vunpack.c.l.b16 %v15
  %v116 = vunpack.c.h.b16 %v15
  %v117 = vunpack.c.l.b16 %v16
  %v118 = vunpack.c.l.b16 %v17
  %v119 = vunpack.c.h.b16 %v17
  %v120 = vunpack.c.l.b16 %v18
  %v121 = vunpack.c.l.b16 %v19
  %v122 = vunpack.c.h.b16 %v19
  %v123 = vunpack.c.l.b16 %v20
  %v124 = vunpack.c.l.b16 %v21
  %v125 = vunpack.c.h.b16 %v21
  %v126 = vunpack.c.l.b16 %v22
  %v127 = vunpack.c.l.b16 %v23
  %v128 = vunpack.c.h.b16 %v23
  %v129 = vunpack.c.l.b16 %v24
  %v130 = vunpack.c.l.b16 %v25
  %v131 = vunpack.c.h.b16 %v25
  %v132 = vunpack.c.l.b16 %v26
  %v133 = vunpack.c.l.b16 %v27
  %v134 = vunpack.c.h.b16 %v27
  %v135 = vunpack.c.l.b16 %v28
  %v136 = vunpack.c.l.b16 %v29
  %v137 = vunpack.c.h.b16 %v29
  %v138 = vunpack.c.l.b16 %v30
  %v139 = vunpack.c.l.b16 %v31
  %v140 = vunpack.c.h.b16 %v31
  %v141 = vunpack.c.l.b16 %v32
  %v142 = vunpack.c.l.b16 %v33
  %v143 = vunpack.c.h.b16 %v33
  %v144 = vunpack.c.l.b16 %v34
  %v145 = vunpack.c.l.b16 %v35
  %v146 = vunpack.c.h.b16 %v35
  %v147 = vunpack.c.l.b16 %v36
  %v148 = vunpack.c.l.b16 %v37
  %v149 = vunpack.c.h.b16 %v37
  %v150 = vunpack.c.l.b16 %v38
  %v151 = vunpack.c.l.b16 %v39
  %v152 = vunpack.c.h.b16 %v39
  %v153 = vunpack.c.l.b16 %v40
  %v154 = vunpack.c.l.b16 %v41
  %v155 = vunpack.c.h.b16 %v41
  %v156 = vunpack.c.l.b16 %v42
  %v157 = vunpack.c.l.b16 %v43
  %v158 = vunpack.c.h.b16 %v43
  %v159 = vunpack.c.l.b16 %v44
  %v160 = vunpack.c.l.b16 %v45
  %v161 = vunpack.c.h.b16 %v45
  %v162 = vunpack.c.l.b16 %v46
  %v163 = vpack.c.b16 %v118, %v115
  %v164 = vpack.c.b16 %v119, %v116
  %v165 = vpack.c.b16 %v120, %v117
  %v166 = vpack.c.b16 %v124, %v121
  %v167 = vpack.c.b16 %v125, %v122
  %v168 = vpack.c.b16 %v126, %v123
  %v169 = vpack.c.b16 %v130, %v127
  %v170 = vpack.c.b16 %v131, %v128
  %v171 = vpack.c.b16 %v132, %v129
  %v172 = vpack.c.b16 %v136, %v133
  %v173 = vpack.c.b16 %v137, %v134
  %v174 = vpack.c.b16 %v138, %v135
  %v175 = vpack.c.b16 %v142, %v139
  %v176 = vpack.c.b16 %v143, %v140
  %v177 = vpack.c.b16 %v144, %v141
  %v178 = vpack.c.b16 %v148, %v145
  %v179 = vpack.c.b16 %v149, %v146
  %v180 = vpack.c.b16 %v150, %v147
  %v181 = vpack.c.b16 %v154, %v151
  %v182 = vpack.c.b16 %v155, %v152
  %v183 = vpack.c.b16 %v156, %v153
  %v184 = vpack.c.b16 %v160, %v157
  %v185 = vpack.c.b16 %v161, %v158
  %v186 = vpack.c.b16 %v162, %v159
  %v239 = vunpack.c.l.b16 %v47
  %v240 = vunpack.c.l.b16 %v48
  %v241 = vunpack.c.l.b16 %v49
  %v242 = vunpack.c.l.b16 %v50
  %v243 = vunpack.c.l.b16 %v51
  %v244 = vunpack.c.l.b16 %v52
  %v245 = vunpack.c.l.b16 %v53
  %v246 = vunpack.c.l.b16 %v54
  %v247 = vunpack.c.l.b16 %v55
  %v248 = vunpack.c.l.b16 %v56
  %v249 = vunpack.c.l.b16 %v57
  %v250 = vunpack.c.l.b16 %v58
  %v251 = vunpack.c.l.b16 %v59
  %v252 = vunpack.c.l.b16 %v60
  %v253 = vunpack.c.l.b16 %v61
  %v254 = vunpack.c.l.b16 %v62
  %v255 = vunpack.c.l.b16 %v63
  %v256 = vunpack.c.l.b16 %v64
  %v257 = vunpack.c.l.b16 %v65
  %v258 = vunpack.c.l.b16 %v66
  %v259 = vunpack.c.l.b16 %v67
  %v260 = vunpack.c.l.b16 %v68
  %v261 = vunpack.c.l.b16 %v69
  %v262 = vunpack.c.l.b16 %v70
  %v263 = vunpack.c.l.b16 %v71
  %v264 = vunpack.c.l.b16 %v72
  %v265 = vunpack.c.l.b16 %v73
  %v266 = vunpack.c.l.b16 %v74
  %v267 = vunpack.c.l.b16 %v75
  %v268 = vunpack.c.l.b16 %v76
  %v269 = vunpack.c.l.b16 %v77
  %v270 = vunpack.c.l.b16 %v78
  %v271 = vunpack.c.l.b16 %v79
  %v272 = vunpack.c.l.b16 %v80
  %v273 = vunpack.c.l.b16 %v81
  %v274 = vunpack.c.l.b16 %v82
  %v275 = vpack.c.b16 %v240, %v239
  %v276 = vpack.c.b16 %v242, %v241
  %v277 = vpack.c.b16 %v244, %v243
  %v278 = vpack.c.b16 %v246, %v245
  %v279 = vpack.c.b16 %v248, %v247
  %v280 = vpack.c.b16 %v250, %v249
  %v281 = vpack.c.b16 %v252, %v251
  %v282 = vpack.c.b16 %v254, %v253
  %v283 = vpack.c.b16 %v256, %v255
  %v284 = vpack.c.b16 %v258, %v257
  %v285 = vpack.c.b16 %v260, %v259
  %v286 = vpack.c.b16 %v262, %v261
  %v287 = vpack.c.b16 %v264, %v263
  %v288 = vpack.c.b16 %v266, %v265
  %v289 = vpack.c.b16 %v268, %v267
  %v290 = vpack.c.b16 %v270, %v269
  %v291 = vpack.c.b16 %v272, %v271
  %v292 = vpack.c.b16 %v274, %v273
  %vm311 = vcmask 261120
  %v313 = vsel %vm311, %v165, 0
  %v316 = vsel %vm311, %v168, 0
  %v319 = vsel %vm311, %v171, 0
  %v322 = vsel %vm311, %v174, 0
  %v325 = vsel %vm311, %v177, 0
  %v328 = vsel %vm311, %v180, 0
  %v331 = vsel %vm311, %v183, 0
  %v334 = vsel %vm311, %v186, 0
  %336 = vmatprep.subr.bf16.mxu0 0
  %337 = vmatpush1.bf16.msra.mxu0 %v282
  %338 = vmatprep.subr.bf16.mxu0 0
  %339 = vmatpush1.bf16.msra.mxu0 %v281
  %340 = vmatprep.subr.bf16.mxu0 0
  %341 = vmatpush1.bf16.msra.mxu0 %v280
  %342 = vmatprep.subr.bf16.mxu0 0
  %343 = vmatpush1.bf16.msra.mxu0 %v279
  %344 = vmatprep.subr.bf16.mxu0 0
  %345 = vmatpush1.bf16.msra.mxu0 %v278
  %346 = vmatprep.subr.bf16.mxu0 0
  %347 = vmatpush1.bf16.msra.mxu0 %v277
  %348 = vmatprep.subr.bf16.mxu0 0
  %349 = vmatpush1.bf16.msra.mxu0 %v276
  %350 = vmatprep.subr.bf16.mxu0 0
  %351 = vmatpush1.bf16.msra.mxu0 %v275
  %352 = vmatprep.subr.bf16.mxu0 0
  %353 = vmatpush2.bf16.msra.mxu0 %v290
  %354 = vmatprep.subr.bf16.mxu0 0
  %355 = vmatpush2.bf16.msra.mxu0 %v289
  %356 = vmatprep.subr.bf16.mxu0 0
  %357 = vmatpush2.bf16.msra.mxu0 %v288
  %358 = vmatprep.subr.bf16.mxu0 0
  %359 = vmatpush2.bf16.msra.mxu0 %v287
  %360 = vmatprep.subr.bf16.mxu0 0
  %361 = vmatpush2.bf16.msra.mxu0 %v286
  %362 = vmatprep.subr.bf16.mxu0 0
  %363 = vmatpush2.bf16.msra.mxu0 %v285
  %364 = vmatprep.subr.bf16.mxu0 0
  %365 = vmatpush2.bf16.msra.mxu0 %v284
  %366 = vmatprep.subr.bf16.mxu0 0
  %367 = vmatpush2.bf16.msra.mxu0 %v283
  %368 = vmatprep.mubr.bf16.mxu0 %v164
  %369 = vmatmul.mubr.bf16.gmra.mxu0 %v163
  %v370 = vpop.f32.mrf.mxu0
  %v371 = vadd.f32 0.0, %v370
  %v372 = vpop.f32.mrf.mxu0
  %v373 = vpop.f32.mrf.mxu0
  %v374 = vadd.f32 0.0, %v373
  %v375 = vpop.f32.mrf.mxu0
  %376 = vmatprep.mubr.bf16.mxu0 %v167
  %377 = vmatmul.mubr.bf16.gmra.mxu0 %v166
  %v378 = vpop.f32.mrf.mxu0
  %v379 = vadd.f32 0.0, %v378
  %v380 = vpop.f32.mrf.mxu0
  %v381 = vpop.f32.mrf.mxu0
  %v382 = vadd.f32 0.0, %v381
  %v383 = vpop.f32.mrf.mxu0
  %384 = vmatprep.mubr.bf16.mxu0 %v170
  %385 = vmatmul.mubr.bf16.gmra.mxu0 %v169
  %v386 = vpop.f32.mrf.mxu0
  %v387 = vadd.f32 0.0, %v386
  %v388 = vpop.f32.mrf.mxu0
  %v389 = vpop.f32.mrf.mxu0
  %v390 = vadd.f32 0.0, %v389
  %v391 = vpop.f32.mrf.mxu0
  %392 = vmatprep.mubr.bf16.mxu0 %v173
  %393 = vmatmul.mubr.bf16.gmra.mxu0 %v172
  %v394 = vpop.f32.mrf.mxu0
  %v395 = vadd.f32 0.0, %v394
  %v396 = vpop.f32.mrf.mxu0
  %v397 = vpop.f32.mrf.mxu0
  %v398 = vadd.f32 0.0, %v397
  %v399 = vpop.f32.mrf.mxu0
  %400 = vmatprep.mubr.bf16.mxu0 %v176
  %401 = vmatmul.mubr.bf16.gmra.mxu0 %v175
  %v402 = vpop.f32.mrf.mxu0
  %v403 = vadd.f32 0.0, %v402
  %v404 = vpop.f32.mrf.mxu0
  %v405 = vpop.f32.mrf.mxu0
  %v406 = vadd.f32 0.0, %v405
  %v407 = vpop.f32.mrf.mxu0
  %408 = vmatprep.mubr.bf16.mxu0 %v179
  %409 = vmatmul.mubr.bf16.gmra.mxu0 %v178
  %v410 = vpop.f32.mrf.mxu0
  %v411 = vadd.f32 0.0, %v410
  %v412 = vpop.f32.mrf.mxu0
  %v413 = vpop.f32.mrf.mxu0
  %v414 = vadd.f32 0.0, %v413
  %v415 = vpop.f32.mrf.mxu0
  %416 = vmatprep.mubr.bf16.mxu0 %v182
  %417 = vmatmul.mubr.bf16.gmra.mxu0 %v181
  %v418 = vpop.f32.mrf.mxu0
  %v419 = vadd.f32 0.0, %v418
  %v420 = vpop.f32.mrf.mxu0
  %v421 = vpop.f32.mrf.mxu0
  %v422 = vadd.f32 0.0, %v421
  %v423 = vpop.f32.mrf.mxu0
  %424 = vmatprep.mubr.bf16.mxu0 %v185
  %425 = vmatmul.mubr.bf16.gmra.mxu0 %v184
  %v426 = vpop.f32.mrf.mxu0
  %v427 = vadd.f32 0.0, %v426
  %v428 = vpop.f32.mrf.mxu0
  %v429 = vpop.f32.mrf.mxu0
  %v430 = vadd.f32 0.0, %v429
  %v431 = vpop.f32.mrf.mxu0
  %432 = vdwg.mxu0
  %433 = vmatprep.subr.bf16.mxu0 0
  %434 = vmatpush1.bf16.msra.mxu0 0
  %435 = vmatprep.subr.bf16.mxu0 0
  %436 = vmatpush1.bf16.msra.mxu0 0
  %437 = vmatprep.subr.bf16.mxu0 0
  %438 = vmatpush1.bf16.msra.mxu0 0
  %439 = vmatprep.subr.bf16.mxu0 0
  %440 = vmatpush1.bf16.msra.mxu0 0
  %441 = vmatprep.subr.bf16.mxu0 0
  %442 = vmatpush1.bf16.msra.mxu0 0
  %443 = vmatprep.subr.bf16.mxu0 0
  %444 = vmatpush1.bf16.msra.mxu0 0
  %445 = vmatprep.subr.bf16.mxu0 0
  %446 = vmatpush1.bf16.msra.mxu0 %v292
  %447 = vmatprep.subr.bf16.mxu0 0
  %448 = vmatpush1.bf16.msra.mxu0 %v291
  %449 = vmatprep.subr.bf16.mxu0 0
  %450 = vmatpush2.bf16.msra.mxu0 0
  %451 = vmatprep.subr.bf16.mxu0 0
  %452 = vmatpush2.bf16.msra.mxu0 0
  %453 = vmatprep.subr.bf16.mxu0 0
  %454 = vmatpush2.bf16.msra.mxu0 0
  %455 = vmatprep.subr.bf16.mxu0 0
  %456 = vmatpush2.bf16.msra.mxu0 0
  %457 = vmatprep.subr.bf16.mxu0 0
  %458 = vmatpush2.bf16.msra.mxu0 0
  %459 = vmatprep.subr.bf16.mxu0 0
  %460 = vmatpush2.bf16.msra.mxu0 0
  %461 = vmatprep.subr.bf16.mxu0 0
  %462 = vmatpush2.bf16.msra.mxu0 0
  %463 = vmatprep.subr.bf16.mxu0 0
  %464 = vmatpush2.bf16.msra.mxu0 0
  %465 = vmatprep.mubr.bf16.mxu0 0
  %466 = vmatmul.mubr.bf16.gmra.mxu0 %v313
  %v467 = vpop.f32.mrf.mxu0
  %v468 = vadd.f32 %v371, %v467
  %v469 = vpop.f32.mrf.mxu0
  %v470 = vpop.f32.mrf.mxu0
  %v471 = vadd.f32 %v374, %v470
  %v472 = vpop.f32.mrf.mxu0
  %473 = vmatprep.mubr.bf16.mxu0 0
  %474 = vmatmul.mubr.bf16.gmra.mxu0 %v316
  %v475 = vpop.f32.mrf.mxu0
  %v476 = vadd.f32 %v379, %v475
  %v477 = vpop.f32.mrf.mxu0
  %v478 = vpop.f32.mrf.mxu0
  %v479 = vadd.f32 %v382, %v478
  %v480 = vpop.f32.mrf.mxu0
  %481 = vmatprep.mubr.bf16.mxu0 0
  %482 = vmatmul.mubr.bf16.gmra.mxu0 %v319
  %v483 = vpop.f32.mrf.mxu0
  %v484 = vadd.f32 %v387, %v483
  %v485 = vpop.f32.mrf.mxu0
  %v486 = vpop.f32.mrf.mxu0
  %v487 = vadd.f32 %v390, %v486
  %v488 = vpop.f32.mrf.mxu0
  %489 = vmatprep.mubr.bf16.mxu0 0
  %490 = vmatmul.mubr.bf16.gmra.mxu0 %v322
  %v491 = vpop.f32.mrf.mxu0
  %v492 = vadd.f32 %v395, %v491
  %v493 = vpop.f32.mrf.mxu0
  %v494 = vpop.f32.mrf.mxu0
  %v495 = vadd.f32 %v398, %v494
  %v496 = vpop.f32.mrf.mxu0
  %497 = vmatprep.mubr.bf16.mxu0 0
  %498 = vmatmul.mubr.bf16.gmra.mxu0 %v325
  %v499 = vpop.f32.mrf.mxu0
  %v500 = vadd.f32 %v403, %v499
  %v501 = vpop.f32.mrf.mxu0
  %v502 = vpop.f32.mrf.mxu0
  %v503 = vadd.f32 %v406, %v502
  %v504 = vpop.f32.mrf.mxu0
  %505 = vmatprep.mubr.bf16.mxu0 0
  %506 = vmatmul.mubr.bf16.gmra.mxu0 %v328
  %v507 = vpop.f32.mrf.mxu0
  %v508 = vadd.f32 %v411, %v507
  %v509 = vpop.f32.mrf.mxu0
  %v510 = vpop.f32.mrf.mxu0
  %v511 = vadd.f32 %v414, %v510
  %v512 = vpop.f32.mrf.mxu0
  %513 = vmatprep.mubr.bf16.mxu0 0
  %514 = vmatmul.mubr.bf16.gmra.mxu0 %v331
  %v515 = vpop.f32.mrf.mxu0
  %v516 = vadd.f32 %v419, %v515
  %v517 = vpop.f32.mrf.mxu0
  %v518 = vpop.f32.mrf.mxu0
  %v519 = vadd.f32 %v422, %v518
  %v520 = vpop.f32.mrf.mxu0
  %521 = vmatprep.mubr.bf16.mxu0 0
  %522 = vmatmul.mubr.bf16.gmra.mxu0 %v334
  %v523 = vpop.f32.mrf.mxu0
  %v524 = vadd.f32 %v427, %v523
  %v525 = vpop.f32.mrf.mxu0
  %v526 = vpop.f32.mrf.mxu0
  %v527 = vadd.f32 %v430, %v526
  %v528 = vpop.f32.mrf.mxu0
  %529 = vdwg.mxu0
  %v530 = vpack.c.bf16 %v471, %v468
  %v531 = vpack.c.bf16 %v479, %v476
  %v532 = vpack.c.bf16 %v487, %v484
  %v533 = vpack.c.bf16 %v495, %v492
  %v534 = vpack.c.bf16 %v503, %v500
  %v535 = vpack.c.bf16 %v511, %v508
  %v536 = vpack.c.bf16 %v519, %v516
  %v537 = vpack.c.bf16 %v527, %v524
  %v546 = vunpack.c.l.b16 %v530
  %v547 = vunpack.c.h.b16 %v530
  %v548 = vunpack.c.l.b16 %v531
  %v549 = vunpack.c.h.b16 %v531
  %v550 = vunpack.c.l.b16 %v532
  %v551 = vunpack.c.h.b16 %v532
  %v552 = vunpack.c.l.b16 %v533
  %v553 = vunpack.c.h.b16 %v533
  %v554 = vunpack.c.l.b16 %v534
  %v555 = vunpack.c.h.b16 %v534
  %v556 = vunpack.c.l.b16 %v535
  %v557 = vunpack.c.h.b16 %v535
  %v558 = vunpack.c.l.b16 %v536
  %v559 = vunpack.c.h.b16 %v536
  %v560 = vunpack.c.l.b16 %v537
  %v561 = vunpack.c.h.b16 %v537
  %v562 = vpack.c.b16 %v546, %v546
  %v563 = vpack.c.b16 %v547, %v547
  %v564 = vpack.c.b16 %v548, %v548
  %v565 = vpack.c.b16 %v549, %v549
  %v566 = vpack.c.b16 %v550, %v550
  %v567 = vpack.c.b16 %v551, %v551
  %v568 = vpack.c.b16 %v552, %v552
  %v569 = vpack.c.b16 %v553, %v553
  %v570 = vpack.c.b16 %v554, %v554
  %v571 = vpack.c.b16 %v555, %v555
  %v572 = vpack.c.b16 %v556, %v556
  %v573 = vpack.c.b16 %v557, %v557
  %v574 = vpack.c.b16 %v558, %v558
  %v575 = vpack.c.b16 %v559, %v559
  %v576 = vpack.c.b16 %v560, %v560
  %v577 = vpack.c.b16 %v561, %v561
  %vm594 = vcmask 519168
  %595 = vst.msk [vmem:[%s2] sm:$0xf] %vm594, %v562
  %596 = vst.msk [vmem:[%s2 + $0x4] sm:$0xf] %vm594, %v563
  %597 = vst.msk [vmem:[%s2 + $0x8] sm:$0xf] %vm594, %v564
  %598 = vst.msk [vmem:[%s2 + $0xc] sm:$0xf] %vm594, %v565
  %599 = vst.msk [vmem:[%s2 + $0x10] sm:$0xf] %vm594, %v566
  %600 = vst.msk [vmem:[%s2 + $0x14] sm:$0xf] %vm594, %v567
  %601 = vst.msk [vmem:[%s2 + $0x18] sm:$0xf] %vm594, %v568
  %602 = vst.msk [vmem:[%s2 + $0x1c] sm:$0xf] %vm594, %v569
  %603 = vst.msk [vmem:[%s2 + $0x20] sm:$0xf] %vm594, %v570
  %604 = vst.msk [vmem:[%s2 + $0x24] sm:$0xf] %vm594, %v571
  %605 = vst.msk [vmem:[%s2 + $0x28] sm:$0xf] %vm594, %v572
  %606 = vst.msk [vmem:[%s2 + $0x2c] sm:$0xf] %vm594, %v573
  %607 = vst.msk [vmem:[%s2 + $0x30] sm:$0xf] %vm594, %v574
  %608 = vst.msk [vmem:[%s2 + $0x34] sm:$0xf] %vm594, %v575
  %609 = vst.msk [vmem:[%s2 + $0x38] sm:$0xf] %vm594, %v576
  %610 = vst.msk [vmem:[%s2 + $0x3c] sm:$0xf] %vm594, %v577
  %vm611 = vcmask 523264
  %v612 = vsel %vm611, %v468, 0.0
  %v613 = vsel %vm611, %v471, 0.0
  %v614 = vadd.f32 %v612, %v613
  %v615 = vsel %vm611, %v476, 0.0
  %v616 = vadd.f32 %v614, %v615
  %v617 = vsel %vm611, %v479, 0.0
  %v618 = vadd.f32 %v616, %v617
  %v619 = vsel %vm611, %v484, 0.0
  %v620 = vadd.f32 %v618, %v619
  %v621 = vsel %vm611, %v487, 0.0
  %v622 = vadd.f32 %v620, %v621
  %v623 = vsel %vm611, %v492, 0.0
  %v624 = vadd.f32 %v622, %v623
  %v625 = vsel %vm611, %v495, 0.0
  %v626 = vadd.f32 %v624, %v625
  %v627 = vsel %vm611, %v500, 0.0
  %v628 = vadd.f32 %v626, %v627
  %v629 = vsel %vm611, %v503, 0.0
  %v630 = vadd.f32 %v628, %v629
  %v631 = vsel %vm611, %v508, 0.0
  %v632 = vadd.f32 %v630, %v631
  %v633 = vsel %vm611, %v511, 0.0
  %v634 = vadd.f32 %v632, %v633
  %v635 = vsel %vm611, %v516, 0.0
  %v636 = vadd.f32 %v634, %v635
  %v637 = vsel %vm611, %v519, 0.0
  %v638 = vadd.f32 %v636, %v637
  %v639 = vsel %vm611, %v524, 0.0
  %v640 = vadd.f32 %v638, %v639
  %v641 = vsel %vm611, %v527, 0.0
  %v642 = vadd.f32 %v640, %v641
  %v643 = vrot.slane %v642, 4
  %v644 = vadd.f32 %v642, %v643
  %v645 = vrot.slane %v644, 2
  %v646 = vadd.f32 %v644, %v645
  %v647 = vrot.slane %v646, 1
  %v648 = vadd.f32 %v646, %v647
  %649 = vst.msk [vmem:[%s3] sm:$0xff] %vm611, %v648
  %v650 = vmul.f32 %v468, %v468
  %v651 = vmul.f32 %v471, %v471
  %v652 = vmul.f32 %v476, %v476
  %v653 = vmul.f32 %v479, %v479
  %v654 = vmul.f32 %v484, %v484
  %v655 = vmul.f32 %v487, %v487
  %v656 = vmul.f32 %v492, %v492
  %v657 = vmul.f32 %v495, %v495
  %v658 = vmul.f32 %v500, %v500
  %v659 = vmul.f32 %v503, %v503
  %v660 = vmul.f32 %v508, %v508
  %v661 = vmul.f32 %v511, %v511
  %v662 = vmul.f32 %v516, %v516
  %v663 = vmul.f32 %v519, %v519
  %v664 = vmul.f32 %v524, %v524
  %v665 = vmul.f32 %v527, %v527
  %v666 = vsel %vm611, %v650, 0.0
  %v667 = vsel %vm611, %v651, 0.0
  %v668 = vadd.f32 %v666, %v667
  %v669 = vsel %vm611, %v652, 0.0
  %v670 = vadd.f32 %v668, %v669
  %v671 = vsel %vm611, %v653, 0.0
  %v672 = vadd.f32 %v670, %v671
  %v673 = vsel %vm611, %v654, 0.0
  %v674 = vadd.f32 %v672, %v673
  %v675 = vsel %vm611, %v655, 0.0
  %v676 = vadd.f32 %v674, %v675
  %v677 = vsel %vm611, %v656, 0.0
  %v678 = vadd.f32 %v676, %v677
  %v679 = vsel %vm611, %v657, 0.0
  %v680 = vadd.f32 %v678, %v679
  %v681 = vsel %vm611, %v658, 0.0
  %v682 = vadd.f32 %v680, %v681
  %v683 = vsel %vm611, %v659, 0.0
  %v684 = vadd.f32 %v682, %v683
  %v685 = vsel %vm611, %v660, 0.0
  %v686 = vadd.f32 %v684, %v685
  %v687 = vsel %vm611, %v661, 0.0
  %v688 = vadd.f32 %v686, %v687
  %v689 = vsel %vm611, %v662, 0.0
  %v690 = vadd.f32 %v688, %v689
  %v691 = vsel %vm611, %v663, 0.0
  %v692 = vadd.f32 %v690, %v691
  %v693 = vsel %vm611, %v664, 0.0
  %v694 = vadd.f32 %v692, %v693
  %v695 = vsel %vm611, %v665, 0.0
  %v696 = vadd.f32 %v694, %v695
  %v697 = vrot.slane %v696, 4
  %v698 = vadd.f32 %v696, %v697
  %v699 = vrot.slane %v698, 2
  %v700 = vadd.f32 %v698, %v699
  %v701 = vrot.slane %v700, 1
  %v702 = vadd.f32 %v700, %v701
  %703 = vst.msk [vmem:[%s4] sm:$0xff] %vm611, %v702
  // Predicated region
  $region10: #{generator_forward.13} parent=0 // pred_check
    _
  $region11: #{generator_forward.13} parent=0 // pred_check_branch
    %705 = sbr.rel (0) target = $region13
  $region12: #{generator_forward.13} parent=0 // pred_region
    _
  $region13: #{generator_forward.13} parent=0 // pred_fallthru
    _
  // Predicated region
  $region14: #{generator_forward.13} parent=0 // pred_check
    _
  $region15: #{generator_forward.13} parent=0 // pred_check_branch
    %707 = sbr.rel (0) target = $region17
  $region16: #{generator_forward.13} parent=0 // pred_region
    _
  $region17: #{generator_forward.13} parent=0 // pred_fallthru
    _
  // Predicated region
  $region18: #{generator_forward.13} parent=0 // pred_check
    _
  $region19: #{generator_forward.13} parent=0 // pred_check_branch
    %709 = sbr.rel (0) target = $region21
  $region20: #{generator_forward.13} parent=0 // pred_region
    _
  $region21: #{generator_forward.13} parent=0 // pred_fallthru
    _
  // Predicated region
  $region22: #{generator_forward.13} parent=0 // pred_check
    _
  $region23: #{generator_forward.13} parent=0 // pred_check_branch
    %711 = sbr.rel (0) target = $region25
  $region24: #{generator_forward.13} parent=0 // pred_region
    _
  $region25: #{generator_forward.13} parent=0 // pred_fallthru
    _
  // Predicated region
  $region26: #{generator_forward.13} parent=0 // pred_check
    _
  $region27: #{generator_forward.13} parent=0 // pred_check_branch
    %713 = sbr.rel (0) target = $region29
  $region28: #{generator_forward.13} parent=0 // pred_region
    _
  $region29: #{generator_forward.13} parent=0 // pred_fallthru
    _
  // Predicated region
  $region30: #{generator_forward.13} parent=0 // pred_check
    _
  $region31: #{generator_forward.13} parent=0 // pred_check_branch
    %715 = sbr.rel (0) target = $region33
  $region32: #{generator_forward.13} parent=0 // pred_region
    _
  $region33: #{generator_forward.13} parent=0 // pred_fallthru
    _

// kernel: generator_forward.14
$region0: #{generator_forward.14}
  #allocation0 [shape = 'u32[]', space=smem, size = 0x4, offset = 0x4, fixed_abs, tag = 'smem constant byte address 0x4 - core index']
  #allocation1 [shape = 'u32[144,128]{1,0:T(1,128)}', space=vmem, size = 0x12000, scoped, tag = 'internal scratch']
  %s0 = inlined_call_operand.vmem [shape: bf16[128,64], index: 0, kind: input, shape index: {}]
  %s1 = inlined_call_operand.vmem [shape: f32[1,64], index: 1, kind: input, shape index: {}]
  %s2 = inlined_call_operand.vmem [shape: f32[1,64], index: 2, kind: input, shape index: {}]
  %s3 = inlined_call_operand.vmem [shape: bf16[128,64], index: 3, kind: output, shape index: {}]
  %s4 = sld [smem:[#allocation0]]
  $region22: #{generator_forward.14} parent=0
    _
  %s6 = ssub.s32 1, %s4
  %s7 = scalar_select 0, %s6, %s4
  // Predicated region
  $region2: #{generator_forward.14} parent=0 // pred_check
    _
  $region3: #{generator_forward.14} parent=0 // pred_check_branch
    %9 = sbr.rel (0) target = $region5
  $region4: #{generator_forward.14} parent=0 // pred_region
    _
  $region5: #{generator_forward.14} parent=0 // pred_fallthru
    _
  // Predicated region
  $region6: #{generator_forward.14} parent=0 // pred_check
    _
  $region7: #{generator_forward.14} parent=0 // pred_check_branch
    %11 = sbr.rel (0) target = $region9
  $region8: #{generator_forward.14} parent=0 // pred_region
    _
  $region9: #{generator_forward.14} parent=0 // pred_fallthru
    _
  // Predicated region
  $region10: #{generator_forward.14} parent=0 // pred_check
    _
  $region11: #{generator_forward.14} parent=0 // pred_check_branch
    %13 = sbr.rel (0) target = $region13
  $region12: #{generator_forward.14} parent=0 // pred_region
    _
  $region13: #{generator_forward.14} parent=0 // pred_fallthru
    _
  %v14 = vld [vmem:[%s0] sm:$0xf]
  %v15 = vld [vmem:[%s0 + $0x4] sm:$0xf]
  %v16 = vld [vmem:[%s0 + $0x8] sm:$0xf]
  %v17 = vld [vmem:[%s0 + $0xc] sm:$0xf]
  %v18 = vld [vmem:[%s0 + $0x10] sm:$0xf]
  %v19 = vld [vmem:[%s0 + $0x14] sm:$0xf]
  %v20 = vld [vmem:[%s0 + $0x18] sm:$0xf]
  %v21 = vld [vmem:[%s0 + $0x1c] sm:$0xf]
  %v22 = vld [vmem:[%s0 + $0x20] sm:$0xf]
  %v23 = vld [vmem:[%s0 + $0x24] sm:$0xf]
  %v24 = vld [vmem:[%s0 + $0x28] sm:$0xf]
  %v25 = vld [vmem:[%s0 + $0x2c] sm:$0xf]
  %v26 = vld [vmem:[%s0 + $0x30] sm:$0xf]
  %v27 = vld [vmem:[%s0 + $0x34] sm:$0xf]
  %v28 = vld [vmem:[%s0 + $0x38] sm:$0xf]
  %v29 = vld [vmem:[%s0 + $0x3c] sm:$0xf]
  %v30 = vunpack.c.l.bf16 %v14
  %v31 = vunpack.c.l.bf16 %v15
  %v32 = vunpack.c.l.bf16 %v16
  %v33 = vunpack.c.l.bf16 %v17
  %v34 = vunpack.c.l.bf16 %v18
  %v35 = vunpack.c.l.bf16 %v19
  %v36 = vunpack.c.l.bf16 %v20
  %v37 = vunpack.c.l.bf16 %v21
  %v38 = vunpack.c.l.bf16 %v22
  %v39 = vunpack.c.l.bf16 %v23
  %v40 = vunpack.c.l.bf16 %v24
  %v41 = vunpack.c.l.bf16 %v25
  %v42 = vunpack.c.l.bf16 %v26
  %v43 = vunpack.c.l.bf16 %v27
  %v44 = vunpack.c.l.bf16 %v28
  %v45 = vunpack.c.l.bf16 %v29
  %v46 = vld [vmem:[%s1] sm:$0x1]
  %v48 = vlaneseq
  %v49 = vshrl.u32 %v48, 7
  %v50 = vsub.s32 0, %v49
  %v51 = vrot.slane %v46, %v50
  %v53 = vmul.f32 %v30, %v51
  %v54 = vmul.f32 %v31, %v51
  %v55 = vmul.f32 %v32, %v51
  %v56 = vmul.f32 %v33, %v51
  %v57 = vmul.f32 %v34, %v51
  %v58 = vmul.f32 %v35, %v51
  %v59 = vmul.f32 %v36, %v51
  %v60 = vmul.f32 %v37, %v51
  %v61 = vmul.f32 %v38, %v51
  %v62 = vmul.f32 %v39, %v51
  %v63 = vmul.f32 %v40, %v51
  %v64 = vmul.f32 %v41, %v51
  %v65 = vmul.f32 %v42, %v51
  %v66 = vmul.f32 %v43, %v51
  %v67 = vmul.f32 %v44, %v51
  %v68 = vmul.f32 %v45, %v51
  %v69 = vld [vmem:[%s2] sm:$0x1]
  %v71 = vlaneseq
  %v72 = vshrl.u32 %v71, 7
  %v73 = vsub.s32 0, %v72
  %v74 = vrot.slane %v69, %v73
  %v76 = vadd.f32 %v53, %v74
  %v77 = vadd.f32 %v54, %v74
  %v78 = vadd.f32 %v55, %v74
  %v79 = vadd.f32 %v56, %v74
  %v80 = vadd.f32 %v57, %v74
  %v81 = vadd.f32 %v58, %v74
  %v82 = vadd.f32 %v59, %v74
  %v83 = vadd.f32 %v60, %v74
  %v84 = vadd.f32 %v61, %v74
  %v85 = vadd.f32 %v62, %v74
  %v86 = vadd.f32 %v63, %v74
  %v87 = vadd.f32 %v64, %v74
  %v88 = vadd.f32 %v65, %v74
  %v89 = vadd.f32 %v66, %v74
  %v90 = vadd.f32 %v67, %v74
  %v91 = vadd.f32 %v68, %v74
  %v92 = vmax.f32 %v76, 0.0
  %v93 = vmax.f32 %v77, 0.0
  %v94 = vmax.f32 %v78, 0.0
  %v95 = vmax.f32 %v79, 0.0
  %v96 = vmax.f32 %v80, 0.0
  %v97 = vmax.f32 %v81, 0.0
  %v98 = vmax.f32 %v82, 0.0
  %v99 = vmax.f32 %v83, 0.0
  %v100 = vmax.f32 %v84, 0.0
  %v101 = vmax.f32 %v85, 0.0
  %v102 = vmax.f32 %v86, 0.0
  %v103 = vmax.f32 %v87, 0.0
  %v104 = vmax.f32 %v88, 0.0
  %v105 = vmax.f32 %v89, 0.0
  %v106 = vmax.f32 %v90, 0.0
  %v107 = vmax.f32 %v91, 0.0
  %v108 = vpack.c.bf16 %v93, %v92
  %v109 = vpack.c.bf16 %v95, %v94
  %v110 = vpack.c.bf16 %v97, %v96
  %v111 = vpack.c.bf16 %v99, %v98
  %v112 = vpack.c.bf16 %v101, %v100
  %v113 = vpack.c.bf16 %v103, %v102
  %v114 = vpack.c.bf16 %v105, %v104
  %v115 = vpack.c.bf16 %v107, %v106
  %v124 = vunpack.c.l.b16 %v108
  %v125 = vunpack.c.h.b16 %v108
  %v126 = vunpack.c.l.b16 %v109
  %v127 = vunpack.c.h.b16 %v109
  %v128 = vunpack.c.l.b16 %v110
  %v129 = vunpack.c.h.b16 %v110
  %v130 = vunpack.c.l.b16 %v111
  %v131 = vunpack.c.h.b16 %v111
  %v132 = vunpack.c.l.b16 %v112
  %v133 = vunpack.c.h.b16 %v112
  %v134 = vunpack.c.l.b16 %v113
  %v135 = vunpack.c.h.b16 %v113
  %v136 = vunpack.c.l.b16 %v114
  %v137 = vunpack.c.h.b16 %v114
  %v138 = vunpack.c.l.b16 %v115
  %v139 = vunpack.c.h.b16 %v115
  %v140 = vpack.c.b16 %v124, %v124
  %v141 = vpack.c.b16 %v125, %v125
  %v142 = vpack.c.b16 %v126, %v126
  %v143 = vpack.c.b16 %v127, %v127
  %v144 = vpack.c.b16 %v128, %v128
  %v145 = vpack.c.b16 %v129, %v129
  %v146 = vpack.c.b16 %v130, %v130
  %v147 = vpack.c.b16 %v131, %v131
  %v148 = vpack.c.b16 %v132, %v132
  %v149 = vpack.c.b16 %v133, %v133
  %v150 = vpack.c.b16 %v134, %v134
  %v151 = vpack.c.b16 %v135, %v135
  %v152 = vpack.c.b16 %v136, %v136
  %v153 = vpack.c.b16 %v137, %v137
  %v154 = vpack.c.b16 %v138, %v138
  %v155 = vpack.c.b16 %v139, %v139
  %vm172 = vcmask 519168
  %173 = vst.msk [vmem:[%s3] sm:$0xf] %vm172, %v140
  %174 = vst.msk [vmem:[%s3 + $0x4] sm:$0xf] %vm172, %v141
  %175 = vst.msk [vmem:[%s3 + $0x8] sm:$0xf] %vm172, %v142
  %176 = vst.msk [vmem:[%s3 + $0xc] sm:$0xf] %vm172, %v143
  %177 = vst.msk [vmem:[%s3 + $0x10] sm:$0xf] %vm172, %v144
  %178 = vst.msk [vmem:[%s3 + $0x14] sm:$0xf] %vm172, %v145
  %179 = vst.msk [vmem:[%s3 + $0x18] sm:$0xf] %vm172, %v146
  %180 = vst.msk [vmem:[%s3 + $0x1c] sm:$0xf] %vm172, %v147
  %181 = vst.msk [vmem:[%s3 + $0x20] sm:$0xf] %vm172, %v148
  %182 = vst.msk [vmem:[%s3 + $0x24] sm:$0xf] %vm172, %v149
  %183 = vst.msk [vmem:[%s3 + $0x28] sm:$0xf] %vm172, %v150
  %184 = vst.msk [vmem:[%s3 + $0x2c] sm:$0xf] %vm172, %v151
  %185 = vst.msk [vmem:[%s3 + $0x30] sm:$0xf] %vm172, %v152
  %186 = vst.msk [vmem:[%s3 + $0x34] sm:$0xf] %vm172, %v153
  %187 = vst.msk [vmem:[%s3 + $0x38] sm:$0xf] %vm172, %v154
  %188 = vst.msk [vmem:[%s3 + $0x3c] sm:$0xf] %vm172, %v155
  // Predicated region
  $region14: #{generator_forward.14} parent=0 // pred_check
    _
  $region15: #{generator_forward.14} parent=0 // pred_check_branch
    %190 = sbr.rel (0) target = $region17
  $region16: #{generator_forward.14} parent=0 // pred_region
    _
  $region17: #{generator_forward.14} parent=0 // pred_fallthru
    _
  // Predicated region
  $region18: #{generator_forward.14} parent=0 // pred_check
    _
  $region19: #{generator_forward.14} parent=0 // pred_check_branch
    %192 = sbr.rel (0) target = $region21
  $region20: #{generator_forward.14} parent=0 // pred_region
    _
  $region21: #{generator_forward.14} parent=0 // pred_fallthru
    _

// kernel: tile.77
$region0: #{tile.77}
  #allocation0 [shape = 's32[1]{0}', space=sflag, size = 0x4, scoped, tag = 'scoped memory for tile.77']
  %s0 = inlined_call_operand.vmem [shape: f32[8], index: 0, kind: input, shape index: {}]
  %s1 = inlined_call_operand.vmem [shape: f32[4,8], index: 1, kind: output, shape index: {}]
  // Predicated region
  $region2: #{tile.77} parent=0 // pred_check
    _
  $region3: #{tile.77} parent=0 // pred_check_branch
    %3 = sbr.rel (0) target = $region5
  $region4: #{tile.77} parent=0 // pred_region
    _
  $region5: #{tile.77} parent=0 // pred_fallthru
    _
  %v4 = vld [vmem:[%s0] ss:$0 sm:$0xff]
  %5 = vst [vmem:[%s1] sm:$0xf] %v4

// kernel: tile.79
$region0: #{tile.79}
  %s0 = inlined_call_operand.vmem [shape: f32[4,8], index: 0, kind: input, shape index: {}]
  %s1 = inlined_call_operand.vmem [shape: f32[1,32], index: 1, kind: output, shape index: {}]
  $region1: #{tile.79} parent=0
    #allocation0 [shape = 'u8[4096]{0}', space=vmem, size = 0x1000, scoped, tag = 'scoped mem for output reshape']
    #allocation1 [shape = 'u8[4096]{0}', space=vmem, size = 0x1000, scoped, tag = 'scoped mem for input reshape']
    %s3 = sshll.u32 1, 4
    %s4 = ssub.s32 %s3, 1
    %v5 = vld [vmem:[%s0] sm:%s4]
    %6 = vst [vmem:[#allocation1] sm:%s4] %v5
    %v7 = vld [vmem:[#allocation1] sm:$0x1]
    %vm8 = vcmask 64512
    %9 = vst.msk [vmem:[#allocation0] sm:$0x1] %vm8, %v7
    %s10 = scalar_lea.vmem [#allocation1], 3
    %v11 = vld [vmem:[%s10] sm:$0x1]
    %12 = vrot.lane.b32.xlu0 %v11, 24
    %v13 = vpop.permute.xlu0 %12
    %vm14 = vcmask 261312
    %15 = vst.msk [vmem:[#allocation0] sm:$0x1] %vm14, %v13
    %s16 = scalar_lea.vmem [#allocation1], 2
    %v17 = vld [vmem:[%s16] sm:$0x1]
    %18 = vrot.lane.b32.xlu0 %v17, 16
    %v19 = vpop.permute.xlu0 %18
    %vm20 = vcmask 195712
    %21 = vst.msk [vmem:[#allocation0] sm:$0x1] %vm20, %v19
    %s22 = scalar_lea.vmem [#allocation1], 1
    %v23 = vld [vmem:[%s22] sm:$0x1]
    %24 = vrot.lane.b32.xlu0 %v23, 8
    %v25 = vpop.permute.xlu0 %24
    %vm26 = vcmask 130112
    %27 = vst.msk [vmem:[#allocation0] sm:$0x1] %vm26, %v25
    %s29 = sshll.u32 1, 1
    %s30 = ssub.s32 %s29, 1
    %v32 = vld [vmem:[#allocation0] sm:%s30]
    %s33 = sshll.u32 1, 1
    %s34 = ssub.s32 %s33, 1
    %35 = vst [vmem:[%s1] sm:%s34] %v32

// kernel: generator_forward.15
$region0: #{generator_forward.15}
  #allocation0 [shape = 'u32[]', space=smem, size = 0x4, offset = 0x4, fixed_abs, tag = 'smem constant byte address 0x4 - core index']
  #allocation1 [shape = 'u32[144,128]{1,0:T(1,128)}', space=vmem, size = 0x12000, scoped, tag = 'internal scratch']
  %s0 = inlined_call_operand.vmem [shape: bf16[512,144], index: 0, kind: input, shape index: {}]
  %s1 = inlined_call_operand.vmem [shape: bf16[144,32], index: 1, kind: input, shape index: {}]
  %s2 = inlined_call_operand.vmem [shape: bf16[512,32], index: 2, kind: output, shape index: {0}]
  %s3 = inlined_call_operand.vmem [shape: f32[16,32], index: 3, kind: output, shape index: {1}]
  %s4 = inlined_call_operand.vmem [shape: f32[16,32], index: 4, kind: output, shape index: {2}]
  %5 = xla_tuple %s2, %s3, %s4
  %s6 = sld [smem:[#allocation0]]
  $region57: #{generator_forward.15} parent=0
    _
  %s8 = ssub.s32 1, %s6
  %s9 = scalar_select 0, %s8, %s6
  loop: start=0, step=1, limit=4
  $region2: #{generator_forward.15} parent=0 // loop_pre_header
    _
  $region3: #{generator_forward.15} parent=0 // loop_header
    %s11 = sphi 0, %s15
    %p12 = scmp.ge.s32.totalorder %s11, 4
    %s21 = sphi 0, %s23
    %s24 = sphi 0, %s21
    %s25 = sphi 0, %s24
    %s41 = sphi 0, %s25
    %s45 = sphi 0, %s45
    %s47 = sphi 0, %s45
    %s48 = sphi 0, %s47
    %s62 = sphi 0, %s48
    %s68 = sphi 0, %s70
    %s71 = sphi 0, %s68
    %s72 = sphi 0, %s71
    %s88 = sphi 0, %s72
    %s94 = sphi 0, %s96
    %s97 = sphi 0, %s94
    %s98 = sphi 0, %s97
    %s114 = sphi 0, %s98
    %s120 = sphi 0, %s122
    %s123 = sphi 0, %s120
    %s124 = sphi 0, %s123
    %s140 = sphi 0, %s124
  $region4: #{generator_forward.15} parent=0 // loop_header_branch
    %14 = sbr.rel (%p12) target = $region8
  $region5: #{generator_forward.15} parent=0 // loop_body
    %s16 = ssub.s32 %s11, 1
    %s17 = ssub.s32 %s11, 2
    %s18 = sadd.s32 %s11, 1
    %s19 = ssub.s32 %s11, %s18
    %p20 = scmp.eq.s32.totalorder %s19, 0
    %s22 = sadd.s32 %s21, 1
    %s23 = scalar_select %p20, %s21, %s22
    %p26 = pneg %p20
    %p27 = scmp.eq.s32.totalorder %s11, 1
    %p28 = por %p26, %p27
    %p29 = scmp.ne.s32.totalorder %s21, %s24
    %p30 = scmp.eq.s32.totalorder %s11, 0
    %p31 = por %p29, %p30
    %p32 = scmp.ne.s32.totalorder %s21, %s24
    %p33 = scmp.eq.s32.totalorder %s16, 1
    %p34 = por %p32, %p33
    %p35 = scmp.ne.s32.totalorder %s24, %s25
    %p36 = scmp.eq.s32.totalorder %s16, 0
    %p37 = por %p35, %p36
    %p38 = scmp.ne.s32.totalorder %s24, %s25
    %p39 = scmp.eq.s32.totalorder %s17, 1
    %p40 = por %p38, %p39
    %p42 = scmp.ne.s32.totalorder %s25, %s41
    %p43 = scmp.eq.s32.totalorder %s17, 0
    %p44 = por %p42, %p43
    %s46 = sadd.s32 %s45, 1
    %p49 = scmp.eq.s32.totalorder %s11, 1
    %p50 = scmp.ne.s32.totalorder %s45, %s47
    %p51 = scmp.eq.s32.totalorder %s11, 0
    %p52 = por %p50, %p51
    %p53 = scmp.ne.s32.totalorder %s45, %s47
    %p54 = scmp.eq.s32.totalorder %s16, 1
    %p55 = por %p53, %p54
    %p56 = scmp.ne.s32.totalorder %s47, %s48
    %p57 = scmp.eq.s32.totalorder %s16, 0
    %p58 = por %p56, %p57
    %p59 = scmp.ne.s32.totalorder %s47, %s48
    %p60 = scmp.eq.s32.totalorder %s17, 1
    %p61 = por %p59, %p60
    %p63 = scmp.ne.s32.totalorder %s48, %s62
    %p64 = scmp.eq.s32.totalorder %s17, 0
    %p65 = por %p63, %p64
    %s66 = ssub.s32 %s11, %s18
    %p67 = scmp.eq.s32.totalorder %s66, 0
    %s69 = sadd.s32 %s68, 1
    %s70 = scalar_select %p67, %s68, %s69
    %p73 = pneg %p67
    %p74 = scmp.eq.s32.totalorder %s11, 1
    %p75 = por %p73, %p74
    %p76 = scmp.ne.s32.totalorder %s68, %s71
    %p77 = scmp.eq.s32.totalorder %s11, 0
    %p78 = por %p76, %p77
    %p79 = scmp.ne.s32.totalorder %s68, %s71
    %p80 = scmp.eq.s32.totalorder %s16, 1
    %p81 = por %p79, %p80
    %p82 = scmp.ne.s32.totalorder %s71, %s72
    %p83 = scmp.eq.s32.totalorder %s16, 0
    %p84 = por %p82, %p83
    %p85 = scmp.ne.s32.totalorder %s71, %s72
    %p86 = scmp.eq.s32.totalorder %s17, 1
    %p87 = por %p85, %p86
    %p89 = scmp.ne.s32.totalorder %s72, %s88
    %p90 = scmp.eq.s32.totalorder %s17, 0
    %p91 = por %p89, %p90
    %s92 = ssub.s32 %s11, %s18
    %p93 = scmp.eq.s32.totalorder %s92, 0
    %s95 = sadd.s32 %s94, 1
    %s96 = scalar_select %p93, %s94, %s95
    %p99 = pneg %p93
    %p100 = scmp.eq.s32.totalorder %s11, 1
    %p101 = por %p99, %p100
    %p102 = scmp.ne.s32.totalorder %s94, %s97
    %p103 = scmp.eq.s32.totalorder %s11, 0
    %p104 = por %p102, %p103
    %p105 = scmp.ne.s32.totalorder %s94, %s97
    %p106 = scmp.eq.s32.totalorder %s16, 1
    %p107 = por %p105, %p106
    %p108 = scmp.ne.s32.totalorder %s97, %s98
    %p109 = scmp.eq.s32.totalorder %s16, 0
    %p110 = por %p108, %p109
    %p111 = scmp.ne.s32.totalorder %s97, %s98
    %p112 = scmp.eq.s32.totalorder %s17, 1
    %p113 = por %p111, %p112
    %p115 = scmp.ne.s32.totalorder %s98, %s114
    %p116 = scmp.eq.s32.totalorder %s17, 0
    %p117 = por %p115, %p116
    %s118 = ssub.s32 %s11, %s18
    %p119 = scmp.eq.s32.totalorder %s118, 0
    %s121 = sadd.s32 %s120, 1
    %s122 = scalar_select %p119, %s120, %s121
    %p125 = pneg %p119
    %p126 = scmp.eq.s32.totalorder %s11, 1
    %p127 = por %p125, %p126
    %p128 = scmp.ne.s32.totalorder %s120, %s123
    %p129 = scmp.eq.s32.totalorder %s11, 0
    %p130 = por %p128, %p129
    %p131 = scmp.ne.s32.totalorder %s120, %s123
    %p132 = scmp.eq.s32.totalorder %s16, 1
    %p133 = por %p131, %p132
    %p134 = scmp.ne.s32.totalorder %s123, %s124
    %p135 = scmp.eq.s32.totalorder %s16, 0
    %p136 = por %p134, %p135
    %p137 = scmp.ne.s32.totalorder %s123, %s124
    %p138 = scmp.eq.s32.totalorder %s17, 1
    %p139 = por %p137, %p138
    %p141 = scmp.ne.s32.totalorder %s124, %s140
    %p142 = scmp.eq.s32.totalorder %s17, 0
    %p143 = por %p141, %p142
    %p144 = scmp.le.s32.totalorder 1, %s11
    %p145 = scmp.lt.s32.totalorder %s11, 3
    %p146 = pnand %p144, %p145
    %p147 = pneg %p146
    // Predicated region
    $region9: #{generator_forward.15} parent=5 // pred_check
      _
    $region10: #{generator_forward.15} parent=5 // pred_check_branch
      %149 = sbr.rel (%p146) target = $region12
    $region11: #{generator_forward.15} parent=5 // pred_region
      %s150 = ssub.s32 %s11, 1
      // Predicated region
      $region13: #{generator_forward.15} parent=11 // pred_check
        %p151 = pneg %p58
      $region14: #{generator_forward.15} parent=11 // pred_check_branch
        %153 = sbr.rel (%p151) target = $region16
      $region15: #{generator_forward.15} parent=11 // pred_region
        _
      $region16: #{generator_forward.15} parent=11 // pred_fallthru
        _
    $region12: #{generator_forward.15} parent=5 // pred_fallthru
      _
    %p154 = scmp.lt.s32.totalorder %s11, 2
    // Predicated region
    $region17: #{generator_forward.15} parent=5 // pred_check
      %p155 = pneg %p154
    $region18: #{generator_forward.15} parent=5 // pred_check_branch
      %157 = sbr.rel (%p155) target = $region20
    $region19: #{generator_forward.15} parent=5 // pred_region
      // Predicated region
      $region21: #{generator_forward.15} parent=19 // pred_check
        %p158 = pneg %p31
      $region22: #{generator_forward.15} parent=19 // pred_check_branch
        %160 = sbr.rel (%p158) target = $region24
      $region23: #{generator_forward.15} parent=19 // pred_region
        %s161 = smul.u32 32, %s11
        %p162 = scmp.lt.s32.totalorder %s161, 63
        %s163 = scalar_select %p162, %s161, 63
        %s164 = smul.addr %s163, 2
        %s165 = smul.addr %s164, 4
        %s166 = scalar_lea.vmem %s0, %s165
        %s167 = smul.u32 32, %s11
      $region24: #{generator_forward.15} parent=19 // pred_fallthru
        _
    $region20: #{generator_forward.15} parent=5 // pred_fallthru
      _
    %p168 = scmp.le.s32.totalorder 1, %s11
    %p169 = scmp.lt.s32.totalorder %s11, 3
    %p170 = pnand %p168, %p169
    %p171 = pneg %p170
    // Predicated region
    $region25: #{generator_forward.15} parent=5 // pred_check
      _
    $region26: #{generator_forward.15} parent=5 // pred_check_branch
      %173 = sbr.rel (%p170) target = $region28
    $region27: #{generator_forward.15} parent=5 // pred_region
      %s174 = ssub.s32 %s11, 1
      %s175 = smul.u32 32, %s16
      %p176 = scmp.lt.s32.totalorder %s175, 63
      %s177 = scalar_select %p176, %s175, 63
      %s178 = smul.addr %s177, 2
      %s179 = smul.addr %s178, 4
      %s180 = scalar_lea.vmem %s0, %s179
      %p181 = pneg %p37
      %p182 = pneg %p34
      %p183 = pneg %p58
      %p184 = pneg %p55
      %p185 = pneg %p84
      %p186 = pneg %p81
      %s187 = smul.u32 32, %s16
      %p188 = scmp.lt.s32.totalorder %s187, 63
      %s189 = scalar_select %p188, %s187, 63
      %s190 = smul.addr %s189, 4
      %s191 = scalar_lea.vmem %s2, %s190
      %p192 = pneg %p110
      %p193 = pneg %p107
      %p194 = scmp.lt.s32.totalorder %s16, 1
      %s195 = scalar_select %p194, %s16, 1
      %s196 = smul.addr %s195, 8
      %s197 = scalar_lea.vmem %s3, %s196
      %p198 = pneg %p136
      %p199 = pneg %p133
      %p200 = scmp.lt.s32.totalorder %s16, 1
      %s201 = scalar_select %p200, %s16, 1
      %s202 = smul.addr %s201, 8
      %s203 = scalar_lea.vmem %s4, %s202
      %s204 = smul.u32 32, %s16
      %p205 = scmp.lt.s32.totalorder %s204, 63
      %s206 = scalar_select %p205, %s204, 63
      %s207 = smul.addr %s206, 2
      %s208 = smul.addr %s207, 4
      %s209 = scalar_lea.vmem %s0, %s208
      %s210 = smul.u32 32, %s16
      %s211 = smul.u32 32, %s16
      %p212 = scmp.lt.s32.totalorder %s211, 63
      %s213 = scalar_select %p212, %s211, 63
      %s214 = smul.addr %s213, 4
      %s215 = scalar_lea.vmem %s2, %s214
      %s216 = smul.u32 32, %s16
      %p217 = scmp.lt.s32.totalorder %s16, 1
      %s218 = scalar_select %p217, %s16, 1
      %s219 = smul.addr %s218, 8
      %s220 = scalar_lea.vmem %s3, %s219
      %p221 = scmp.lt.s32.totalorder %s16, 1
      %s222 = scalar_select %p221, %s16, 1
      %s223 = smul.addr %s222, 8
      %s224 = scalar_lea.vmem %s4, %s223
      %v226 = vld [vmem:[%s209] sm:$0xff]
      %v227 = vld [vmem:[%s209 + $0x8] sm:$0xff]
      %v228 = vld [vmem:[%s209 + $0x10] sm:$0xff]
      %v229 = vld [vmem:[%s209 + $0x18] sm:$0xff]
      %v230 = vld [vmem:[%s209 + $0x20] sm:$0xff]
      %v231 = vld [vmem:[%s209 + $0x28] sm:$0xff]
      %v232 = vld [vmem:[%s209 + $0x30] sm:$0xff]
      %v233 = vld [vmem:[%s209 + $0x38] sm:$0xff]
      %v234 = vld [vmem:[%s209 + $0x40] sm:$0xff]
      %v235 = vld [vmem:[%s209 + $0x48] sm:$0xff]
      %v236 = vld [vmem:[%s209 + $0x50] sm:$0xff]
      %v237 = vld [vmem:[%s209 + $0x58] sm:$0xff]
      %v238 = vld [vmem:[%s209 + $0x60] sm:$0xff]
      %v239 = vld [vmem:[%s209 + $0x68] sm:$0xff]
      %v240 = vld [vmem:[%s209 + $0x70] sm:$0xff]
      %v241 = vld [vmem:[%s209 + $0x78] sm:$0xff]
      %v242 = vld [vmem:[%s209 + $0x80] sm:$0xff]
      %v243 = vld [vmem:[%s209 + $0x88] sm:$0xff]
      %v244 = vld [vmem:[%s209 + $0x90] sm:$0xff]
      %v245 = vld [vmem:[%s209 + $0x98] sm:$0xff]
      %v246 = vld [vmem:[%s209 + $0xa0] sm:$0xff]
      %v247 = vld [vmem:[%s209 + $0xa8] sm:$0xff]
      %v248 = vld [vmem:[%s209 + $0xb0] sm:$0xff]
      %v249 = vld [vmem:[%s209 + $0xb8] sm:$0xff]
      %v250 = vld [vmem:[%s209 + $0xc0] sm:$0xff]
      %v251 = vld [vmem:[%s209 + $0xc8] sm:$0xff]
      %v252 = vld [vmem:[%s209 + $0xd0] sm:$0xff]
      %v253 = vld [vmem:[%s209 + $0xd8] sm:$0xff]
      %v254 = vld [vmem:[%s209 + $0xe0] sm:$0xff]
      %v255 = vld [vmem:[%s209 + $0xe8] sm:$0xff]
      %v256 = vld [vmem:[%s209 + $0xf0] sm:$0xff]
      %v257 = vld [vmem:[%s209 + $0xf8] sm:$0xff]
      %v258 = vld [vmem:[%s1] sm:$0xf]
      %v259 = vld [vmem:[%s1 + $0x4] sm:$0xf]
      %v260 = vld [vmem:[%s1 + $0x8] sm:$0xf]
      %v261 = vld [vmem:[%s1 + $0xc] sm:$0xf]
      %v262 = vld [vmem:[%s1 + $0x10] sm:$0xf]
      %v263 = vld [vmem:[%s1 + $0x14] sm:$0xf]
      %v264 = vld [vmem:[%s1 + $0x18] sm:$0xf]
      %v265 = vld [vmem:[%s1 + $0x1c] sm:$0xf]
      %v266 = vld [vmem:[%s1 + $0x20] sm:$0xf]
      %v267 = vld [vmem:[%s1 + $0x24] sm:$0xf]
      %v268 = vld [vmem:[%s1 + $0x28] sm:$0xf]
      %v269 = vld [vmem:[%s1 + $0x2c] sm:$0xf]
      %v270 = vld [vmem:[%s1 + $0x30] sm:$0xf]
      %v271 = vld [vmem:[%s1 + $0x34] sm:$0xf]
      %v272 = vld [vmem:[%s1 + $0x38] sm:$0xf]
      %v273 = vld [vmem:[%s1 + $0x3c] sm:$0xf]
      %v274 = vld [vmem:[%s1 + $0x40] sm:$0xf]
      %v275 = vld [vmem:[%s1 + $0x44] sm:$0xf]
      %v308 = vunpack.c.l.b16 %v226
      %v309 = vunpack.c.h.b16 %v226
      %v310 = vunpack.c.l.b16 %v227
      %v311 = vunpack.c.h.b16 %v227
      %v312 = vunpack.c.l.b16 %v228
      %v313 = vunpack.c.h.b16 %v228
      %v314 = vunpack.c.l.b16 %v229
      %v315 = vunpack.c.h.b16 %v229
      %v316 = vunpack.c.l.b16 %v230
      %v317 = vunpack.c.h.b16 %v230
      %v318 = vunpack.c.l.b16 %v231
      %v319 = vunpack.c.h.b16 %v231
      %v320 = vunpack.c.l.b16 %v232
      %v321 = vunpack.c.h.b16 %v232
      %v322 = vunpack.c.l.b16 %v233
      %v323 = vunpack.c.h.b16 %v233
      %v324 = vunpack.c.l.b16 %v234
      %v325 = vunpack.c.h.b16 %v234
      %v326 = vunpack.c.l.b16 %v235
      %v327 = vunpack.c.h.b16 %v235
      %v328 = vunpack.c.l.b16 %v236
      %v329 = vunpack.c.h.b16 %v236
      %v330 = vunpack.c.l.b16 %v237
      %v331 = vunpack.c.h.b16 %v237
      %v332 = vunpack.c.l.b16 %v238
      %v333 = vunpack.c.h.b16 %v238
      %v334 = vunpack.c.l.b16 %v239
      %v335 = vunpack.c.h.b16 %v239
      %v336 = vunpack.c.l.b16 %v240
      %v337 = vunpack.c.h.b16 %v240
      %v338 = vunpack.c.l.b16 %v241
      %v339 = vunpack.c.h.b16 %v241
      %v340 = vunpack.c.l.b16 %v242
      %v341 = vunpack.c.h.b16 %v242
      %v342 = vunpack.c.l.b16 %v243
      %v343 = vunpack.c.h.b16 %v243
      %v344 = vunpack.c.l.b16 %v244
      %v345 = vunpack.c.h.b16 %v244
      %v346 = vunpack.c.l.b16 %v245
      %v347 = vunpack.c.h.b16 %v245
      %v348 = vunpack.c.l.b16 %v246
      %v349 = vunpack.c.h.b16 %v246
      %v350 = vunpack.c.l.b16 %v247
      %v351 = vunpack.c.h.b16 %v247
      %v352 = vunpack.c.l.b16 %v248
      %v353 = vunpack.c.h.b16 %v248
      %v354 = vunpack.c.l.b16 %v249
      %v355 = vunpack.c.h.b16 %v249
      %v356 = vunpack.c.l.b16 %v250
      %v357 = vunpack.c.h.b16 %v250
      %v358 = vunpack.c.l.b16 %v251
      %v359 = vunpack.c.h.b16 %v251
      %v360 = vunpack.c.l.b16 %v252
      %v361 = vunpack.c.h.b16 %v252
      %v362 = vunpack.c.l.b16 %v253
      %v363 = vunpack.c.h.b16 %v253
      %v364 = vunpack.c.l.b16 %v254
      %v365 = vunpack.c.h.b16 %v254
      %v366 = vunpack.c.l.b16 %v255
      %v367 = vunpack.c.h.b16 %v255
      %v368 = vunpack.c.l.b16 %v256
      %v369 = vunpack.c.h.b16 %v256
      %v370 = vunpack.c.l.b16 %v257
      %v371 = vunpack.c.h.b16 %v257
      %v372 = vpack.c.b16 %v310, %v308
      %v373 = vpack.c.b16 %v311, %v309
      %v374 = vpack.c.b16 %v314, %v312
      %v375 = vpack.c.b16 %v315, %v313
      %v376 = vpack.c.b16 %v318, %v316
      %v377 = vpack.c.b16 %v319, %v317
      %v378 = vpack.c.b16 %v322, %v320
      %v379 = vpack.c.b16 %v323, %v321
      %v380 = vpack.c.b16 %v326, %v324
      %v381 = vpack.c.b16 %v327, %v325
      %v382 = vpack.c.b16 %v330, %v328
      %v383 = vpack.c.b16 %v331, %v329
      %v384 = vpack.c.b16 %v334, %v332
      %v385 = vpack.c.b16 %v335, %v333
      %v386 = vpack.c.b16 %v338, %v336
      %v387 = vpack.c.b16 %v339, %v337
      %v388 = vpack.c.b16 %v342, %v340
      %v389 = vpack.c.b16 %v343, %v341
      %v390 = vpack.c.b16 %v346, %v344
      %v391 = vpack.c.b16 %v347, %v345
      %v392 = vpack.c.b16 %v350, %v348
      %v393 = vpack.c.b16 %v351, %v349
      %v394 = vpack.c.b16 %v354, %v352
      %v395 = vpack.c.b16 %v355, %v353
      %v396 = vpack.c.b16 %v358, %v356
      %v397 = vpack.c.b16 %v359, %v357
      %v398 = vpack.c.b16 %v362, %v360
      %v399 = vpack.c.b16 %v363, %v361
      %v400 = vpack.c.b16 %v366, %v364
      %v401 = vpack.c.b16 %v367, %v365
      %v402 = vpack.c.b16 %v370, %v368
      %v403 = vpack.c.b16 %v371, %v369
      %v438 = vunpack.c.l.b16 %v258
      %v439 = vunpack.c.l.b16 %v259
      %v440 = vunpack.c.l.b16 %v260
      %v441 = vunpack.c.l.b16 %v261
      %v442 = vunpack.c.l.b16 %v262
      %v443 = vunpack.c.l.b16 %v263
      %v444 = vunpack.c.l.b16 %v264
      %v445 = vunpack.c.l.b16 %v265
      %v446 = vunpack.c.l.b16 %v266
      %v447 = vunpack.c.l.b16 %v267
      %v448 = vunpack.c.l.b16 %v268
      %v449 = vunpack.c.l.b16 %v269
      %v450 = vunpack.c.l.b16 %v270
      %v451 = vunpack.c.l.b16 %v271
      %v452 = vunpack.c.l.b16 %v272
      %v453 = vunpack.c.l.b16 %v273
      %v454 = vunpack.c.l.b16 %v274
      %v455 = vunpack.c.l.b16 %v275
      %v456 = vpack.c.b16 %v439, %v438
      %v457 = vpack.c.b16 %v441, %v440
      %v458 = vpack.c.b16 %v443, %v442
      %v459 = vpack.c.b16 %v445, %v444
      %v460 = vpack.c.b16 %v447, %v446
      %v461 = vpack.c.b16 %v449, %v448
      %v462 = vpack.c.b16 %v451, %v450
      %v463 = vpack.c.b16 %v453, %v452
      %v464 = vpack.c.b16 %v455, %v454
      %vm474 = vcmask 130048
      %v476 = vsel %vm474, %v373, 0
      %v479 = vsel %vm474, %v375, 0
      %v482 = vsel %vm474, %v377, 0
      %v485 = vsel %vm474, %v379, 0
      %v488 = vsel %vm474, %v381, 0
      %v491 = vsel %vm474, %v383, 0
      %v494 = vsel %vm474, %v385, 0
      %v497 = vsel %vm474, %v387, 0
      %v500 = vsel %vm474, %v389, 0
      %v503 = vsel %vm474, %v391, 0
      %v506 = vsel %vm474, %v393, 0
      %v509 = vsel %vm474, %v395, 0
      %v512 = vsel %vm474, %v397, 0
      %v515 = vsel %vm474, %v399, 0
      %v518 = vsel %vm474, %v401, 0
      %v521 = vsel %vm474, %v403, 0
      %523 = vmatprep.subr.bf16.mxu0 0
      %524 = vmatpush1.bf16.msra.mxu0 %v463
      %525 = vmatprep.subr.bf16.mxu0 0
      %526 = vmatpush1.bf16.msra.mxu0 %v462
      %527 = vmatprep.subr.bf16.mxu0 0
      %528 = vmatpush1.bf16.msra.mxu0 %v461
      %529 = vmatprep.subr.bf16.mxu0 0
      %530 = vmatpush1.bf16.msra.mxu0 %v460
      %531 = vmatprep.subr.bf16.mxu0 0
      %532 = vmatpush1.bf16.msra.mxu0 %v459
      %533 = vmatprep.subr.bf16.mxu0 0
      %534 = vmatpush1.bf16.msra.mxu0 %v458
      %535 = vmatprep.subr.bf16.mxu0 0
      %536 = vmatpush1.bf16.msra.mxu0 %v457
      %537 = vmatprep.subr.bf16.mxu0 0
      %538 = vmatpush1.bf16.msra.mxu0 %v456
      %539 = vmatprep.subr.bf16.mxu0 0
      %540 = vmatpush2.bf16.msra.mxu0 0
      %541 = vmatprep.subr.bf16.mxu0 0
      %542 = vmatpush2.bf16.msra.mxu0 0
      %543 = vmatprep.subr.bf16.mxu0 0
      %544 = vmatpush2.bf16.msra.mxu0 0
      %545 = vmatprep.subr.bf16.mxu0 0
      %546 = vmatpush2.bf16.msra.mxu0 0
      %547 = vmatprep.subr.bf16.mxu0 0
      %548 = vmatpush2.bf16.msra.mxu0 0
      %549 = vmatprep.subr.bf16.mxu0 0
      %550 = vmatpush2.bf16.msra.mxu0 0
      %551 = vmatprep.subr.bf16.mxu0 0
      %552 = vmatpush2.bf16.msra.mxu0 0
      %553 = vmatprep.subr.bf16.mxu0 0
      %554 = vmatpush2.bf16.msra.mxu0 %v464
      %555 = vmatprep.mubr.bf16.mxu0 %v476
      %556 = vmatmul.mubr.bf16.gmra.mxu0 %v372
      %v557 = vpop.f32.mrf.mxu0
      %v558 = vadd.f32 0.0, %v557
      %v559 = vpop.f32.mrf.mxu0
      %v560 = vpop.f32.mrf.mxu0
      %v561 = vadd.f32 0.0, %v560
      %v562 = vpop.f32.mrf.mxu0
      %563 = vmatprep.mubr.bf16.mxu0 %v479
      %564 = vmatmul.mubr.bf16.gmra.mxu0 %v374
      %v565 = vpop.f32.mrf.mxu0
      %v566 = vadd.f32 0.0, %v565
      %v567 = vpop.f32.mrf.mxu0
      %v568 = vpop.f32.mrf.mxu0
      %v569 = vadd.f32 0.0, %v568
      %v570 = vpop.f32.mrf.mxu0
      %571 = vmatprep.mubr.bf16.mxu0 %v482
      %572 = vmatmul.mubr.bf16.gmra.mxu0 %v376
      %v573 = vpop.f32.mrf.mxu0
      %v574 = vadd.f32 0.0, %v573
      %v575 = vpop.f32.mrf.mxu0
      %v576 = vpop.f32.mrf.mxu0
      %v577 = vadd.f32 0.0, %v576
      %v578 = vpop.f32.mrf.mxu0
      %579 = vmatprep.mubr.bf16.mxu0 %v485
      %580 = vmatmul.mubr.bf16.gmra.mxu0 %v378
      %v581 = vpop.f32.mrf.mxu0
      %v582 = vadd.f32 0.0, %v581
      %v583 = vpop.f32.mrf.mxu0
      %v584 = vpop.f32.mrf.mxu0
      %v585 = vadd.f32 0.0, %v584
      %v586 = vpop.f32.mrf.mxu0
      %587 = vmatprep.mubr.bf16.mxu0 %v488
      %588 = vmatmul.mubr.bf16.gmra.mxu0 %v380
      %v589 = vpop.f32.mrf.mxu0
      %v590 = vadd.f32 0.0, %v589
      %v591 = vpop.f32.mrf.mxu0
      %v592 = vpop.f32.mrf.mxu0
      %v593 = vadd.f32 0.0, %v592
      %v594 = vpop.f32.mrf.mxu0
      %595 = vmatprep.mubr.bf16.mxu0 %v491
      %596 = vmatmul.mubr.bf16.gmra.mxu0 %v382
      %v597 = vpop.f32.mrf.mxu0
      %v598 = vadd.f32 0.0, %v597
      %v599 = vpop.f32.mrf.mxu0
      %v600 = vpop.f32.mrf.mxu0
      %v601 = vadd.f32 0.0, %v600
      %v602 = vpop.f32.mrf.mxu0
      %603 = vmatprep.mubr.bf16.mxu0 %v494
      %604 = vmatmul.mubr.bf16.gmra.mxu0 %v384
      %v605 = vpop.f32.mrf.mxu0
      %v606 = vadd.f32 0.0, %v605
      %v607 = vpop.f32.mrf.mxu0
      %v608 = vpop.f32.mrf.mxu0
      %v609 = vadd.f32 0.0, %v608
      %v610 = vpop.f32.mrf.mxu0
      %611 = vmatprep.mubr.bf16.mxu0 %v497
      %612 = vmatmul.mubr.bf16.gmra.mxu0 %v386
      %v613 = vpop.f32.mrf.mxu0
      %v614 = vadd.f32 0.0, %v613
      %v615 = vpop.f32.mrf.mxu0
      %v616 = vpop.f32.mrf.mxu0
      %v617 = vadd.f32 0.0, %v616
      %v618 = vpop.f32.mrf.mxu0
      %619 = vmatprep.mubr.bf16.mxu0 %v500
      %620 = vmatmul.mubr.bf16.gmra.mxu0 %v388
      %v621 = vpop.f32.mrf.mxu0
      %v622 = vadd.f32 0.0, %v621
      %v623 = vpop.f32.mrf.mxu0
      %v624 = vpop.f32.mrf.mxu0
      %v625 = vadd.f32 0.0, %v624
      %v626 = vpop.f32.mrf.mxu0
      %627 = vmatprep.mubr.bf16.mxu0 %v503
      %628 = vmatmul.mubr.bf16.gmra.mxu0 %v390
      %v629 = vpop.f32.mrf.mxu0
      %v630 = vadd.f32 0.0, %v629
      %v631 = vpop.f32.mrf.mxu0
      %v632 = vpop.f32.mrf.mxu0
      %v633 = vadd.f32 0.0, %v632
      %v634 = vpop.f32.mrf.mxu0
      %635 = vmatprep.mubr.bf16.mxu0 %v506
      %636 = vmatmul.mubr.bf16.gmra.mxu0 %v392
      %v637 = vpop.f32.mrf.mxu0
      %v638 = vadd.f32 0.0, %v637
      %v639 = vpop.f32.mrf.mxu0
      %v640 = vpop.f32.mrf.mxu0
      %v641 = vadd.f32 0.0, %v640
      %v642 = vpop.f32.mrf.mxu0
      %643 = vmatprep.mubr.bf16.mxu0 %v509
      %644 = vmatmul.mubr.bf16.gmra.mxu0 %v394
      %v645 = vpop.f32.mrf.mxu0
      %v646 = vadd.f32 0.0, %v645
      %v647 = vpop.f32.mrf.mxu0
      %v648 = vpop.f32.mrf.mxu0
      %v649 = vadd.f32 0.0, %v648
      %v650 = vpop.f32.mrf.mxu0
      %651 = vmatprep.mubr.bf16.mxu0 %v512
      %652 = vmatmul.mubr.bf16.gmra.mxu0 %v396
      %v653 = vpop.f32.mrf.mxu0
      %v654 = vadd.f32 0.0, %v653
      %v655 = vpop.f32.mrf.mxu0
      %v656 = vpop.f32.mrf.mxu0
      %v657 = vadd.f32 0.0, %v656
      %v658 = vpop.f32.mrf.mxu0
      %659 = vmatprep.mubr.bf16.mxu0 %v515
      %660 = vmatmul.mubr.bf16.gmra.mxu0 %v398
      %v661 = vpop.f32.mrf.mxu0
      %v662 = vadd.f32 0.0, %v661
      %v663 = vpop.f32.mrf.mxu0
      %v664 = vpop.f32.mrf.mxu0
      %v665 = vadd.f32 0.0, %v664
      %v666 = vpop.f32.mrf.mxu0
      %667 = vmatprep.mubr.bf16.mxu0 %v518
      %668 = vmatmul.mubr.bf16.gmra.mxu0 %v400
      %v669 = vpop.f32.mrf.mxu0
      %v670 = vadd.f32 0.0, %v669
      %v671 = vpop.f32.mrf.mxu0
      %v672 = vpop.f32.mrf.mxu0
      %v673 = vadd.f32 0.0, %v672
      %v674 = vpop.f32.mrf.mxu0
      %675 = vmatprep.mubr.bf16.mxu0 %v521
      %676 = vmatmul.mubr.bf16.gmra.mxu0 %v402
      %v677 = vpop.f32.mrf.mxu0
      %v678 = vadd.f32 0.0, %v677
      %v679 = vpop.f32.mrf.mxu0
      %v680 = vpop.f32.mrf.mxu0
      %v681 = vadd.f32 0.0, %v680
      %v682 = vpop.f32.mrf.mxu0
      %683 = vdwg.mxu0
      %v684 = vpack.c.bf16 %v561, %v558
      %v685 = vpack.c.bf16 %v569, %v566
      %v686 = vpack.c.bf16 %v577, %v574
      %v687 = vpack.c.bf16 %v585, %v582
      %v688 = vpack.c.bf16 %v593, %v590
      %v689 = vpack.c.bf16 %v601, %v598
      %v690 = vpack.c.bf16 %v609, %v606
      %v691 = vpack.c.bf16 %v617, %v614
      %v692 = vpack.c.bf16 %v625, %v622
      %v693 = vpack.c.bf16 %v633, %v630
      %v694 = vpack.c.bf16 %v641, %v638
      %v695 = vpack.c.bf16 %v649, %v646
      %v696 = vpack.c.bf16 %v657, %v654
      %v697 = vpack.c.bf16 %v665, %v662
      %v698 = vpack.c.bf16 %v673, %v670
      %v699 = vpack.c.bf16 %v681, %v678
      %v716 = vunpack.c.l.b16 %v684
      %v717 = vunpack.c.h.b16 %v684
      %v718 = vunpack.c.l.b16 %v685
      %v719 = vunpack.c.h.b16 %v685
      %v720 = vunpack.c.l.b16 %v686
      %v721 = vunpack.c.h.b16 %v686
      %v722 = vunpack.c.l.b16 %v687
      %v723 = vunpack.c.h.b16 %v687
      %v724 = vunpack.c.l.b16 %v688
      %v725 = vunpack.c.h.b16 %v688
      %v726 = vunpack.c.l.b16 %v689
      %v727 = vunpack.c.h.b16 %v689
      %v728 = vunpack.c.l.b16 %v690
      %v729 = vunpack.c.h.b16 %v690
      %v730 = vunpack.c.l.b16 %v691
      %v731 = vunpack.c.h.b16 %v691
      %v732 = vunpack.c.l.b16 %v692
      %v733 = vunpack.c.h.b16 %v692
      %v734 = vunpack.c.l.b16 %v693
      %v735 = vunpack.c.h.b16 %v693
      %v736 = vunpack.c.l.b16 %v694
      %v737 = vunpack.c.h.b16 %v694
      %v738 = vunpack.c.l.b16 %v695
      %v739 = vunpack.c.h.b16 %v695
      %v740 = vunpack.c.l.b16 %v696
      %v741 = vunpack.c.h.b16 %v696
      %v742 = vunpack.c.l.b16 %v697
      %v743 = vunpack.c.h.b16 %v697
      %v744 = vunpack.c.l.b16 %v698
      %v745 = vunpack.c.h.b16 %v698
      %v746 = vunpack.c.l.b16 %v699
      %v747 = vunpack.c.h.b16 %v699
      %v748 = vpack.c.b16 %v716, %v716
      %v749 = vpack.c.b16 %v717, %v717
      %v750 = vpack.c.b16 %v718, %v718
      %v751 = vpack.c.b16 %v719, %v719
      %v752 = vpack.c.b16 %v720, %v720
      %v753 = vpack.c.b16 %v721, %v721
      %v754 = vpack.c.b16 %v722, %v722
      %v755 = vpack.c.b16 %v723, %v723
      %v756 = vpack.c.b16 %v724, %v724
      %v757 = vpack.c.b16 %v725, %v725
      %v758 = vpack.c.b16 %v726, %v726
      %v759 = vpack.c.b16 %v727, %v727
      %v760 = vpack.c.b16 %v728, %v728
      %v761 = vpack.c.b16 %v729, %v729
      %v762 = vpack.c.b16 %v730, %v730
      %v763 = vpack.c.b16 %v731, %v731
      %v764 = vpack.c.b16 %v732, %v732
      %v765 = vpack.c.b16 %v733, %v733
      %v766 = vpack.c.b16 %v734, %v734
      %v767 = vpack.c.b16 %v735, %v735
      %v768 = vpack.c.b16 %v736, %v736
      %v769 = vpack.c.b16 %v737, %v737
      %v770 = vpack.c.b16 %v738, %v738
      %v771 = vpack.c.b16 %v739, %v739
      %v772 = vpack.c.b16 %v740, %v740
      %v773 = vpack.c.b16 %v741, %v741
      %v774 = vpack.c.b16 %v742, %v742
      %v775 = vpack.c.b16 %v743, %v743
      %v776 = vpack.c.b16 %v744, %v744
      %v777 = vpack.c.b16 %v745, %v745
      %v778 = vpack.c.b16 %v746, %v746
      %v779 = vpack.c.b16 %v747, %v747
      %vm812 = vcmask 257024
      %813 = vst.msk [vmem:[%s215] sm:$0xf] %vm812, %v748
      %814 = vst.msk [vmem:[%s215 + $0x4] sm:$0xf] %vm812, %v749
      %815 = vst.msk [vmem:[%s215 + $0x8] sm:$0xf] %vm812, %v750
      %816 = vst.msk [vmem:[%s215 + $0xc] sm:$0xf] %vm812, %v751
      %817 = vst.msk [vmem:[%s215 + $0x10] sm:$0xf] %vm812, %v752
      %818 = vst.msk [vmem:[%s215 + $0x14] sm:$0xf] %vm812, %v753
      %819 = vst.msk [vmem:[%s215 + $0x18] sm:$0xf] %vm812, %v754
      %820 = vst.msk [vmem:[%s215 + $0x1c] sm:$0xf] %vm812, %v755
      %821 = vst.msk [vmem:[%s215 + $0x20] sm:$0xf] %vm812, %v756
      %822 = vst.msk [vmem:[%s215 + $0x24] sm:$0xf] %vm812, %v757
      %823 = vst.msk [vmem:[%s215 + $0x28] sm:$0xf] %vm812, %v758
      %824 = vst.msk [vmem:[%s215 + $0x2c] sm:$0xf] %vm812, %v759
      %825 = vst.msk [vmem:[%s215 + $0x30] sm:$0xf] %vm812, %v760
      %826 = vst.msk [vmem:[%s215 + $0x34] sm:$0xf] %vm812, %v761
      %827 = vst.msk [vmem:[%s215 + $0x38] sm:$0xf] %vm812, %v762
      %828 = vst.msk [vmem:[%s215 + $0x3c] sm:$0xf] %vm812, %v763
      %829 = vst.msk [vmem:[%s215 + $0x40] sm:$0xf] %vm812, %v764
      %830 = vst.msk [vmem:[%s215 + $0x44] sm:$0xf] %vm812, %v765
      %831 = vst.msk [vmem:[%s215 + $0x48] sm:$0xf] %vm812, %v766
      %832 = vst.msk [vmem:[%s215 + $0x4c] sm:$0xf] %vm812, %v767
      %833 = vst.msk [vmem:[%s215 + $0x50] sm:$0xf] %vm812, %v768
      %834 = vst.msk [vmem:[%s215 + $0x54] sm:$0xf] %vm812, %v769
      %835 = vst.msk [vmem:[%s215 + $0x58] sm:$0xf] %vm812, %v770
      %836 = vst.msk [vmem:[%s215 + $0x5c] sm:$0xf] %vm812, %v771
      %837 = vst.msk [vmem:[%s215 + $0x60] sm:$0xf] %vm812, %v772
      %838 = vst.msk [vmem:[%s215 + $0x64] sm:$0xf] %vm812, %v773
      %839 = vst.msk [vmem:[%s215 + $0x68] sm:$0xf] %vm812, %v774
      %840 = vst.msk [vmem:[%s215 + $0x6c] sm:$0xf] %vm812, %v775
      %841 = vst.msk [vmem:[%s215 + $0x70] sm:$0xf] %vm812, %v776
      %842 = vst.msk [vmem:[%s215 + $0x74] sm:$0xf] %vm812, %v777
      %843 = vst.msk [vmem:[%s215 + $0x78] sm:$0xf] %vm812, %v778
      %844 = vst.msk [vmem:[%s215 + $0x7c] sm:$0xf] %vm812, %v779
      %vm845 = vcmask 261120
      %v846 = vsel %vm845, %v558, 0.0
      %v847 = vsel %vm845, %v561, 0.0
      %v848 = vadd.f32 %v846, %v847
      %v849 = vsel %vm845, %v566, 0.0
      %v850 = vadd.f32 %v848, %v849
      %v851 = vsel %vm845, %v569, 0.0
      %v852 = vadd.f32 %v850, %v851
      %v853 = vsel %vm845, %v574, 0.0
      %v854 = vadd.f32 %v852, %v853
      %v855 = vsel %vm845, %v577, 0.0
      %v856 = vadd.f32 %v854, %v855
      %v857 = vsel %vm845, %v582, 0.0
      %v858 = vadd.f32 %v856, %v857
      %v859 = vsel %vm845, %v585, 0.0
      %v860 = vadd.f32 %v858, %v859
      %v861 = vsel %vm845, %v590, 0.0
      %v862 = vadd.f32 %v860, %v861
      %v863 = vsel %vm845, %v593, 0.0
      %v864 = vadd.f32 %v862, %v863
      %v865 = vsel %vm845, %v598, 0.0
      %v866 = vadd.f32 %v864, %v865
      %v867 = vsel %vm845, %v601, 0.0
      %v868 = vadd.f32 %v866, %v867
      %v869 = vsel %vm845, %v606, 0.0
      %v870 = vadd.f32 %v868, %v869
      %v871 = vsel %vm845, %v609, 0.0
      %v872 = vadd.f32 %v870, %v871
      %v873 = vsel %vm845, %v614, 0.0
      %v874 = vadd.f32 %v872, %v873
      %v875 = vsel %vm845, %v617, 0.0
      %v876 = vadd.f32 %v874, %v875
      %v877 = vsel %vm845, %v622, 0.0
      %v878 = vadd.f32 %v876, %v877
      %v879 = vsel %vm845, %v625, 0.0
      %v880 = vadd.f32 %v878, %v879
      %v881 = vsel %vm845, %v630, 0.0
      %v882 = vadd.f32 %v880, %v881
      %v883 = vsel %vm845, %v633, 0.0
      %v884 = vadd.f32 %v882, %v883
      %v885 = vsel %vm845, %v638, 0.0
      %v886 = vadd.f32 %v884, %v885
      %v887 = vsel %vm845, %v641, 0.0
      %v888 = vadd.f32 %v886, %v887
      %v889 = vsel %vm845, %v646, 0.0
      %v890 = vadd.f32 %v888, %v889
      %v891 = vsel %vm845, %v649, 0.0
      %v892 = vadd.f32 %v890, %v891
      %v893 = vsel %vm845, %v654, 0.0
      %v894 = vadd.f32 %v892, %v893
      %v895 = vsel %vm845, %v657, 0.0
      %v896 = vadd.f32 %v894, %v895
      %v897 = vsel %vm845, %v662, 0.0
      %v898 = vadd.f32 %v896, %v897
      %v899 = vsel %vm845, %v665, 0.0
      %v900 = vadd.f32 %v898, %v899
      %v901 = vsel %vm845, %v670, 0.0
      %v902 = vadd.f32 %v900, %v901
      %v903 = vsel %vm845, %v673, 0.0
      %v904 = vadd.f32 %v902, %v903
      %v905 = vsel %vm845, %v678, 0.0
      %v906 = vadd.f32 %v904, %v905
      %v907 = vsel %vm845, %v681, 0.0
      %v908 = vadd.f32 %v906, %v907
      %v909 = vrot.slane %v908, 4
      %v910 = vadd.f32 %v908, %v909
      %v911 = vrot.slane %v910, 2
      %v912 = vadd.f32 %v910, %v911
      %v913 = vrot.slane %v912, 1
      %v914 = vadd.f32 %v912, %v913
      %915 = vst.msk [vmem:[%s220] sm:$0xff] %vm845, %v914
      %v916 = vmul.f32 %v558, %v558
      %v917 = vmul.f32 %v561, %v561
      %v918 = vmul.f32 %v566, %v566
      %v919 = vmul.f32 %v569, %v569
      %v920 = vmul.f32 %v574, %v574
      %v921 = vmul.f32 %v577, %v577
      %v922 = vmul.f32 %v582, %v582
      %v923 = vmul.f32 %v585, %v585
      %v924 = vmul.f32 %v590, %v590
      %v925 = vmul.f32 %v593, %v593
      %v926 = vmul.f32 %v598, %v598
      %v927 = vmul.f32 %v601, %v601
      %v928 = vmul.f32 %v606, %v606
      %v929 = vmul.f32 %v609, %v609
      %v930 = vmul.f32 %v614, %v614
      %v931 = vmul.f32 %v617, %v617
      %v932 = vmul.f32 %v622, %v622
      %v933 = vmul.f32 %v625, %v625
      %v934 = vmul.f32 %v630, %v630
      %v935 = vmul.f32 %v633, %v633
      %v936 = vmul.f32 %v638, %v638
      %v937 = vmul.f32 %v641, %v641
      %v938 = vmul.f32 %v646, %v646
      %v939 = vmul.f32 %v649, %v649
      %v940 = vmul.f32 %v654, %v654
      %v941 = vmul.f32 %v657, %v657
      %v942 = vmul.f32 %v662, %v662
      %v943 = vmul.f32 %v665, %v665
      %v944 = vmul.f32 %v670, %v670
      %v945 = vmul.f32 %v673, %v673
      %v946 = vmul.f32 %v678, %v678
      %v947 = vmul.f32 %v681, %v681
      %v948 = vsel %vm845, %v916, 0.0
      %v949 = vsel %vm845, %v917, 0.0
      %v950 = vadd.f32 %v948, %v949
      %v951 = vsel %vm845, %v918, 0.0
      %v952 = vadd.f32 %v950, %v951
      %v953 = vsel %vm845, %v919, 0.0
      %v954 = vadd.f32 %v952, %v953
      %v955 = vsel %vm845, %v920, 0.0
      %v956 = vadd.f32 %v954, %v955
      %v957 = vsel %vm845, %v921, 0.0
      %v958 = vadd.f32 %v956, %v957
      %v959 = vsel %vm845, %v922, 0.0
      %v960 = vadd.f32 %v958, %v959
      %v961 = vsel %vm845, %v923, 0.0
      %v962 = vadd.f32 %v960, %v961
      %v963 = vsel %vm845, %v924, 0.0
      %v964 = vadd.f32 %v962, %v963
      %v965 = vsel %vm845, %v925, 0.0
      %v966 = vadd.f32 %v964, %v965
      %v967 = vsel %vm845, %v926, 0.0
      %v968 = vadd.f32 %v966, %v967
      %v969 = vsel %vm845, %v927, 0.0
      %v970 = vadd.f32 %v968, %v969
      %v971 = vsel %vm845, %v928, 0.0
      %v972 = vadd.f32 %v970, %v971
      %v973 = vsel %vm845, %v929, 0.0
      %v974 = vadd.f32 %v972, %v973
      %v975 = vsel %vm845, %v930, 0.0
      %v976 = vadd.f32 %v974, %v975
      %v977 = vsel %vm845, %v931, 0.0
      %v978 = vadd.f32 %v976, %v977
      %v979 = vsel %vm845, %v932, 0.0
      %v980 = vadd.f32 %v978, %v979
      %v981 = vsel %vm845, %v933, 0.0
      %v982 = vadd.f32 %v980, %v981
      %v983 = vsel %vm845, %v934, 0.0
      %v984 = vadd.f32 %v982, %v983
      %v985 = vsel %vm845, %v935, 0.0
      %v986 = vadd.f32 %v984, %v985
      %v987 = vsel %vm845, %v936, 0.0
      %v988 = vadd.f32 %v986, %v987
      %v989 = vsel %vm845, %v937, 0.0
      %v990 = vadd.f32 %v988, %v989
      %v991 = vsel %vm845, %v938, 0.0
      %v992 = vadd.f32 %v990, %v991
      %v993 = vsel %vm845, %v939, 0.0
      %v994 = vadd.f32 %v992, %v993
      %v995 = vsel %vm845, %v940, 0.0
      %v996 = vadd.f32 %v994, %v995
      %v997 = vsel %vm845, %v941, 0.0
      %v998 = vadd.f32 %v996, %v997
      %v999 = vsel %vm845, %v942, 0.0
      %v1000 = vadd.f32 %v998, %v999
      %v1001 = vsel %vm845, %v943, 0.0
      %v1002 = vadd.f32 %v1000, %v1001
      %v1003 = vsel %vm845, %v944, 0.0
      %v1004 = vadd.f32 %v1002, %v1003
      %v1005 = vsel %vm845, %v945, 0.0
      %v1006 = vadd.f32 %v1004, %v1005
      %v1007 = vsel %vm845, %v946, 0.0
      %v1008 = vadd.f32 %v1006, %v1007
      %v1009 = vsel %vm845, %v947, 0.0
      %v1010 = vadd.f32 %v1008, %v1009
      %v1011 = vrot.slane %v1010, 4
      %v1012 = vadd.f32 %v1010, %v1011
      %v1013 = vrot.slane %v1012, 2
      %v1014 = vadd.f32 %v1012, %v1013
      %v1015 = vrot.slane %v1014, 1
      %v1016 = vadd.f32 %v1014, %v1015
      %1017 = vst.msk [vmem:[%s224] sm:$0xff] %vm845, %v1016
      %s1018 = smul.u32 32, %s16
      %p1019 = scmp.lt.s32.totalorder %s1018, 63
      %s1020 = scalar_select %p1019, %s1018, 63
      %s1021 = smul.addr %s1020, 4
      %s1022 = scalar_lea.vmem %s2, %s1021
      %p1023 = scmp.lt.s32.totalorder %s16, 1
      %s1024 = scalar_select %p1023, %s16, 1
      %s1025 = smul.addr %s1024, 8
      %s1026 = scalar_lea.vmem %s3, %s1025
      %p1027 = scmp.lt.s32.totalorder %s16, 1
      %s1028 = scalar_select %p1027, %s16, 1
      %s1029 = smul.addr %s1028, 8
      %s1030 = scalar_lea.vmem %s4, %s1029
      // Predicated region
      $region29: #{generator_forward.15} parent=27 // pred_check
        %p1031 = pneg %p81
      $region30: #{generator_forward.15} parent=27 // pred_check_branch
        %1033 = sbr.rel (%p1031) target = $region32
      $region31: #{generator_forward.15} parent=27 // pred_region
        %s1034 = smul.u32 32, %s16
      $region32: #{generator_forward.15} parent=27 // pred_fallthru
        _
      // Predicated region
      $region33: #{generator_forward.15} parent=27 // pred_check
        %p1035 = pneg %p107
      $region34: #{generator_forward.15} parent=27 // pred_check_branch
        %1037 = sbr.rel (%p1035) target = $region36
      $region35: #{generator_forward.15} parent=27 // pred_region
        _
      $region36: #{generator_forward.15} parent=27 // pred_fallthru
        _
      // Predicated region
      $region37: #{generator_forward.15} parent=27 // pred_check
        %p1038 = pneg %p133
      $region38: #{generator_forward.15} parent=27 // pred_check_branch
        %1040 = sbr.rel (%p1038) target = $region40
      $region39: #{generator_forward.15} parent=27 // pred_region
        _
      $region40: #{generator_forward.15} parent=27 // pred_fallthru
        _
    $region28: #{generator_forward.15} parent=5 // pred_fallthru
      _
    %p1041 = scmp.le.s32.totalorder 2, %s11
    // Predicated region
    $region41: #{generator_forward.15} parent=5 // pred_check
      %p1042 = pneg %p1041
    $region42: #{generator_forward.15} parent=5 // pred_check_branch
      %1044 = sbr.rel (%p1042) target = $region44
    $region43: #{generator_forward.15} parent=5 // pred_region
      %s1045 = ssub.s32 %s11, 2
      // Predicated region
      $region45: #{generator_forward.15} parent=43 // pred_check
        %p1046 = pneg %p87
      $region46: #{generator_forward.15} parent=43 // pred_check_branch
        %1048 = sbr.rel (%p1046) target = $region48
      $region47: #{generator_forward.15} parent=43 // pred_region
        %s1049 = smul.u32 32, %s17
        %p1050 = scmp.lt.s32.totalorder %s1049, 63
        %s1051 = scalar_select %p1050, %s1049, 63
        %s1052 = smul.addr %s1051, 4
        %s1053 = scalar_lea.vmem %s2, %s1052
      $region48: #{generator_forward.15} parent=43 // pred_fallthru
        _
      // Predicated region
      $region49: #{generator_forward.15} parent=43 // pred_check
        %p1054 = pneg %p113
      $region50: #{generator_forward.15} parent=43 // pred_check_branch
        %1056 = sbr.rel (%p1054) target = $region52
      $region51: #{generator_forward.15} parent=43 // pred_region
        %p1057 = scmp.lt.s32.totalorder %s17, 1
        %s1058 = scalar_select %p1057, %s17, 1
        %s1059 = smul.addr %s1058, 8
        %s1060 = scalar_lea.vmem %s3, %s1059
      $region52: #{generator_forward.15} parent=43 // pred_fallthru
        _
      // Predicated region
      $region53: #{generator_forward.15} parent=43 // pred_check
        %p1061 = pneg %p139
      $region54: #{generator_forward.15} parent=43 // pred_check_branch
        %1063 = sbr.rel (%p1061) target = $region56
      $region55: #{generator_forward.15} parent=43 // pred_region
        %p1064 = scmp.lt.s32.totalorder %s17, 1
        %s1065 = scalar_select %p1064, %s17, 1
        %s1066 = smul.addr %s1065, 8
        %s1067 = scalar_lea.vmem %s4, %s1066
      $region56: #{generator_forward.15} parent=43 // pred_fallthru
        _
    $region44: #{generator_forward.15} parent=5 // pred_fallthru
      _
  $region6: #{generator_forward.15} parent=0 // loop_footer
    %s15 = sadd.s32 1, %s11
  $region7: #{generator_forward.15} parent=0 // loop_footer_branch
    %10 = sbr.rel target = $region3
  $region8: #{generator_forward.15} parent=0 // loop_exit
    _

// kernel: generator_forward.16
$region0: #{generator_forward.16}
  #allocation0 [shape = 'u32[]', space=smem, size = 0x4, offset = 0x4, fixed_abs, tag = 'smem constant byte address 0x4 - core index']
  #allocation1 [shape = 'u32[144,128]{1,0:T(1,128)}', space=vmem, size = 0x12000, scoped, tag = 'internal scratch']
  %s0 = inlined_call_operand.vmem [shape: bf16[512,32], index: 0, kind: input, shape index: {}]
  %s1 = inlined_call_operand.vmem [shape: f32[1,32], index: 1, kind: input, shape index: {}]
  %s2 = inlined_call_operand.vmem [shape: f32[1,32], index: 2, kind: input, shape index: {}]
  %s3 = inlined_call_operand.vmem [shape: bf16[512,32], index: 3, kind: output, shape index: {}]
  %s4 = sld [smem:[#allocation0]]
  $region45: #{generator_forward.16} parent=0
    _
  %s6 = ssub.s32 1, %s4
  %s7 = scalar_select 0, %s6, %s4
  loop: start=0, step=1, limit=4
  $region2: #{generator_forward.16} parent=0 // loop_pre_header
    _
  $region3: #{generator_forward.16} parent=0 // loop_header
    %s9 = sphi 0, %s13
    %p10 = scmp.ge.s32.totalorder %s9, 4
    %s19 = sphi 0, %s21
    %s22 = sphi 0, %s19
    %s23 = sphi 0, %s22
    %s39 = sphi 0, %s23
    %s43 = sphi 0, %s43
    %s45 = sphi 0, %s43
    %s46 = sphi 0, %s45
    %s60 = sphi 0, %s46
    %s64 = sphi 0, %s64
    %s66 = sphi 0, %s64
    %s67 = sphi 0, %s66
    %s81 = sphi 0, %s67
    %s87 = sphi 0, %s89
    %s90 = sphi 0, %s87
    %s91 = sphi 0, %s90
    %s107 = sphi 0, %s91
  $region4: #{generator_forward.16} parent=0 // loop_header_branch
    %12 = sbr.rel (%p10) target = $region8
  $region5: #{generator_forward.16} parent=0 // loop_body
    %s14 = ssub.s32 %s9, 1
    %s15 = ssub.s32 %s9, 2
    %s16 = sadd.s32 %s9, 1
    %s17 = ssub.s32 %s9, %s16
    %p18 = scmp.eq.s32.totalorder %s17, 0
    %s20 = sadd.s32 %s19, 1
    %s21 = scalar_select %p18, %s19, %s20
    %p24 = pneg %p18
    %p25 = scmp.eq.s32.totalorder %s9, 1
    %p26 = por %p24, %p25
    %p27 = scmp.ne.s32.totalorder %s19, %s22
    %p28 = scmp.eq.s32.totalorder %s9, 0
    %p29 = por %p27, %p28
    %p30 = scmp.ne.s32.totalorder %s19, %s22
    %p31 = scmp.eq.s32.totalorder %s14, 1
    %p32 = por %p30, %p31
    %p33 = scmp.ne.s32.totalorder %s22, %s23
    %p34 = scmp.eq.s32.totalorder %s14, 0
    %p35 = por %p33, %p34
    %p36 = scmp.ne.s32.totalorder %s22, %s23
    %p37 = scmp.eq.s32.totalorder %s15, 1
    %p38 = por %p36, %p37
    %p40 = scmp.ne.s32.totalorder %s23, %s39
    %p41 = scmp.eq.s32.totalorder %s15, 0
    %p42 = por %p40, %p41
    %s44 = sadd.s32 %s43, 1
    %p47 = scmp.eq.s32.totalorder %s9, 1
    %p48 = scmp.ne.s32.totalorder %s43, %s45
    %p49 = scmp.eq.s32.totalorder %s9, 0
    %p50 = por %p48, %p49
    %p51 = scmp.ne.s32.totalorder %s43, %s45
    %p52 = scmp.eq.s32.totalorder %s14, 1
    %p53 = por %p51, %p52
    %p54 = scmp.ne.s32.totalorder %s45, %s46
    %p55 = scmp.eq.s32.totalorder %s14, 0
    %p56 = por %p54, %p55
    %p57 = scmp.ne.s32.totalorder %s45, %s46
    %p58 = scmp.eq.s32.totalorder %s15, 1
    %p59 = por %p57, %p58
    %p61 = scmp.ne.s32.totalorder %s46, %s60
    %p62 = scmp.eq.s32.totalorder %s15, 0
    %p63 = por %p61, %p62
    %s65 = sadd.s32 %s64, 1
    %p68 = scmp.eq.s32.totalorder %s9, 1
    %p69 = scmp.ne.s32.totalorder %s64, %s66
    %p70 = scmp.eq.s32.totalorder %s9, 0
    %p71 = por %p69, %p70
    %p72 = scmp.ne.s32.totalorder %s64, %s66
    %p73 = scmp.eq.s32.totalorder %s14, 1
    %p74 = por %p72, %p73
    %p75 = scmp.ne.s32.totalorder %s66, %s67
    %p76 = scmp.eq.s32.totalorder %s14, 0
    %p77 = por %p75, %p76
    %p78 = scmp.ne.s32.totalorder %s66, %s67
    %p79 = scmp.eq.s32.totalorder %s15, 1
    %p80 = por %p78, %p79
    %p82 = scmp.ne.s32.totalorder %s67, %s81
    %p83 = scmp.eq.s32.totalorder %s15, 0
    %p84 = por %p82, %p83
    %s85 = ssub.s32 %s9, %s16
    %p86 = scmp.eq.s32.totalorder %s85, 0
    %s88 = sadd.s32 %s87, 1
    %s89 = scalar_select %p86, %s87, %s88
    %p92 = pneg %p86
    %p93 = scmp.eq.s32.totalorder %s9, 1
    %p94 = por %p92, %p93
    %p95 = scmp.ne.s32.totalorder %s87, %s90
    %p96 = scmp.eq.s32.totalorder %s9, 0
    %p97 = por %p95, %p96
    %p98 = scmp.ne.s32.totalorder %s87, %s90
    %p99 = scmp.eq.s32.totalorder %s14, 1
    %p100 = por %p98, %p99
    %p101 = scmp.ne.s32.totalorder %s90, %s91
    %p102 = scmp.eq.s32.totalorder %s14, 0
    %p103 = por %p101, %p102
    %p104 = scmp.ne.s32.totalorder %s90, %s91
    %p105 = scmp.eq.s32.totalorder %s15, 1
    %p106 = por %p104, %p105
    %p108 = scmp.ne.s32.totalorder %s91, %s107
    %p109 = scmp.eq.s32.totalorder %s15, 0
    %p110 = por %p108, %p109
    %p111 = scmp.le.s32.totalorder 1, %s9
    %p112 = scmp.lt.s32.totalorder %s9, 3
    %p113 = pnand %p111, %p112
    %p114 = pneg %p113
    // Predicated region
    $region9: #{generator_forward.16} parent=5 // pred_check
      _
    $region10: #{generator_forward.16} parent=5 // pred_check_branch
      %116 = sbr.rel (%p113) target = $region12
    $region11: #{generator_forward.16} parent=5 // pred_region
      %s117 = ssub.s32 %s9, 1
      // Predicated region
      $region13: #{generator_forward.16} parent=11 // pred_check
        %p118 = pneg %p56
      $region14: #{generator_forward.16} parent=11 // pred_check_branch
        %120 = sbr.rel (%p118) target = $region16
      $region15: #{generator_forward.16} parent=11 // pred_region
        _
      $region16: #{generator_forward.16} parent=11 // pred_fallthru
        _
      // Predicated region
      $region17: #{generator_forward.16} parent=11 // pred_check
        %p121 = pneg %p77
      $region18: #{generator_forward.16} parent=11 // pred_check_branch
        %123 = sbr.rel (%p121) target = $region20
      $region19: #{generator_forward.16} parent=11 // pred_region
        _
      $region20: #{generator_forward.16} parent=11 // pred_fallthru
        _
    $region12: #{generator_forward.16} parent=5 // pred_fallthru
      _
    %p124 = scmp.lt.s32.totalorder %s9, 2
    // Predicated region
    $region21: #{generator_forward.16} parent=5 // pred_check
      %p125 = pneg %p124
    $region22: #{generator_forward.16} parent=5 // pred_check_branch
      %127 = sbr.rel (%p125) target = $region24
    $region23: #{generator_forward.16} parent=5 // pred_region
      // Predicated region
      $region25: #{generator_forward.16} parent=23 // pred_check
        %p128 = pneg %p29
      $region26: #{generator_forward.16} parent=23 // pred_check_branch
        %130 = sbr.rel (%p128) target = $region28
      $region27: #{generator_forward.16} parent=23 // pred_region
        %s131 = smul.u32 32, %s9
        %p132 = scmp.lt.s32.totalorder %s131, 63
        %s133 = scalar_select %p132, %s131, 63
        %s134 = smul.addr %s133, 4
        %s135 = scalar_lea.vmem %s0, %s134
        %s136 = smul.u32 32, %s9
      $region28: #{generator_forward.16} parent=23 // pred_fallthru
        _
    $region24: #{generator_forward.16} parent=5 // pred_fallthru
      _
    %p137 = scmp.le.s32.totalorder 1, %s9
    %p138 = scmp.lt.s32.totalorder %s9, 3
    %p139 = pnand %p137, %p138
    %p140 = pneg %p139
    // Predicated region
    $region29: #{generator_forward.16} parent=5 // pred_check
      _
    $region30: #{generator_forward.16} parent=5 // pred_check_branch
      %142 = sbr.rel (%p139) target = $region32
    $region31: #{generator_forward.16} parent=5 // pred_region
      %s143 = ssub.s32 %s9, 1
      %s144 = smul.u32 32, %s14
      %p145 = scmp.lt.s32.totalorder %s144, 63
      %s146 = scalar_select %p145, %s144, 63
      %s147 = smul.addr %s146, 4
      %s148 = scalar_lea.vmem %s0, %s147
      %p149 = pneg %p35
      %p150 = pneg %p32
      %p151 = pneg %p56
      %p152 = pneg %p53
      %p153 = pneg %p77
      %p154 = pneg %p74
      %p155 = pneg %p103
      %p156 = pneg %p100
      %s157 = smul.u32 32, %s14
      %p158 = scmp.lt.s32.totalorder %s157, 63
      %s159 = scalar_select %p158, %s157, 63
      %s160 = smul.addr %s159, 4
      %s161 = scalar_lea.vmem %s3, %s160
      %s162 = smul.u32 32, %s14
      %p163 = scmp.lt.s32.totalorder %s162, 63
      %s164 = scalar_select %p163, %s162, 63
      %s165 = smul.addr %s164, 4
      %s166 = scalar_lea.vmem %s0, %s165
      %s167 = smul.u32 32, %s14
      %s168 = smul.u32 32, %s14
      %p169 = scmp.lt.s32.totalorder %s168, 63
      %s170 = scalar_select %p169, %s168, 63
      %s171 = smul.addr %s170, 4
      %s172 = scalar_lea.vmem %s3, %s171
      %s173 = smul.u32 32, %s14
      %v174 = vld [vmem:[%s166] sm:$0xf]
      %v175 = vld [vmem:[%s166 + $0x4] sm:$0xf]
      %v176 = vld [vmem:[%s166 + $0x8] sm:$0xf]
      %v177 = vld [vmem:[%s166 + $0xc] sm:$0xf]
      %v178 = vld [vmem:[%s166 + $0x10] sm:$0xf]
      %v179 = vld [vmem:[%s166 + $0x14] sm:$0xf]
      %v180 = vld [vmem:[%s166 + $0x18] sm:$0xf]
      %v181 = vld [vmem:[%s166 + $0x1c] sm:$0xf]
      %v182 = vld [vmem:[%s166 + $0x20] sm:$0xf]
      %v183 = vld [vmem:[%s166 + $0x24] sm:$0xf]
      %v184 = vld [vmem:[%s166 + $0x28] sm:$0xf]
      %v185 = vld [vmem:[%s166 + $0x2c] sm:$0xf]
      %v186 = vld [vmem:[%s166 + $0x30] sm:$0xf]
      %v187 = vld [vmem:[%s166 + $0x34] sm:$0xf]
      %v188 = vld [vmem:[%s166 + $0x38] sm:$0xf]
      %v189 = vld [vmem:[%s166 + $0x3c] sm:$0xf]
      %v190 = vld [vmem:[%s166 + $0x40] sm:$0xf]
      %v191 = vld [vmem:[%s166 + $0x44] sm:$0xf]
      %v192 = vld [vmem:[%s166 + $0x48] sm:$0xf]
      %v193 = vld [vmem:[%s166 + $0x4c] sm:$0xf]
      %v194 = vld [vmem:[%s166 + $0x50] sm:$0xf]
      %v195 = vld [vmem:[%s166 + $0x54] sm:$0xf]
      %v196 = vld [vmem:[%s166 + $0x58] sm:$0xf]
      %v197 = vld [vmem:[%s166 + $0x5c] sm:$0xf]
      %v198 = vld [vmem:[%s166 + $0x60] sm:$0xf]
      %v199 = vld [vmem:[%s166 + $0x64] sm:$0xf]
      %v200 = vld [vmem:[%s166 + $0x68] sm:$0xf]
      %v201 = vld [vmem:[%s166 + $0x6c] sm:$0xf]
      %v202 = vld [vmem:[%s166 + $0x70] sm:$0xf]
      %v203 = vld [vmem:[%s166 + $0x74] sm:$0xf]
      %v204 = vld [vmem:[%s166 + $0x78] sm:$0xf]
      %v205 = vld [vmem:[%s166 + $0x7c] sm:$0xf]
      %v206 = vunpack.c.l.bf16 %v174
      %v207 = vunpack.c.l.bf16 %v175
      %v208 = vunpack.c.l.bf16 %v176
      %v209 = vunpack.c.l.bf16 %v177
      %v210 = vunpack.c.l.bf16 %v178
      %v211 = vunpack.c.l.bf16 %v179
      %v212 = vunpack.c.l.bf16 %v180
      %v213 = vunpack.c.l.bf16 %v181
      %v214 = vunpack.c.l.bf16 %v182
      %v215 = vunpack.c.l.bf16 %v183
      %v216 = vunpack.c.l.bf16 %v184
      %v217 = vunpack.c.l.bf16 %v185
      %v218 = vunpack.c.l.bf16 %v186
      %v219 = vunpack.c.l.bf16 %v187
      %v220 = vunpack.c.l.bf16 %v188
      %v221 = vunpack.c.l.bf16 %v189
      %v222 = vunpack.c.l.bf16 %v190
      %v223 = vunpack.c.l.bf16 %v191
      %v224 = vunpack.c.l.bf16 %v192
      %v225 = vunpack.c.l.bf16 %v193
      %v226 = vunpack.c.l.bf16 %v194
      %v227 = vunpack.c.l.bf16 %v195
      %v228 = vunpack.c.l.bf16 %v196
      %v229 = vunpack.c.l.bf16 %v197
      %v230 = vunpack.c.l.bf16 %v198
      %v231 = vunpack.c.l.bf16 %v199
      %v232 = vunpack.c.l.bf16 %v200
      %v233 = vunpack.c.l.bf16 %v201
      %v234 = vunpack.c.l.bf16 %v202
      %v235 = vunpack.c.l.bf16 %v203
      %v236 = vunpack.c.l.bf16 %v204
      %v237 = vunpack.c.l.bf16 %v205
      %v238 = vld [vmem:[%s1] sm:$0x1]
      %v240 = vlaneseq
      %v241 = vshrl.u32 %v240, 7
      %v242 = vsub.s32 0, %v241
      %v243 = vrot.slane %v238, %v242
      %v245 = vmul.f32 %v206, %v243
      %v246 = vmul.f32 %v207, %v243
      %v247 = vmul.f32 %v208, %v243
      %v248 = vmul.f32 %v209, %v243
      %v249 = vmul.f32 %v210, %v243
      %v250 = vmul.f32 %v211, %v243
      %v251 = vmul.f32 %v212, %v243
      %v252 = vmul.f32 %v213, %v243
      %v253 = vmul.f32 %v214, %v243
      %v254 = vmul.f32 %v215, %v243
      %v255 = vmul.f32 %v216, %v243
      %v256 = vmul.f32 %v217, %v243
      %v257 = vmul.f32 %v218, %v243
      %v258 = vmul.f32 %v219, %v243
      %v259 = vmul.f32 %v220, %v243
      %v260 = vmul.f32 %v221, %v243
      %v261 = vmul.f32 %v222, %v243
      %v262 = vmul.f32 %v223, %v243
      %v263 = vmul.f32 %v224, %v243
      %v264 = vmul.f32 %v225, %v243
      %v265 = vmul.f32 %v226, %v243
      %v266 = vmul.f32 %v227, %v243
      %v267 = vmul.f32 %v228, %v243
      %v268 = vmul.f32 %v229, %v243
      %v269 = vmul.f32 %v230, %v243
      %v270 = vmul.f32 %v231, %v243
      %v271 = vmul.f32 %v232, %v243
      %v272 = vmul.f32 %v233, %v243
      %v273 = vmul.f32 %v234, %v243
      %v274 = vmul.f32 %v235, %v243
      %v275 = vmul.f32 %v236, %v243
      %v276 = vmul.f32 %v237, %v243
      %v277 = vld [vmem:[%s2] sm:$0x1]
      %v279 = vlaneseq
      %v280 = vshrl.u32 %v279, 7
      %v281 = vsub.s32 0, %v280
      %v282 = vrot.slane %v277, %v281
      %v284 = vadd.f32 %v245, %v282
      %v285 = vadd.f32 %v246, %v282
      %v286 = vadd.f32 %v247, %v282
      %v287 = vadd.f32 %v248, %v282
      %v288 = vadd.f32 %v249, %v282
      %v289 = vadd.f32 %v250, %v282
      %v290 = vadd.f32 %v251, %v282
      %v291 = vadd.f32 %v252, %v282
      %v292 = vadd.f32 %v253, %v282
      %v293 = vadd.f32 %v254, %v282
      %v294 = vadd.f32 %v255, %v282
      %v295 = vadd.f32 %v256, %v282
      %v296 = vadd.f32 %v257, %v282
      %v297 = vadd.f32 %v258, %v282
      %v298 = vadd.f32 %v259, %v282
      %v299 = vadd.f32 %v260, %v282
      %v300 = vadd.f32 %v261, %v282
      %v301 = vadd.f32 %v262, %v282
      %v302 = vadd.f32 %v263, %v282
      %v303 = vadd.f32 %v264, %v282
      %v304 = vadd.f32 %v265, %v282
      %v305 = vadd.f32 %v266, %v282
      %v306 = vadd.f32 %v267, %v282
      %v307 = vadd.f32 %v268, %v282
      %v308 = vadd.f32 %v269, %v282
      %v309 = vadd.f32 %v270, %v282
      %v310 = vadd.f32 %v271, %v282
      %v311 = vadd.f32 %v272, %v282
      %v312 = vadd.f32 %v273, %v282
      %v313 = vadd.f32 %v274, %v282
      %v314 = vadd.f32 %v275, %v282
      %v315 = vadd.f32 %v276, %v282
      %v316 = vmax.f32 %v284, 0.0
      %v317 = vmax.f32 %v285, 0.0
      %v318 = vmax.f32 %v286, 0.0
      %v319 = vmax.f32 %v287, 0.0
      %v320 = vmax.f32 %v288, 0.0
      %v321 = vmax.f32 %v289, 0.0
      %v322 = vmax.f32 %v290, 0.0
      %v323 = vmax.f32 %v291, 0.0
      %v324 = vmax.f32 %v292, 0.0
      %v325 = vmax.f32 %v293, 0.0
      %v326 = vmax.f32 %v294, 0.0
      %v327 = vmax.f32 %v295, 0.0
      %v328 = vmax.f32 %v296, 0.0
      %v329 = vmax.f32 %v297, 0.0
      %v330 = vmax.f32 %v298, 0.0
      %v331 = vmax.f32 %v299, 0.0
      %v332 = vmax.f32 %v300, 0.0
      %v333 = vmax.f32 %v301, 0.0
      %v334 = vmax.f32 %v302, 0.0
      %v335 = vmax.f32 %v303, 0.0
      %v336 = vmax.f32 %v304, 0.0
      %v337 = vmax.f32 %v305, 0.0
      %v338 = vmax.f32 %v306, 0.0
      %v339 = vmax.f32 %v307, 0.0
      %v340 = vmax.f32 %v308, 0.0
      %v341 = vmax.f32 %v309, 0.0
      %v342 = vmax.f32 %v310, 0.0
      %v343 = vmax.f32 %v311, 0.0
      %v344 = vmax.f32 %v312, 0.0
      %v345 = vmax.f32 %v313, 0.0
      %v346 = vmax.f32 %v314, 0.0
      %v347 = vmax.f32 %v315, 0.0
      %v348 = vpack.c.bf16 %v317, %v316
      %v349 = vpack.c.bf16 %v319, %v318
      %v350 = vpack.c.bf16 %v321, %v320
      %v351 = vpack.c.bf16 %v323, %v322
      %v352 = vpack.c.bf16 %v325, %v324
      %v353 = vpack.c.bf16 %v327, %v326
      %v354 = vpack.c.bf16 %v329, %v328
      %v355 = vpack.c.bf16 %v331, %v330
      %v356 = vpack.c.bf16 %v333, %v332
      %v357 = vpack.c.bf16 %v335, %v334
      %v358 = vpack.c.bf16 %v337, %v336
      %v359 = vpack.c.bf16 %v339, %v338
      %v360 = vpack.c.bf16 %v341, %v340
      %v361 = vpack.c.bf16 %v343, %v342
      %v362 = vpack.c.bf16 %v345, %v344
      %v363 = vpack.c.bf16 %v347, %v346
      %v380 = vunpack.c.l.b16 %v348
      %v381 = vunpack.c.h.b16 %v348
      %v382 = vunpack.c.l.b16 %v349
      %v383 = vunpack.c.h.b16 %v349
      %v384 = vunpack.c.l.b16 %v350
      %v385 = vunpack.c.h.b16 %v350
      %v386 = vunpack.c.l.b16 %v351
      %v387 = vunpack.c.h.b16 %v351
      %v388 = vunpack.c.l.b16 %v352
      %v389 = vunpack.c.h.b16 %v352
      %v390 = vunpack.c.l.b16 %v353
      %v391 = vunpack.c.h.b16 %v353
      %v392 = vunpack.c.l.b16 %v354
      %v393 = vunpack.c.h.b16 %v354
      %v394 = vunpack.c.l.b16 %v355
      %v395 = vunpack.c.h.b16 %v355
      %v396 = vunpack.c.l.b16 %v356
      %v397 = vunpack.c.h.b16 %v356
      %v398 = vunpack.c.l.b16 %v357
      %v399 = vunpack.c.h.b16 %v357
      %v400 = vunpack.c.l.b16 %v358
      %v401 = vunpack.c.h.b16 %v358
      %v402 = vunpack.c.l.b16 %v359
      %v403 = vunpack.c.h.b16 %v359
      %v404 = vunpack.c.l.b16 %v360
      %v405 = vunpack.c.h.b16 %v360
      %v406 = vunpack.c.l.b16 %v361
      %v407 = vunpack.c.h.b16 %v361
      %v408 = vunpack.c.l.b16 %v362
      %v409 = vunpack.c.h.b16 %v362
      %v410 = vunpack.c.l.b16 %v363
      %v411 = vunpack.c.h.b16 %v363
      %v412 = vpack.c.b16 %v380, %v380
      %v413 = vpack.c.b16 %v381, %v381
      %v414 = vpack.c.b16 %v382, %v382
      %v415 = vpack.c.b16 %v383, %v383
      %v416 = vpack.c.b16 %v384, %v384
      %v417 = vpack.c.b16 %v385, %v385
      %v418 = vpack.c.b16 %v386, %v386
      %v419 = vpack.c.b16 %v387, %v387
      %v420 = vpack.c.b16 %v388, %v388
      %v421 = vpack.c.b16 %v389, %v389
      %v422 = vpack.c.b16 %v390, %v390
      %v423 = vpack.c.b16 %v391, %v391
      %v424 = vpack.c.b16 %v392, %v392
      %v425 = vpack.c.b16 %v393, %v393
      %v426 = vpack.c.b16 %v394, %v394
      %v427 = vpack.c.b16 %v395, %v395
      %v428 = vpack.c.b16 %v396, %v396
      %v429 = vpack.c.b16 %v397, %v397
      %v430 = vpack.c.b16 %v398, %v398
      %v431 = vpack.c.b16 %v399, %v399
      %v432 = vpack.c.b16 %v400, %v400
      %v433 = vpack.c.b16 %v401, %v401
      %v434 = vpack.c.b16 %v402, %v402
      %v435 = vpack.c.b16 %v403, %v403
      %v436 = vpack.c.b16 %v404, %v404
      %v437 = vpack.c.b16 %v405, %v405
      %v438 = vpack.c.b16 %v406, %v406
      %v439 = vpack.c.b16 %v407, %v407
      %v440 = vpack.c.b16 %v408, %v408
      %v441 = vpack.c.b16 %v409, %v409
      %v442 = vpack.c.b16 %v410, %v410
      %v443 = vpack.c.b16 %v411, %v411
      %vm476 = vcmask 257024
      %477 = vst.msk [vmem:[%s172] sm:$0xf] %vm476, %v412
      %478 = vst.msk [vmem:[%s172 + $0x4] sm:$0xf] %vm476, %v413
      %479 = vst.msk [vmem:[%s172 + $0x8] sm:$0xf] %vm476, %v414
      %480 = vst.msk [vmem:[%s172 + $0xc] sm:$0xf] %vm476, %v415
      %481 = vst.msk [vmem:[%s172 + $0x10] sm:$0xf] %vm476, %v416
      %482 = vst.msk [vmem:[%s172 + $0x14] sm:$0xf] %vm476, %v417
      %483 = vst.msk [vmem:[%s172 + $0x18] sm:$0xf] %vm476, %v418
      %484 = vst.msk [vmem:[%s172 + $0x1c] sm:$0xf] %vm476, %v419
      %485 = vst.msk [vmem:[%s172 + $0x20] sm:$0xf] %vm476, %v420
      %486 = vst.msk [vmem:[%s172 + $0x24] sm:$0xf] %vm476, %v421
      %487 = vst.msk [vmem:[%s172 + $0x28] sm:$0xf] %vm476, %v422
      %488 = vst.msk [vmem:[%s172 + $0x2c] sm:$0xf] %vm476, %v423
      %489 = vst.msk [vmem:[%s172 + $0x30] sm:$0xf] %vm476, %v424
      %490 = vst.msk [vmem:[%s172 + $0x34] sm:$0xf] %vm476, %v425
      %491 = vst.msk [vmem:[%s172 + $0x38] sm:$0xf] %vm476, %v426
      %492 = vst.msk [vmem:[%s172 + $0x3c] sm:$0xf] %vm476, %v427
      %493 = vst.msk [vmem:[%s172 + $0x40] sm:$0xf] %vm476, %v428
      %494 = vst.msk [vmem:[%s172 + $0x44] sm:$0xf] %vm476, %v429
      %495 = vst.msk [vmem:[%s172 + $0x48] sm:$0xf] %vm476, %v430
      %496 = vst.msk [vmem:[%s172 + $0x4c] sm:$0xf] %vm476, %v431
      %497 = vst.msk [vmem:[%s172 + $0x50] sm:$0xf] %vm476, %v432
      %498 = vst.msk [vmem:[%s172 + $0x54] sm:$0xf] %vm476, %v433
      %499 = vst.msk [vmem:[%s172 + $0x58] sm:$0xf] %vm476, %v434
      %500 = vst.msk [vmem:[%s172 + $0x5c] sm:$0xf] %vm476, %v435
      %501 = vst.msk [vmem:[%s172 + $0x60] sm:$0xf] %vm476, %v436
      %502 = vst.msk [vmem:[%s172 + $0x64] sm:$0xf] %vm476, %v437
      %503 = vst.msk [vmem:[%s172 + $0x68] sm:$0xf] %vm476, %v438
      %504 = vst.msk [vmem:[%s172 + $0x6c] sm:$0xf] %vm476, %v439
      %505 = vst.msk [vmem:[%s172 + $0x70] sm:$0xf] %vm476, %v440
      %506 = vst.msk [vmem:[%s172 + $0x74] sm:$0xf] %vm476, %v441
      %507 = vst.msk [vmem:[%s172 + $0x78] sm:$0xf] %vm476, %v442
      %508 = vst.msk [vmem:[%s172 + $0x7c] sm:$0xf] %vm476, %v443
      %s509 = smul.u32 32, %s14
      %p510 = scmp.lt.s32.totalorder %s509, 63
      %s511 = scalar_select %p510, %s509, 63
      %s512 = smul.addr %s511, 4
      %s513 = scalar_lea.vmem %s3, %s512
      // Predicated region
      $region33: #{generator_forward.16} parent=31 // pred_check
        %p514 = pneg %p100
      $region34: #{generator_forward.16} parent=31 // pred_check_branch
        %516 = sbr.rel (%p514) target = $region36
      $region35: #{generator_forward.16} parent=31 // pred_region
        %s517 = smul.u32 32, %s14
      $region36: #{generator_forward.16} parent=31 // pred_fallthru
        _
    $region32: #{generator_forward.16} parent=5 // pred_fallthru
      _
    %p518 = scmp.le.s32.totalorder 2, %s9
    // Predicated region
    $region37: #{generator_forward.16} parent=5 // pred_check
      %p519 = pneg %p518
    $region38: #{generator_forward.16} parent=5 // pred_check_branch
      %521 = sbr.rel (%p519) target = $region40
    $region39: #{generator_forward.16} parent=5 // pred_region
      %s522 = ssub.s32 %s9, 2
      // Predicated region
      $region41: #{generator_forward.16} parent=39 // pred_check
        %p523 = pneg %p106
      $region42: #{generator_forward.16} parent=39 // pred_check_branch
        %525 = sbr.rel (%p523) target = $region44
      $region43: #{generator_forward.16} parent=39 // pred_region
        %s526 = smul.u32 32, %s15
        %p527 = scmp.lt.s32.totalorder %s526, 63
        %s528 = scalar_select %p527, %s526, 63
        %s529 = smul.addr %s528, 4
        %s530 = scalar_lea.vmem %s3, %s529
      $region44: #{generator_forward.16} parent=39 // pred_fallthru
        _
    $region40: #{generator_forward.16} parent=5 // pred_fallthru
      _
  $region6: #{generator_forward.16} parent=0 // loop_footer
    %s13 = sadd.s32 1, %s9
  $region7: #{generator_forward.16} parent=0 // loop_footer_branch
    %8 = sbr.rel target = $region3
  $region8: #{generator_forward.16} parent=0 // loop_exit
    _

// kernel: generator_forward.17
$region0: #{generator_forward.17}
  #allocation0 [shape = 'u32[]', space=smem, size = 0x4, offset = 0x4, fixed_abs, tag = 'smem constant byte address 0x4 - core index']
  #allocation1 [shape = 'u32[144,128]{1,0:T(1,128)}', space=vmem, size = 0x12000, scoped, tag = 'internal scratch']
  %s0 = inlined_call_operand.vmem [shape: bf16[2048,72], index: 0, kind: input, shape index: {}]
  %s1 = inlined_call_operand.vmem [shape: bf16[72,12], index: 1, kind: input, shape index: {}]
  %s2 = inlined_call_operand.vmem [shape: f32[2048,12], index: 2, kind: output, shape index: {}]
  %s3 = sld [smem:[#allocation0]]
  $region41: #{generator_forward.17} parent=0
    _
  %s5 = ssub.s32 1, %s3
  %s6 = scalar_select 0, %s5, %s3
  loop: start=0, step=1, limit=6
  $region2: #{generator_forward.17} parent=0 // loop_pre_header
    _
  $region3: #{generator_forward.17} parent=0 // loop_header
    %s8 = sphi 0, %s12
    %p9 = scmp.ge.s32.totalorder %s8, 6
    %s18 = sphi 0, %s20
    %s21 = sphi 0, %s18
    %s22 = sphi 0, %s21
    %s38 = sphi 0, %s22
    %s42 = sphi 0, %s42
    %s44 = sphi 0, %s42
    %s45 = sphi 0, %s44
    %s59 = sphi 0, %s45
    %s65 = sphi 0, %s67
    %s68 = sphi 0, %s65
    %s69 = sphi 0, %s68
    %s85 = sphi 0, %s69
  $region4: #{generator_forward.17} parent=0 // loop_header_branch
    %11 = sbr.rel (%p9) target = $region8
  $region5: #{generator_forward.17} parent=0 // loop_body
    %s13 = ssub.s32 %s8, 1
    %s14 = ssub.s32 %s8, 2
    %s15 = sadd.s32 %s8, 1
    %s16 = ssub.s32 %s8, %s15
    %p17 = scmp.eq.s32.totalorder %s16, 0
    %s19 = sadd.s32 %s18, 1
    %s20 = scalar_select %p17, %s18, %s19
    %p23 = pneg %p17
    %p24 = scmp.eq.s32.totalorder %s8, 3
    %p25 = por %p23, %p24
    %p26 = scmp.ne.s32.totalorder %s18, %s21
    %p27 = scmp.eq.s32.totalorder %s8, 0
    %p28 = por %p26, %p27
    %p29 = scmp.ne.s32.totalorder %s18, %s21
    %p30 = scmp.eq.s32.totalorder %s13, 3
    %p31 = por %p29, %p30
    %p32 = scmp.ne.s32.totalorder %s21, %s22
    %p33 = scmp.eq.s32.totalorder %s13, 0
    %p34 = por %p32, %p33
    %p35 = scmp.ne.s32.totalorder %s21, %s22
    %p36 = scmp.eq.s32.totalorder %s14, 3
    %p37 = por %p35, %p36
    %p39 = scmp.ne.s32.totalorder %s22, %s38
    %p40 = scmp.eq.s32.totalorder %s14, 0
    %p41 = por %p39, %p40
    %s43 = sadd.s32 %s42, 1
    %p46 = scmp.eq.s32.totalorder %s8, 3
    %p47 = scmp.ne.s32.totalorder %s42, %s44
    %p48 = scmp.eq.s32.totalorder %s8, 0
    %p49 = por %p47, %p48
    %p50 = scmp.ne.s32.totalorder %s42, %s44
    %p51 = scmp.eq.s32.totalorder %s13, 3
    %p52 = por %p50, %p51
    %p53 = scmp.ne.s32.totalorder %s44, %s45
    %p54 = scmp.eq.s32.totalorder %s13, 0
    %p55 = por %p53, %p54
    %p56 = scmp.ne.s32.totalorder %s44, %s45
    %p57 = scmp.eq.s32.totalorder %s14, 3
    %p58 = por %p56, %p57
    %p60 = scmp.ne.s32.totalorder %s45, %s59
    %p61 = scmp.eq.s32.totalorder %s14, 0
    %p62 = por %p60, %p61
    %s63 = ssub.s32 %s8, %s15
    %p64 = scmp.eq.s32.totalorder %s63, 0
    %s66 = sadd.s32 %s65, 1
    %s67 = scalar_select %p64, %s65, %s66
    %p70 = pneg %p64
    %p71 = scmp.eq.s32.totalorder %s8, 3
    %p72 = por %p70, %p71
    %p73 = scmp.ne.s32.totalorder %s65, %s68
    %p74 = scmp.eq.s32.totalorder %s8, 0
    %p75 = por %p73, %p74
    %p76 = scmp.ne.s32.totalorder %s65, %s68
    %p77 = scmp.eq.s32.totalorder %s13, 3
    %p78 = por %p76, %p77
    %p79 = scmp.ne.s32.totalorder %s68, %s69
    %p80 = scmp.eq.s32.totalorder %s13, 0
    %p81 = por %p79, %p80
    %p82 = scmp.ne.s32.totalorder %s68, %s69
    %p83 = scmp.eq.s32.totalorder %s14, 3
    %p84 = por %p82, %p83
    %p86 = scmp.ne.s32.totalorder %s69, %s85
    %p87 = scmp.eq.s32.totalorder %s14, 0
    %p88 = por %p86, %p87
    %p89 = scmp.le.s32.totalorder 1, %s8
    %p90 = scmp.lt.s32.totalorder %s8, 5
    %p91 = pnand %p89, %p90
    %p92 = pneg %p91
    // Predicated region
    $region9: #{generator_forward.17} parent=5 // pred_check
      _
    $region10: #{generator_forward.17} parent=5 // pred_check_branch
      %94 = sbr.rel (%p91) target = $region12
    $region11: #{generator_forward.17} parent=5 // pred_region
      %s95 = ssub.s32 %s8, 1
      // Predicated region
      $region13: #{generator_forward.17} parent=11 // pred_check
        %p96 = pneg %p55
      $region14: #{generator_forward.17} parent=11 // pred_check_branch
        %98 = sbr.rel (%p96) target = $region16
      $region15: #{generator_forward.17} parent=11 // pred_region
        _
      $region16: #{generator_forward.17} parent=11 // pred_fallthru
        _
    $region12: #{generator_forward.17} parent=5 // pred_fallthru
      _
    %p99 = scmp.lt.s32.totalorder %s8, 4
    // Predicated region
    $region17: #{generator_forward.17} parent=5 // pred_check
      %p100 = pneg %p99
    $region18: #{generator_forward.17} parent=5 // pred_check_branch
      %102 = sbr.rel (%p100) target = $region20
    $region19: #{generator_forward.17} parent=5 // pred_region
      // Predicated region
      $region21: #{generator_forward.17} parent=19 // pred_check
        %p103 = pneg %p28
      $region22: #{generator_forward.17} parent=19 // pred_check_branch
        %105 = sbr.rel (%p103) target = $region24
      $region23: #{generator_forward.17} parent=19 // pred_region
        %s106 = smul.u32 64, %s8
        %p107 = scmp.lt.s32.totalorder %s106, 255
        %s108 = scalar_select %p107, %s106, 255
        %s109 = smul.addr %s108, 4
        %s110 = scalar_lea.vmem %s0, %s109
        %s111 = smul.u32 64, %s8
      $region24: #{generator_forward.17} parent=19 // pred_fallthru
        _
    $region20: #{generator_forward.17} parent=5 // pred_fallthru
      _
    %p112 = scmp.le.s32.totalorder 1, %s8
    %p113 = scmp.lt.s32.totalorder %s8, 5
    %p114 = pnand %p112, %p113
    %p115 = pneg %p114
    // Predicated region
    $region25: #{generator_forward.17} parent=5 // pred_check
      _
    $region26: #{generator_forward.17} parent=5 // pred_check_branch
      %117 = sbr.rel (%p114) target = $region28
    $region27: #{generator_forward.17} parent=5 // pred_region
      %s118 = ssub.s32 %s8, 1
      %s119 = smul.u32 64, %s13
      %p120 = scmp.lt.s32.totalorder %s119, 255
      %s121 = scalar_select %p120, %s119, 255
      %s122 = smul.addr %s121, 4
      %s123 = scalar_lea.vmem %s0, %s122
      %p124 = pneg %p34
      %p125 = pneg %p31
      %p126 = pneg %p55
      %p127 = pneg %p52
      %p128 = pneg %p81
      %p129 = pneg %p78
      %s130 = smul.u32 64, %s13
      %p131 = scmp.lt.s32.totalorder %s130, 255
      %s132 = scalar_select %p131, %s130, 255
      %s133 = smul.addr %s132, 8
      %s134 = scalar_lea.vmem %s2, %s133
      %s135 = smul.u32 64, %s13
      %p136 = scmp.lt.s32.totalorder %s135, 255
      %s137 = scalar_select %p136, %s135, 255
      %s138 = smul.addr %s137, 4
      %s139 = scalar_lea.vmem %s0, %s138
      %s140 = smul.u32 64, %s13
      %s141 = smul.u32 64, %s13
      %p142 = scmp.lt.s32.totalorder %s141, 255
      %s143 = scalar_select %p142, %s141, 255
      %s144 = smul.addr %s143, 8
      %s145 = scalar_lea.vmem %s2, %s144
      %s146 = smul.u32 64, %s13
      %v148 = vld [vmem:[%s139] sm:$0xf]
      %v149 = vld [vmem:[%s139 + $0x4] sm:$0xf]
      %v150 = vld [vmem:[%s139 + $0x8] sm:$0xf]
      %v151 = vld [vmem:[%s139 + $0xc] sm:$0xf]
      %v152 = vld [vmem:[%s139 + $0x10] sm:$0xf]
      %v153 = vld [vmem:[%s139 + $0x14] sm:$0xf]
      %v154 = vld [vmem:[%s139 + $0x18] sm:$0xf]
      %v155 = vld [vmem:[%s139 + $0x1c] sm:$0xf]
      %v156 = vld [vmem:[%s139 + $0x20] sm:$0xf]
      %v157 = vld [vmem:[%s139 + $0x24] sm:$0xf]
      %v158 = vld [vmem:[%s139 + $0x28] sm:$0xf]
      %v159 = vld [vmem:[%s139 + $0x2c] sm:$0xf]
      %v160 = vld [vmem:[%s139 + $0x30] sm:$0xf]
      %v161 = vld [vmem:[%s139 + $0x34] sm:$0xf]
      %v162 = vld [vmem:[%s139 + $0x38] sm:$0xf]
      %v163 = vld [vmem:[%s139 + $0x3c] sm:$0xf]
      %v164 = vld [vmem:[%s139 + $0x40] sm:$0xf]
      %v165 = vld [vmem:[%s139 + $0x44] sm:$0xf]
      %v166 = vld [vmem:[%s139 + $0x48] sm:$0xf]
      %v167 = vld [vmem:[%s139 + $0x4c] sm:$0xf]
      %v168 = vld [vmem:[%s139 + $0x50] sm:$0xf]
      %v169 = vld [vmem:[%s139 + $0x54] sm:$0xf]
      %v170 = vld [vmem:[%s139 + $0x58] sm:$0xf]
      %v171 = vld [vmem:[%s139 + $0x5c] sm:$0xf]
      %v172 = vld [vmem:[%s139 + $0x60] sm:$0xf]
      %v173 = vld [vmem:[%s139 + $0x64] sm:$0xf]
      %v174 = vld [vmem:[%s139 + $0x68] sm:$0xf]
      %v175 = vld [vmem:[%s139 + $0x6c] sm:$0xf]
      %v176 = vld [vmem:[%s139 + $0x70] sm:$0xf]
      %v177 = vld [vmem:[%s139 + $0x74] sm:$0xf]
      %v178 = vld [vmem:[%s139 + $0x78] sm:$0xf]
      %v179 = vld [vmem:[%s139 + $0x7c] sm:$0xf]
      %v180 = vld [vmem:[%s139 + $0x80] sm:$0xf]
      %v181 = vld [vmem:[%s139 + $0x84] sm:$0xf]
      %v182 = vld [vmem:[%s139 + $0x88] sm:$0xf]
      %v183 = vld [vmem:[%s139 + $0x8c] sm:$0xf]
      %v184 = vld [vmem:[%s139 + $0x90] sm:$0xf]
      %v185 = vld [vmem:[%s139 + $0x94] sm:$0xf]
      %v186 = vld [vmem:[%s139 + $0x98] sm:$0xf]
      %v187 = vld [vmem:[%s139 + $0x9c] sm:$0xf]
      %v188 = vld [vmem:[%s139 + $0xa0] sm:$0xf]
      %v189 = vld [vmem:[%s139 + $0xa4] sm:$0xf]
      %v190 = vld [vmem:[%s139 + $0xa8] sm:$0xf]
      %v191 = vld [vmem:[%s139 + $0xac] sm:$0xf]
      %v192 = vld [vmem:[%s139 + $0xb0] sm:$0xf]
      %v193 = vld [vmem:[%s139 + $0xb4] sm:$0xf]
      %v194 = vld [vmem:[%s139 + $0xb8] sm:$0xf]
      %v195 = vld [vmem:[%s139 + $0xbc] sm:$0xf]
      %v196 = vld [vmem:[%s139 + $0xc0] sm:$0xf]
      %v197 = vld [vmem:[%s139 + $0xc4] sm:$0xf]
      %v198 = vld [vmem:[%s139 + $0xc8] sm:$0xf]
      %v199 = vld [vmem:[%s139 + $0xcc] sm:$0xf]
      %v200 = vld [vmem:[%s139 + $0xd0] sm:$0xf]
      %v201 = vld [vmem:[%s139 + $0xd4] sm:$0xf]
      %v202 = vld [vmem:[%s139 + $0xd8] sm:$0xf]
      %v203 = vld [vmem:[%s139 + $0xdc] sm:$0xf]
      %v204 = vld [vmem:[%s139 + $0xe0] sm:$0xf]
      %v205 = vld [vmem:[%s139 + $0xe4] sm:$0xf]
      %v206 = vld [vmem:[%s139 + $0xe8] sm:$0xf]
      %v207 = vld [vmem:[%s139 + $0xec] sm:$0xf]
      %v208 = vld [vmem:[%s139 + $0xf0] sm:$0xf]
      %v209 = vld [vmem:[%s139 + $0xf4] sm:$0xf]
      %v210 = vld [vmem:[%s139 + $0xf8] sm:$0xf]
      %v211 = vld [vmem:[%s139 + $0xfc] sm:$0xf]
      %v212 = vld [vmem:[%s1] sm:$0xf]
      %v213 = vld [vmem:[%s1 + $0x4] sm:$0xf]
      %v214 = vld [vmem:[%s1 + $0x8] sm:$0xf]
      %v215 = vld [vmem:[%s1 + $0xc] sm:$0xf]
      %v216 = vld [vmem:[%s1 + $0x10] sm:$0xf]
      %v217 = vld [vmem:[%s1 + $0x14] sm:$0xf]
      %v218 = vld [vmem:[%s1 + $0x18] sm:$0xf]
      %v219 = vld [vmem:[%s1 + $0x1c] sm:$0xf]
      %v220 = vld [vmem:[%s1 + $0x20] sm:$0xf]
      %v285 = vunpack.c.l.b16 %v148
      %v286 = vunpack.c.l.b16 %v149
      %v287 = vunpack.c.l.b16 %v150
      %v288 = vunpack.c.l.b16 %v151
      %v289 = vunpack.c.l.b16 %v152
      %v290 = vunpack.c.l.b16 %v153
      %v291 = vunpack.c.l.b16 %v154
      %v292 = vunpack.c.l.b16 %v155
      %v293 = vunpack.c.l.b16 %v156
      %v294 = vunpack.c.l.b16 %v157
      %v295 = vunpack.c.l.b16 %v158
      %v296 = vunpack.c.l.b16 %v159
      %v297 = vunpack.c.l.b16 %v160
      %v298 = vunpack.c.l.b16 %v161
      %v299 = vunpack.c.l.b16 %v162
      %v300 = vunpack.c.l.b16 %v163
      %v301 = vunpack.c.l.b16 %v164
      %v302 = vunpack.c.l.b16 %v165
      %v303 = vunpack.c.l.b16 %v166
      %v304 = vunpack.c.l.b16 %v167
      %v305 = vunpack.c.l.b16 %v168
      %v306 = vunpack.c.l.b16 %v169
      %v307 = vunpack.c.l.b16 %v170
      %v308 = vunpack.c.l.b16 %v171
      %v309 = vunpack.c.l.b16 %v172
      %v310 = vunpack.c.l.b16 %v173
      %v311 = vunpack.c.l.b16 %v174
      %v312 = vunpack.c.l.b16 %v175
      %v313 = vunpack.c.l.b16 %v176
      %v314 = vunpack.c.l.b16 %v177
      %v315 = vunpack.c.l.b16 %v178
      %v316 = vunpack.c.l.b16 %v179
      %v317 = vunpack.c.l.b16 %v180
      %v318 = vunpack.c.l.b16 %v181
      %v319 = vunpack.c.l.b16 %v182
      %v320 = vunpack.c.l.b16 %v183
      %v321 = vunpack.c.l.b16 %v184
      %v322 = vunpack.c.l.b16 %v185
      %v323 = vunpack.c.l.b16 %v186
      %v324 = vunpack.c.l.b16 %v187
      %v325 = vunpack.c.l.b16 %v188
      %v326 = vunpack.c.l.b16 %v189
      %v327 = vunpack.c.l.b16 %v190
      %v328 = vunpack.c.l.b16 %v191
      %v329 = vunpack.c.l.b16 %v192
      %v330 = vunpack.c.l.b16 %v193
      %v331 = vunpack.c.l.b16 %v194
      %v332 = vunpack.c.l.b16 %v195
      %v333 = vunpack.c.l.b16 %v196
      %v334 = vunpack.c.l.b16 %v197
      %v335 = vunpack.c.l.b16 %v198
      %v336 = vunpack.c.l.b16 %v199
      %v337 = vunpack.c.l.b16 %v200
      %v338 = vunpack.c.l.b16 %v201
      %v339 = vunpack.c.l.b16 %v202
      %v340 = vunpack.c.l.b16 %v203
      %v341 = vunpack.c.l.b16 %v204
      %v342 = vunpack.c.l.b16 %v205
      %v343 = vunpack.c.l.b16 %v206
      %v344 = vunpack.c.l.b16 %v207
      %v345 = vunpack.c.l.b16 %v208
      %v346 = vunpack.c.l.b16 %v209
      %v347 = vunpack.c.l.b16 %v210
      %v348 = vunpack.c.l.b16 %v211
      %v349 = vpack.c.b16 %v286, %v285
      %v350 = vpack.c.b16 %v288, %v287
      %v351 = vpack.c.b16 %v290, %v289
      %v352 = vpack.c.b16 %v292, %v291
      %v353 = vpack.c.b16 %v294, %v293
      %v354 = vpack.c.b16 %v296, %v295
      %v355 = vpack.c.b16 %v298, %v297
      %v356 = vpack.c.b16 %v300, %v299
      %v357 = vpack.c.b16 %v302, %v301
      %v358 = vpack.c.b16 %v304, %v303
      %v359 = vpack.c.b16 %v306, %v305
      %v360 = vpack.c.b16 %v308, %v307
      %v361 = vpack.c.b16 %v310, %v309
      %v362 = vpack.c.b16 %v312, %v311
      %v363 = vpack.c.b16 %v314, %v313
      %v364 = vpack.c.b16 %v316, %v315
      %v365 = vpack.c.b16 %v318, %v317
      %v366 = vpack.c.b16 %v320, %v319
      %v367 = vpack.c.b16 %v322, %v321
      %v368 = vpack.c.b16 %v324, %v323
      %v369 = vpack.c.b16 %v326, %v325
      %v370 = vpack.c.b16 %v328, %v327
      %v371 = vpack.c.b16 %v330, %v329
      %v372 = vpack.c.b16 %v332, %v331
      %v373 = vpack.c.b16 %v334, %v333
      %v374 = vpack.c.b16 %v336, %v335
      %v375 = vpack.c.b16 %v338, %v337
      %v376 = vpack.c.b16 %v340, %v339
      %v377 = vpack.c.b16 %v342, %v341
      %v378 = vpack.c.b16 %v344, %v343
      %v379 = vpack.c.b16 %v346, %v345
      %v380 = vpack.c.b16 %v348, %v347
      %v390 = vunpack.c.l.b16 %v212
      %v391 = vunpack.c.l.b16 %v213
      %v392 = vunpack.c.l.b16 %v214
      %v393 = vunpack.c.l.b16 %v215
      %v394 = vunpack.c.l.b16 %v216
      %v395 = vunpack.c.l.b16 %v217
      %v396 = vunpack.c.l.b16 %v218
      %v397 = vunpack.c.l.b16 %v219
      %v398 = vunpack.c.l.b16 %v220
      %v399 = vpack.c.b16 %v391, %v390
      %v400 = vpack.c.b16 %v393, %v392
      %v401 = vpack.c.b16 %v395, %v394
      %v402 = vpack.c.b16 %v397, %v396
      %v403 = vpack.c.b16 %v398, %v398
      %vm408 = vcmask 588800
      %v410 = vsel %vm408, %v349, 0
      %v413 = vsel %vm408, %v350, 0
      %v416 = vsel %vm408, %v351, 0
      %v419 = vsel %vm408, %v352, 0
      %v422 = vsel %vm408, %v353, 0
      %v425 = vsel %vm408, %v354, 0
      %v428 = vsel %vm408, %v355, 0
      %v431 = vsel %vm408, %v356, 0
      %v434 = vsel %vm408, %v357, 0
      %v437 = vsel %vm408, %v358, 0
      %v440 = vsel %vm408, %v359, 0
      %v443 = vsel %vm408, %v360, 0
      %v446 = vsel %vm408, %v361, 0
      %v449 = vsel %vm408, %v362, 0
      %v452 = vsel %vm408, %v363, 0
      %v455 = vsel %vm408, %v364, 0
      %v458 = vsel %vm408, %v365, 0
      %v461 = vsel %vm408, %v366, 0
      %v464 = vsel %vm408, %v367, 0
      %v467 = vsel %vm408, %v368, 0
      %v470 = vsel %vm408, %v369, 0
      %v473 = vsel %vm408, %v370, 0
      %v476 = vsel %vm408, %v371, 0
      %v479 = vsel %vm408, %v372, 0
      %v482 = vsel %vm408, %v373, 0
      %v485 = vsel %vm408, %v374, 0
      %v488 = vsel %vm408, %v375, 0
      %v491 = vsel %vm408, %v376, 0
      %v494 = vsel %vm408, %v377, 0
      %v497 = vsel %vm408, %v378, 0
      %v500 = vsel %vm408, %v379, 0
      %v503 = vsel %vm408, %v380, 0
      %vm505 = vcmask 1043456
      %v507 = vsel %vm505, %v403, 0
      %509 = vmatprep.subr.bf16.mxu0 0
      %510 = vmatpush1.bf16.msra.mxu0 0
      %511 = vmatprep.subr.bf16.mxu0 0
      %512 = vmatpush1.bf16.msra.mxu0 0
      %513 = vmatprep.subr.bf16.mxu0 0
      %514 = vmatpush1.bf16.msra.mxu0 0
      %515 = vmatprep.subr.bf16.mxu0 0
      %516 = vmatpush1.bf16.msra.mxu0 %v507
      %517 = vmatprep.subr.bf16.mxu0 0
      %518 = vmatpush1.bf16.msra.mxu0 %v402
      %519 = vmatprep.subr.bf16.mxu0 0
      %520 = vmatpush1.bf16.msra.mxu0 %v401
      %521 = vmatprep.subr.bf16.mxu0 0
      %522 = vmatpush1.bf16.msra.mxu0 %v400
      %523 = vmatprep.subr.bf16.mxu0 0
      %524 = vmatpush1.bf16.msra.mxu0 %v399
      %525 = vmatprep.subr.bf16.mxu0 0
      %526 = vmatpush2.bf16.msra.mxu0 0
      %527 = vmatprep.subr.bf16.mxu0 0
      %528 = vmatpush2.bf16.msra.mxu0 0
      %529 = vmatprep.subr.bf16.mxu0 0
      %530 = vmatpush2.bf16.msra.mxu0 0
      %531 = vmatprep.subr.bf16.mxu0 0
      %532 = vmatpush2.bf16.msra.mxu0 0
      %533 = vmatprep.subr.bf16.mxu0 0
      %534 = vmatpush2.bf16.msra.mxu0 0
      %535 = vmatprep.subr.bf16.mxu0 0
      %536 = vmatpush2.bf16.msra.mxu0 0
      %537 = vmatprep.subr.bf16.mxu0 0
      %538 = vmatpush2.bf16.msra.mxu0 0
      %539 = vmatprep.subr.bf16.mxu0 0
      %540 = vmatpush2.bf16.msra.mxu0 0
      %541 = vmatprep.mubr.bf16.mxu0 0
      %542 = vmatmul.mubr.bf16.gmra.mxu0 %v410
      %v543 = vpop.f32.mrf.mxu0
      %v544 = vadd.f32 0.0, %v543
      %v545 = vpop.f32.mrf.mxu0
      %v546 = vpop.f32.mrf.mxu0
      %v547 = vadd.f32 0.0, %v546
      %v548 = vpop.f32.mrf.mxu0
      %549 = vmatprep.mubr.bf16.mxu0 0
      %550 = vmatmul.mubr.bf16.gmra.mxu0 %v413
      %v551 = vpop.f32.mrf.mxu0
      %v552 = vadd.f32 0.0, %v551
      %v553 = vpop.f32.mrf.mxu0
      %v554 = vpop.f32.mrf.mxu0
      %v555 = vadd.f32 0.0, %v554
      %v556 = vpop.f32.mrf.mxu0
      %557 = vmatprep.mubr.bf16.mxu0 0
      %558 = vmatmul.mubr.bf16.gmra.mxu0 %v416
      %v559 = vpop.f32.mrf.mxu0
      %v560 = vadd.f32 0.0, %v559
      %v561 = vpop.f32.mrf.mxu0
      %v562 = vpop.f32.mrf.mxu0
      %v563 = vadd.f32 0.0, %v562
      %v564 = vpop.f32.mrf.mxu0
      %565 = vmatprep.mubr.bf16.mxu0 0
      %566 = vmatmul.mubr.bf16.gmra.mxu0 %v419
      %v567 = vpop.f32.mrf.mxu0
      %v568 = vadd.f32 0.0, %v567
      %v569 = vpop.f32.mrf.mxu0
      %v570 = vpop.f32.mrf.mxu0
      %v571 = vadd.f32 0.0, %v570
      %v572 = vpop.f32.mrf.mxu0
      %573 = vmatprep.mubr.bf16.mxu0 0
      %574 = vmatmul.mubr.bf16.gmra.mxu0 %v422
      %v575 = vpop.f32.mrf.mxu0
      %v576 = vadd.f32 0.0, %v575
      %v577 = vpop.f32.mrf.mxu0
      %v578 = vpop.f32.mrf.mxu0
      %v579 = vadd.f32 0.0, %v578
      %v580 = vpop.f32.mrf.mxu0
      %581 = vmatprep.mubr.bf16.mxu0 0
      %582 = vmatmul.mubr.bf16.gmra.mxu0 %v425
      %v583 = vpop.f32.mrf.mxu0
      %v584 = vadd.f32 0.0, %v583
      %v585 = vpop.f32.mrf.mxu0
      %v586 = vpop.f32.mrf.mxu0
      %v587 = vadd.f32 0.0, %v586
      %v588 = vpop.f32.mrf.mxu0
      %589 = vmatprep.mubr.bf16.mxu0 0
      %590 = vmatmul.mubr.bf16.gmra.mxu0 %v428
      %v591 = vpop.f32.mrf.mxu0
      %v592 = vadd.f32 0.0, %v591
      %v593 = vpop.f32.mrf.mxu0
      %v594 = vpop.f32.mrf.mxu0
      %v595 = vadd.f32 0.0, %v594
      %v596 = vpop.f32.mrf.mxu0
      %597 = vmatprep.mubr.bf16.mxu0 0
      %598 = vmatmul.mubr.bf16.gmra.mxu0 %v431
      %v599 = vpop.f32.mrf.mxu0
      %v600 = vadd.f32 0.0, %v599
      %v601 = vpop.f32.mrf.mxu0
      %v602 = vpop.f32.mrf.mxu0
      %v603 = vadd.f32 0.0, %v602
      %v604 = vpop.f32.mrf.mxu0
      %605 = vmatprep.mubr.bf16.mxu0 0
      %606 = vmatmul.mubr.bf16.gmra.mxu0 %v434
      %v607 = vpop.f32.mrf.mxu0
      %v608 = vadd.f32 0.0, %v607
      %v609 = vpop.f32.mrf.mxu0
      %v610 = vpop.f32.mrf.mxu0
      %v611 = vadd.f32 0.0, %v610
      %v612 = vpop.f32.mrf.mxu0
      %613 = vmatprep.mubr.bf16.mxu0 0
      %614 = vmatmul.mubr.bf16.gmra.mxu0 %v437
      %v615 = vpop.f32.mrf.mxu0
      %v616 = vadd.f32 0.0, %v615
      %v617 = vpop.f32.mrf.mxu0
      %v618 = vpop.f32.mrf.mxu0
      %v619 = vadd.f32 0.0, %v618
      %v620 = vpop.f32.mrf.mxu0
      %621 = vmatprep.mubr.bf16.mxu0 0
      %622 = vmatmul.mubr.bf16.gmra.mxu0 %v440
      %v623 = vpop.f32.mrf.mxu0
      %v624 = vadd.f32 0.0, %v623
      %v625 = vpop.f32.mrf.mxu0
      %v626 = vpop.f32.mrf.mxu0
      %v627 = vadd.f32 0.0, %v626
      %v628 = vpop.f32.mrf.mxu0
      %629 = vmatprep.mubr.bf16.mxu0 0
      %630 = vmatmul.mubr.bf16.gmra.mxu0 %v443
      %v631 = vpop.f32.mrf.mxu0
      %v632 = vadd.f32 0.0, %v631
      %v633 = vpop.f32.mrf.mxu0
      %v634 = vpop.f32.mrf.mxu0
      %v635 = vadd.f32 0.0, %v634
      %v636 = vpop.f32.mrf.mxu0
      %637 = vmatprep.mubr.bf16.mxu0 0
      %638 = vmatmul.mubr.bf16.gmra.mxu0 %v446
      %v639 = vpop.f32.mrf.mxu0
      %v640 = vadd.f32 0.0, %v639
      %v641 = vpop.f32.mrf.mxu0
      %v642 = vpop.f32.mrf.mxu0
      %v643 = vadd.f32 0.0, %v642
      %v644 = vpop.f32.mrf.mxu0
      %645 = vmatprep.mubr.bf16.mxu0 0
      %646 = vmatmul.mubr.bf16.gmra.mxu0 %v449
      %v647 = vpop.f32.mrf.mxu0
      %v648 = vadd.f32 0.0, %v647
      %v649 = vpop.f32.mrf.mxu0
      %v650 = vpop.f32.mrf.mxu0
      %v651 = vadd.f32 0.0, %v650
      %v652 = vpop.f32.mrf.mxu0
      %653 = vmatprep.mubr.bf16.mxu0 0
      %654 = vmatmul.mubr.bf16.gmra.mxu0 %v452
      %v655 = vpop.f32.mrf.mxu0
      %v656 = vadd.f32 0.0, %v655
      %v657 = vpop.f32.mrf.mxu0
      %v658 = vpop.f32.mrf.mxu0
      %v659 = vadd.f32 0.0, %v658
      %v660 = vpop.f32.mrf.mxu0
      %661 = vmatprep.mubr.bf16.mxu0 0
      %662 = vmatmul.mubr.bf16.gmra.mxu0 %v455
      %v663 = vpop.f32.mrf.mxu0
      %v664 = vadd.f32 0.0, %v663
      %v665 = vpop.f32.mrf.mxu0
      %v666 = vpop.f32.mrf.mxu0
      %v667 = vadd.f32 0.0, %v666
      %v668 = vpop.f32.mrf.mxu0
      %669 = vmatprep.mubr.bf16.mxu0 0
      %670 = vmatmul.mubr.bf16.gmra.mxu0 %v458
      %v671 = vpop.f32.mrf.mxu0
      %v672 = vadd.f32 0.0, %v671
      %v673 = vpop.f32.mrf.mxu0
      %v674 = vpop.f32.mrf.mxu0
      %v675 = vadd.f32 0.0, %v674
      %v676 = vpop.f32.mrf.mxu0
      %677 = vmatprep.mubr.bf16.mxu0 0
      %678 = vmatmul.mubr.bf16.gmra.mxu0 %v461
      %v679 = vpop.f32.mrf.mxu0
      %v680 = vadd.f32 0.0, %v679
      %v681 = vpop.f32.mrf.mxu0
      %v682 = vpop.f32.mrf.mxu0
      %v683 = vadd.f32 0.0, %v682
      %v684 = vpop.f32.mrf.mxu0
      %685 = vmatprep.mubr.bf16.mxu0 0
      %686 = vmatmul.mubr.bf16.gmra.mxu0 %v464
      %v687 = vpop.f32.mrf.mxu0
      %v688 = vadd.f32 0.0, %v687
      %v689 = vpop.f32.mrf.mxu0
      %v690 = vpop.f32.mrf.mxu0
      %v691 = vadd.f32 0.0, %v690
      %v692 = vpop.f32.mrf.mxu0
      %693 = vmatprep.mubr.bf16.mxu0 0
      %694 = vmatmul.mubr.bf16.gmra.mxu0 %v467
      %v695 = vpop.f32.mrf.mxu0
      %v696 = vadd.f32 0.0, %v695
      %v697 = vpop.f32.mrf.mxu0
      %v698 = vpop.f32.mrf.mxu0
      %v699 = vadd.f32 0.0, %v698
      %v700 = vpop.f32.mrf.mxu0
      %701 = vmatprep.mubr.bf16.mxu0 0
      %702 = vmatmul.mubr.bf16.gmra.mxu0 %v470
      %v703 = vpop.f32.mrf.mxu0
      %v704 = vadd.f32 0.0, %v703
      %v705 = vpop.f32.mrf.mxu0
      %v706 = vpop.f32.mrf.mxu0
      %v707 = vadd.f32 0.0, %v706
      %v708 = vpop.f32.mrf.mxu0
      %709 = vmatprep.mubr.bf16.mxu0 0
      %710 = vmatmul.mubr.bf16.gmra.mxu0 %v473
      %v711 = vpop.f32.mrf.mxu0
      %v712 = vadd.f32 0.0, %v711
      %v713 = vpop.f32.mrf.mxu0
      %v714 = vpop.f32.mrf.mxu0
      %v715 = vadd.f32 0.0, %v714
      %v716 = vpop.f32.mrf.mxu0
      %717 = vmatprep.mubr.bf16.mxu0 0
      %718 = vmatmul.mubr.bf16.gmra.mxu0 %v476
      %v719 = vpop.f32.mrf.mxu0
      %v720 = vadd.f32 0.0, %v719
      %v721 = vpop.f32.mrf.mxu0
      %v722 = vpop.f32.mrf.mxu0
      %v723 = vadd.f32 0.0, %v722
      %v724 = vpop.f32.mrf.mxu0
      %725 = vmatprep.mubr.bf16.mxu0 0
      %726 = vmatmul.mubr.bf16.gmra.mxu0 %v479
      %v727 = vpop.f32.mrf.mxu0
      %v728 = vadd.f32 0.0, %v727
      %v729 = vpop.f32.mrf.mxu0
      %v730 = vpop.f32.mrf.mxu0
      %v731 = vadd.f32 0.0, %v730
      %v732 = vpop.f32.mrf.mxu0
      %733 = vmatprep.mubr.bf16.mxu0 0
      %734 = vmatmul.mubr.bf16.gmra.mxu0 %v482
      %v735 = vpop.f32.mrf.mxu0
      %v736 = vadd.f32 0.0, %v735
      %v737 = vpop.f32.mrf.mxu0
      %v738 = vpop.f32.mrf.mxu0
      %v739 = vadd.f32 0.0, %v738
      %v740 = vpop.f32.mrf.mxu0
      %741 = vmatprep.mubr.bf16.mxu0 0
      %742 = vmatmul.mubr.bf16.gmra.mxu0 %v485
      %v743 = vpop.f32.mrf.mxu0
      %v744 = vadd.f32 0.0, %v743
      %v745 = vpop.f32.mrf.mxu0
      %v746 = vpop.f32.mrf.mxu0
      %v747 = vadd.f32 0.0, %v746
      %v748 = vpop.f32.mrf.mxu0
      %749 = vmatprep.mubr.bf16.mxu0 0
      %750 = vmatmul.mubr.bf16.gmra.mxu0 %v488
      %v751 = vpop.f32.mrf.mxu0
      %v752 = vadd.f32 0.0, %v751
      %v753 = vpop.f32.mrf.mxu0
      %v754 = vpop.f32.mrf.mxu0
      %v755 = vadd.f32 0.0, %v754
      %v756 = vpop.f32.mrf.mxu0
      %757 = vmatprep.mubr.bf16.mxu0 0
      %758 = vmatmul.mubr.bf16.gmra.mxu0 %v491
      %v759 = vpop.f32.mrf.mxu0
      %v760 = vadd.f32 0.0, %v759
      %v761 = vpop.f32.mrf.mxu0
      %v762 = vpop.f32.mrf.mxu0
      %v763 = vadd.f32 0.0, %v762
      %v764 = vpop.f32.mrf.mxu0
      %765 = vmatprep.mubr.bf16.mxu0 0
      %766 = vmatmul.mubr.bf16.gmra.mxu0 %v494
      %v767 = vpop.f32.mrf.mxu0
      %v768 = vadd.f32 0.0, %v767
      %v769 = vpop.f32.mrf.mxu0
      %v770 = vpop.f32.mrf.mxu0
      %v771 = vadd.f32 0.0, %v770
      %v772 = vpop.f32.mrf.mxu0
      %773 = vmatprep.mubr.bf16.mxu0 0
      %774 = vmatmul.mubr.bf16.gmra.mxu0 %v497
      %v775 = vpop.f32.mrf.mxu0
      %v776 = vadd.f32 0.0, %v775
      %v777 = vpop.f32.mrf.mxu0
      %v778 = vpop.f32.mrf.mxu0
      %v779 = vadd.f32 0.0, %v778
      %v780 = vpop.f32.mrf.mxu0
      %781 = vmatprep.mubr.bf16.mxu0 0
      %782 = vmatmul.mubr.bf16.gmra.mxu0 %v500
      %v783 = vpop.f32.mrf.mxu0
      %v784 = vadd.f32 0.0, %v783
      %v785 = vpop.f32.mrf.mxu0
      %v786 = vpop.f32.mrf.mxu0
      %v787 = vadd.f32 0.0, %v786
      %v788 = vpop.f32.mrf.mxu0
      %789 = vmatprep.mubr.bf16.mxu0 0
      %790 = vmatmul.mubr.bf16.gmra.mxu0 %v503
      %v791 = vpop.f32.mrf.mxu0
      %v792 = vadd.f32 0.0, %v791
      %v793 = vpop.f32.mrf.mxu0
      %v794 = vpop.f32.mrf.mxu0
      %v795 = vadd.f32 0.0, %v794
      %v796 = vpop.f32.mrf.mxu0
      %797 = vdwg.mxu0
      %v798 = vtanh.pop %v544
      %v799 = vtanh.pop %v547
      %v800 = vtanh.pop %v552
      %v801 = vtanh.pop %v555
      %v802 = vtanh.pop %v560
      %v803 = vtanh.pop %v563
      %v804 = vtanh.pop %v568
      %v805 = vtanh.pop %v571
      %v806 = vtanh.pop %v576
      %v807 = vtanh.pop %v579
      %v808 = vtanh.pop %v584
      %v809 = vtanh.pop %v587
      %v810 = vtanh.pop %v592
      %v811 = vtanh.pop %v595
      %v812 = vtanh.pop %v600
      %v813 = vtanh.pop %v603
      %v814 = vtanh.pop %v608
      %v815 = vtanh.pop %v611
      %v816 = vtanh.pop %v616
      %v817 = vtanh.pop %v619
      %v818 = vtanh.pop %v624
      %v819 = vtanh.pop %v627
      %v820 = vtanh.pop %v632
      %v821 = vtanh.pop %v635
      %v822 = vtanh.pop %v640
      %v823 = vtanh.pop %v643
      %v824 = vtanh.pop %v648
      %v825 = vtanh.pop %v651
      %v826 = vtanh.pop %v656
      %v827 = vtanh.pop %v659
      %v828 = vtanh.pop %v664
      %v829 = vtanh.pop %v667
      %v830 = vtanh.pop %v672
      %v831 = vtanh.pop %v675
      %v832 = vtanh.pop %v680
      %v833 = vtanh.pop %v683
      %v834 = vtanh.pop %v688
      %v835 = vtanh.pop %v691
      %v836 = vtanh.pop %v696
      %v837 = vtanh.pop %v699
      %v838 = vtanh.pop %v704
      %v839 = vtanh.pop %v707
      %v840 = vtanh.pop %v712
      %v841 = vtanh.pop %v715
      %v842 = vtanh.pop %v720
      %v843 = vtanh.pop %v723
      %v844 = vtanh.pop %v728
      %v845 = vtanh.pop %v731
      %v846 = vtanh.pop %v736
      %v847 = vtanh.pop %v739
      %v848 = vtanh.pop %v744
      %v849 = vtanh.pop %v747
      %v850 = vtanh.pop %v752
      %v851 = vtanh.pop %v755
      %v852 = vtanh.pop %v760
      %v853 = vtanh.pop %v763
      %v854 = vtanh.pop %v768
      %v855 = vtanh.pop %v771
      %v856 = vtanh.pop %v776
      %v857 = vtanh.pop %v779
      %v858 = vtanh.pop %v784
      %v859 = vtanh.pop %v787
      %v860 = vtanh.pop %v792
      %v861 = vtanh.pop %v795
      %vm862 = vcmask 97280
      %863 = vst.msk [vmem:[%s145] sm:$0xff] %vm862, %v798
      %864 = vst.msk [vmem:[%s145 + $0x8] sm:$0xff] %vm862, %v799
      %865 = vst.msk [vmem:[%s145 + $0x10] sm:$0xff] %vm862, %v800
      %866 = vst.msk [vmem:[%s145 + $0x18] sm:$0xff] %vm862, %v801
      %867 = vst.msk [vmem:[%s145 + $0x20] sm:$0xff] %vm862, %v802
      %868 = vst.msk [vmem:[%s145 + $0x28] sm:$0xff] %vm862, %v803
      %869 = vst.msk [vmem:[%s145 + $0x30] sm:$0xff] %vm862, %v804
      %870 = vst.msk [vmem:[%s145 + $0x38] sm:$0xff] %vm862, %v805
      %871 = vst.msk [vmem:[%s145 + $0x40] sm:$0xff] %vm862, %v806
      %872 = vst.msk [vmem:[%s145 + $0x48] sm:$0xff] %vm862, %v807
      %873 = vst.msk [vmem:[%s145 + $0x50] sm:$0xff] %vm862, %v808
      %874 = vst.msk [vmem:[%s145 + $0x58] sm:$0xff] %vm862, %v809
      %875 = vst.msk [vmem:[%s145 + $0x60] sm:$0xff] %vm862, %v810
      %876 = vst.msk [vmem:[%s145 + $0x68] sm:$0xff] %vm862, %v811
      %877 = vst.msk [vmem:[%s145 + $0x70] sm:$0xff] %vm862, %v812
      %878 = vst.msk [vmem:[%s145 + $0x78] sm:$0xff] %vm862, %v813
      %879 = vst.msk [vmem:[%s145 + $0x80] sm:$0xff] %vm862, %v814
      %880 = vst.msk [vmem:[%s145 + $0x88] sm:$0xff] %vm862, %v815
      %881 = vst.msk [vmem:[%s145 + $0x90] sm:$0xff] %vm862, %v816
      %882 = vst.msk [vmem:[%s145 + $0x98] sm:$0xff] %vm862, %v817
      %883 = vst.msk [vmem:[%s145 + $0xa0] sm:$0xff] %vm862, %v818
      %884 = vst.msk [vmem:[%s145 + $0xa8] sm:$0xff] %vm862, %v819
      %885 = vst.msk [vmem:[%s145 + $0xb0] sm:$0xff] %vm862, %v820
      %886 = vst.msk [vmem:[%s145 + $0xb8] sm:$0xff] %vm862, %v821
      %887 = vst.msk [vmem:[%s145 + $0xc0] sm:$0xff] %vm862, %v822
      %888 = vst.msk [vmem:[%s145 + $0xc8] sm:$0xff] %vm862, %v823
      %889 = vst.msk [vmem:[%s145 + $0xd0] sm:$0xff] %vm862, %v824
      %890 = vst.msk [vmem:[%s145 + $0xd8] sm:$0xff] %vm862, %v825
      %891 = vst.msk [vmem:[%s145 + $0xe0] sm:$0xff] %vm862, %v826
      %892 = vst.msk [vmem:[%s145 + $0xe8] sm:$0xff] %vm862, %v827
      %893 = vst.msk [vmem:[%s145 + $0xf0] sm:$0xff] %vm862, %v828
      %894 = vst.msk [vmem:[%s145 + $0xf8] sm:$0xff] %vm862, %v829
      %895 = vst.msk [vmem:[%s145 + $0x100] sm:$0xff] %vm862, %v830
      %896 = vst.msk [vmem:[%s145 + $0x108] sm:$0xff] %vm862, %v831
      %897 = vst.msk [vmem:[%s145 + $0x110] sm:$0xff] %vm862, %v832
      %898 = vst.msk [vmem:[%s145 + $0x118] sm:$0xff] %vm862, %v833
      %899 = vst.msk [vmem:[%s145 + $0x120] sm:$0xff] %vm862, %v834
      %900 = vst.msk [vmem:[%s145 + $0x128] sm:$0xff] %vm862, %v835
      %901 = vst.msk [vmem:[%s145 + $0x130] sm:$0xff] %vm862, %v836
      %902 = vst.msk [vmem:[%s145 + $0x138] sm:$0xff] %vm862, %v837
      %903 = vst.msk [vmem:[%s145 + $0x140] sm:$0xff] %vm862, %v838
      %904 = vst.msk [vmem:[%s145 + $0x148] sm:$0xff] %vm862, %v839
      %905 = vst.msk [vmem:[%s145 + $0x150] sm:$0xff] %vm862, %v840
      %906 = vst.msk [vmem:[%s145 + $0x158] sm:$0xff] %vm862, %v841
      %907 = vst.msk [vmem:[%s145 + $0x160] sm:$0xff] %vm862, %v842
      %908 = vst.msk [vmem:[%s145 + $0x168] sm:$0xff] %vm862, %v843
      %909 = vst.msk [vmem:[%s145 + $0x170] sm:$0xff] %vm862, %v844
      %910 = vst.msk [vmem:[%s145 + $0x178] sm:$0xff] %vm862, %v845
      %911 = vst.msk [vmem:[%s145 + $0x180] sm:$0xff] %vm862, %v846
      %912 = vst.msk [vmem:[%s145 + $0x188] sm:$0xff] %vm862, %v847
      %913 = vst.msk [vmem:[%s145 + $0x190] sm:$0xff] %vm862, %v848
      %914 = vst.msk [vmem:[%s145 + $0x198] sm:$0xff] %vm862, %v849
      %915 = vst.msk [vmem:[%s145 + $0x1a0] sm:$0xff] %vm862, %v850
      %916 = vst.msk [vmem:[%s145 + $0x1a8] sm:$0xff] %vm862, %v851
      %917 = vst.msk [vmem:[%s145 + $0x1b0] sm:$0xff] %vm862, %v852
      %918 = vst.msk [vmem:[%s145 + $0x1b8] sm:$0xff] %vm862, %v853
      %919 = vst.msk [vmem:[%s145 + $0x1c0] sm:$0xff] %vm862, %v854
      %920 = vst.msk [vmem:[%s145 + $0x1c8] sm:$0xff] %vm862, %v855
      %921 = vst.msk [vmem:[%s145 + $0x1d0] sm:$0xff] %vm862, %v856
      %922 = vst.msk [vmem:[%s145 + $0x1d8] sm:$0xff] %vm862, %v857
      %923 = vst.msk [vmem:[%s145 + $0x1e0] sm:$0xff] %vm862, %v858
      %924 = vst.msk [vmem:[%s145 + $0x1e8] sm:$0xff] %vm862, %v859
      %925 = vst.msk [vmem:[%s145 + $0x1f0] sm:$0xff] %vm862, %v860
      %926 = vst.msk [vmem:[%s145 + $0x1f8] sm:$0xff] %vm862, %v861
      %s927 = smul.u32 64, %s13
      %p928 = scmp.lt.s32.totalorder %s927, 255
      %s929 = scalar_select %p928, %s927, 255
      %s930 = smul.addr %s929, 8
      %s931 = scalar_lea.vmem %s2, %s930
      // Predicated region
      $region29: #{generator_forward.17} parent=27 // pred_check
        %p932 = pneg %p78
      $region30: #{generator_forward.17} parent=27 // pred_check_branch
        %934 = sbr.rel (%p932) target = $region32
      $region31: #{generator_forward.17} parent=27 // pred_region
        %s935 = smul.u32 64, %s13
      $region32: #{generator_forward.17} parent=27 // pred_fallthru
        _
    $region28: #{generator_forward.17} parent=5 // pred_fallthru
      _
    %p936 = scmp.le.s32.totalorder 2, %s8
    // Predicated region
    $region33: #{generator_forward.17} parent=5 // pred_check
      %p937 = pneg %p936
    $region34: #{generator_forward.17} parent=5 // pred_check_branch
      %939 = sbr.rel (%p937) target = $region36
    $region35: #{generator_forward.17} parent=5 // pred_region
      %s940 = ssub.s32 %s8, 2
      // Predicated region
      $region37: #{generator_forward.17} parent=35 // pred_check
        %p941 = pneg %p84
      $region38: #{generator_forward.17} parent=35 // pred_check_branch
        %943 = sbr.rel (%p941) target = $region40
      $region39: #{generator_forward.17} parent=35 // pred_region
        %s944 = smul.u32 64, %s14
        %p945 = scmp.lt.s32.totalorder %s944, 255
        %s946 = scalar_select %p945, %s944, 255
        %s947 = smul.addr %s946, 8
        %s948 = scalar_lea.vmem %s2, %s947
      $region40: #{generator_forward.17} parent=35 // pred_fallthru
        _
    $region36: #{generator_forward.17} parent=5 // pred_fallthru
      _
  $region6: #{generator_forward.17} parent=0 // loop_footer
    %s12 = sadd.s32 1, %s8
  $region7: #{generator_forward.17} parent=0 // loop_footer_branch
    %7 = sbr.rel target = $region3
  $region8: #{generator_forward.17} parent=0 // loop_exit
    _

</llo_original>
